<compile_context>
chip_gen: v7x
topology: tpu7x:2x2x1
jax: 0.10.0
libtpu: 0.0.40
codegen_flags: <defaults>
</compile_context>

<pallas_src>
import math

import jax
import jax.numpy as jnp
from jax.experimental import pallas as pl
from jax.experimental.pallas import tpu as pltpu


# ---------------------------------------------------------------------------
# Kernel 1: serial LSTM recurrence (input-to-hidden contribution precomputed).
# ---------------------------------------------------------------------------
def _lstm_recurrence_kernel(gx_ref, whh_ref, m2_ref, hdrop_ref, h_ref, c_ref):
    """Grid = (batch_shards, time_chunks); one call = TT timesteps of one shard.

    gx_ref    : (BB, TT, 4H)  precomputed x @ W_ih^T + b      (compute dtype)
    whh_ref   : (H, 4H)       W_hh^T                          (compute dtype)
    m2_ref    : (BB, H)       variational output-dropout mask (f32)
    hdrop_ref : (BB, TT, H)   dropped hidden states (output, compute dtype)
    h_ref/c_ref : (BB, H) f32 scratch carries (persist across time chunks)
    """
    @pl.when(pl.program_id(1) == 0)         # new batch shard -> reset the carry
    def _():
        h_ref[...] = jnp.zeros_like(h_ref)
        c_ref[...] = jnp.zeros_like(c_ref)

    H = h_ref.shape[1]
    TT = gx_ref.shape[1]
    whh = whh_ref[...]
    m2 = m2_ref[...]
    for tt in range(TT):                    # static unroll over the time chunk
        gates = gx_ref[:, tt, :].astype(jnp.float32) + jnp.dot(
            h_ref[...].astype(whh.dtype), whh,
            preferred_element_type=jnp.float32)           # (BB, 4H) [i,f,g,o]
        i = jax.nn.sigmoid(gates[:, 0:H])
        f = jax.nn.sigmoid(gates[:, H:2 * H])
        g = jnp.tanh(gates[:, 2 * H:3 * H])
        o = jax.nn.sigmoid(gates[:, 3 * H:4 * H])
        c = f * c_ref[...] + i * g
        h = o * jnp.tanh(c)
        c_ref[...] = c
        h_ref[...] = h
        hdrop_ref[:, tt, :] = (h * m2).astype(hdrop_ref.dtype)


# ---------------------------------------------------------------------------
# Kernel 2: tied-weight output projection with the final permute fused in
# (logits produced directly in (B, V, T) layout).
# ---------------------------------------------------------------------------
def _output_projection_kernel(h_ref, w_ref, bo_ref, out_ref):
    """Grid = (B, V_tiles):  out[b, j*Vt:(j+1)*Vt, :] = W[j] @ h[b].T + b_out[j]."""
    h = h_ref[0]                            # (T, H)
    w = w_ref[...]                          # (Vt, H)
    logits = jax.lax.dot_general(           # (Vt, T): contract both on H
        w, h, dimension_numbers=(((1,), (1,)), ((), ())),
        preferred_element_type=jnp.float32)
    out_ref[0] = (logits + bo_ref[...]).astype(out_ref.dtype)


# ---------------------------------------------------------------------------
# Helpers
# ---------------------------------------------------------------------------
def _pick_tile(n, max_tile, quantum):
    """Largest divisor of n that is <= max_tile and a multiple of `quantum`;
    falls back to the full dimension (always a legal BlockSpec block)."""
    if n <= max_tile:
        return n
    for t in range(max_tile - max_tile % quantum, quantum - 1, -quantum):
        if n % t == 0:
            return t
    return n


def _nbytes(shape, dtype):
    return math.prod(shape) * jnp.dtype(dtype).itemsize


# ---------------------------------------------------------------------------
# Forward pass
# ---------------------------------------------------------------------------
def lm_lstm_forward(tokens, params, *, emb_dropout=0.0, out_dropout=0.0,
                    train=True, dropout_key=None,
                    compute_dtype=jnp.float32, batch_shards=1):
    """Pallas forward pass of LM_LSTM. Returns (B, V, T) logits (float32)."""
    w_tied = params["w_tied"]                                # (V, E) tied weight
    w_ih = params["w_ih"]                                    # (4H, E)
    w_hh = params["w_hh"]                                    # (4H, H)
    b = (params["b_ih"] + params["b_hh"]).astype(jnp.float32)  # (4H,)
    b_out = params["b_out"].astype(jnp.float32)              # (V,)

    B, T = tokens.shape
    V, E = w_tied.shape
    H = w_hh.shape[1]
    assert E == H, "weight tying requires emb_size == hidden_size"

    if train and (emb_dropout != 0.0 or out_dropout != 0.0) and dropout_key is None:
        raise ValueError("dropout_key is required when dropout is active")

    # VariationalDropout masks: Bernoulli per (batch, feature), shared over time.
    # TODO(synk): torch.bernoulli's RNG stream is not reproducible in JAX; masks
    # use jax.random.bernoulli with identical semantics.
    def _mask(key, p, feat):
        if not train or p == 0.0:
            return jnp.ones((B, feat), jnp.float32)
        keep = jax.random.bernoulli(key, 1.0 - p, (B, feat))
        return keep.astype(jnp.float32) / (1.0 - p)

    k1 = k2 = None
    if dropout_key is not None:
        k1, k2 = jax.random.split(dropout_key)
    m1 = _mask(k1, emb_dropout, E)
    m2 = _mask(k2, out_dropout, H)

    # ---- glue (plain XLA): gather + emb dropout + hoisted x @ W_ih^T + b ----
    cdt = compute_dtype
    emb = jnp.take(w_tied, tokens, axis=0).astype(jnp.float32)   # (B, T, E), batch-major
    # pad batch to a sublane multiple of 8 (padded rows are discarded later)
    B_pad = max(8, -(-B // 8) * 8)
    if B_pad != B:
        emb = jnp.pad(emb, ((0, B_pad - B), (0, 0), (0, 0)))
        m1 = jnp.pad(m1, ((0, B_pad - B), (0, 0)), constant_values=1.0)
        m2 = jnp.pad(m2, ((0, B_pad - B), (0, 0)), constant_values=1.0)

    wihT = jnp.transpose(w_ih).astype(cdt)        # (E, 4H)
    whhT = jnp.transpose(w_hh).astype(cdt)        # (H, 4H)
    wout = w_tied.astype(cdt)                     # (V, H)  tied output weight
    b_out_col = b_out.reshape(V, 1)

    x = (emb * m1[:, None, :]).astype(cdt)        # variational embedding dropout
    gates_x = (jnp.einsum("bte,eg->btg", x, wihT,
                          preferred_element_type=jnp.float32)
               + b[None, None, :]).astype(cdt)    # (B_pad, T, 4H)

    # ---- Pallas kernel 1: serial recurrence, time chunked, batch parallel ----
    nb = batch_shards
    if nb < 1 or B_pad % nb != 0 or (B_pad // nb) % 8 != 0:
        nb = 1
    BB = B_pad // nb
    TT = _pick_tile(T, 32, 8)
    nt = T // TT

    rec_vmem = (2 * (_nbytes((BB, TT, 4 * H), cdt) + _nbytes((H, 4 * H), cdt)
                     + _nbytes((BB, H), jnp.float32)
                     + _nbytes((BB, TT, H), cdt))
                + 2 * _nbytes((BB, H), jnp.float32) + (4 << 20))
    rec_vmem = int(min(max(rec_vmem, 32 << 20), 100 << 20))

    h_drop = pl.pallas_call(
        _lstm_recurrence_kernel,
        out_shape=jax.ShapeDtypeStruct((B_pad, T, H), cdt),
        grid_spec=pltpu.PrefetchScalarGridSpec(
            num_scalar_prefetch=0,
            grid=(nb, nt),
            in_specs=[
                pl.BlockSpec((BB, TT, 4 * H), lambda bs, tc: (bs, tc, 0)),
                pl.BlockSpec((H, 4 * H), lambda bs, tc: (0, 0)),
                pl.BlockSpec((BB, H), lambda bs, tc: (bs, 0)),
            ],
            out_specs=pl.BlockSpec((BB, TT, H), lambda bs, tc: (bs, tc, 0)),
            scratch_shapes=[pltpu.VMEM((BB, H), jnp.float32),   # h carry
                            pltpu.VMEM((BB, H), jnp.float32)],  # c carry
        ),
        compiler_params=pltpu.CompilerParams(
            dimension_semantics=("parallel", "arbitrary"),
            vmem_limit_bytes=rec_vmem),
    )(gates_x, whhT, m2)

    # ---- Pallas kernel 2: vocab projection, fully parallel, permute fused ----
    h_drop = h_drop[:B]                           # drop batch padding
    Vt = _pick_tile(V, 1024, 128)
    nv = V // Vt

    proj_vmem = (2 * (_nbytes((1, T, H), cdt) + _nbytes((Vt, H), cdt)
                      + _nbytes((Vt, 1), jnp.float32)
                      + _nbytes((1, Vt, T), jnp.float32)) + (4 << 20))
    proj_vmem = int(min(max(proj_vmem, 32 << 20), 100 << 20))

    logits = pl.pallas_call(
        _output_projection_kernel,
        out_shape=jax.ShapeDtypeStruct((B, V, T), jnp.float32),
        grid_spec=pltpu.PrefetchScalarGridSpec(
            num_scalar_prefetch=0,
            grid=(B, nv),
            in_specs=[
                pl.BlockSpec((1, T, H), lambda bi, vj: (bi, 0, 0)),
                pl.BlockSpec((Vt, H), lambda bi, vj: (vj, 0)),
                pl.BlockSpec((Vt, 1), lambda bi, vj: (vj, 0)),
            ],
            out_specs=pl.BlockSpec((1, Vt, T), lambda bi, vj: (bi, vj, 0)),
        ),
        compiler_params=pltpu.CompilerParams(
            dimension_semantics=("parallel", "parallel"),
            vmem_limit_bytes=proj_vmem),
    )(h_drop, wout, b_out_col)

    # PyTorch: output(lstm_out).permute(0, 2, 1) -> (B, V, T); permute is fused.
    return logits


# ---------------------------------------------------------------------------
# Pure-JAX reference (dropout disabled / masks == 1), for verification.
# ---------------------------------------------------------------------------
def lm_lstm_reference(tokens, params):
    w_tied = params["w_tied"]
    w_ih, w_hh = params["w_ih"], params["w_hh"]
    b = params["b_ih"] + params["b_hh"]
    b_out = params["b_out"]
    B, _ = tokens.shape
    H = w_hh.shape[1]
    emb = jnp.take(w_tied, tokens, axis=0)            # (B, T, E)

    def step(carry, x_t):
        h, c = carry
        gates = x_t @ w_ih.T + h @ w_hh.T + b
        i, f, g, o = jnp.split(gates, 4, axis=-1)
        i, f, o = jax.nn.sigmoid(i), jax.nn.sigmoid(f), jax.nn.sigmoid(o)
        g = jnp.tanh(g)
        c = f * c + i * g
        h = o * jnp.tanh(c)
        return (h, c), h

    init = (jnp.zeros((B, H), jnp.float32), jnp.zeros((B, H), jnp.float32))
    _, hs = jax.lax.scan(step, init, jnp.transpose(emb, (1, 0, 2)))
    lstm_out = jnp.transpose(hs, (1, 0, 2))           # (B, T, H)
    logits = lstm_out @ w_tied.T + b_out              # (B, T, V)
    return jnp.transpose(logits, (0, 2, 1))           # (B, V, T)


if __name__ == "__main__":
    # Small shapes consistent with the module (emb_size == hidden_size for tying)
    B, T = 2, 8
    E = H = 32
    V = 64          # output_size (vocab)
    PAD = 0

    key = jax.random.PRNGKey(0)
    k_w, k_ih, k_hh, k_bih, k_bhh, k_bo, k_tok = jax.random.split(key, 7)
    s = 1.0 / math.sqrt(H)
    params = {
        # tied embedding / output weight (nn.Linear weight shape: (V, H))
        "w_tied": jax.random.uniform(k_w, (V, E), jnp.float32, -s, s),
        "w_ih": jax.random.uniform(k_ih, (4 * H, E), jnp.float32, -s, s),
        "w_hh": jax.random.uniform(k_hh, (4 * H, H), jnp.float32, -s, s),
        "b_ih": jax.random.uniform(k_bih, (4 * H,), jnp.float32, -s, s),
        "b_hh": jax.random.uniform(k_bhh, (4 * H,), jnp.float32, -s, s),
        "b_out": jax.random.uniform(k_bo, (V,), jnp.float32, -s, s),
    }
    tokens = jax.random.randint(k_tok, (B, T), 0, V, dtype=jnp.int32)
    tokens = tokens.at[:, -1].set(PAD)   # include some padding indices

    ref = lm_lstm_reference(tokens, params)

    # f32 path (module defaults: emb_dropout = out_dropout = 0 -> dropout no-op)
    out = lm_lstm_forward(tokens, params, emb_dropout=0.0, out_dropout=0.0,
                          train=True)
    out = jax.block_until_ready(out)
    assert out.shape == (B, V, T), out.shape
    err = float(jnp.max(jnp.abs(out - ref)))
    assert jnp.allclose(out, ref, atol=1e-4, rtol=1e-4), err

    # bf16 MXU path (bf16 weights/activations, f32 accumulation + f32 gate math)
    out_bf16 = lm_lstm_forward(tokens, params, compute_dtype=jnp.bfloat16)
    out_bf16 = jax.block_until_ready(out_bf16)
    err16 = float(jnp.max(jnp.abs(out_bf16 - ref)))
    assert jnp.allclose(out_bf16, ref, atol=5e-2, rtol=5e-2), err16

    print("KERNEL_OK")
</pallas_src>

<mosaic_0001>
module attributes {stable_mosaic.version = 11 : i64} {
  func.func @_lstm_recurrence_kernel(%arg0: i32, %arg1: i32, %arg2: memref<8x8x128xf32, #tpu.memory_space<vmem>>, %arg3: memref<32x128xf32, #tpu.memory_space<vmem>>, %arg4: memref<8x32xf32, #tpu.memory_space<vmem>>, %arg5: memref<8x8x32xf32, #tpu.memory_space<vmem>>, %arg6: memref<8x32xf32, #tpu.memory_space<vmem>>, %arg7: memref<8x32xf32, #tpu.memory_space<vmem>>) attributes {dimension_semantics = [#tpu.dimension_semantics<parallel>, #tpu.dimension_semantics<arbitrary>], iteration_bounds = array<i64: 1, 1>, scalar_prefetch = 0 : i64, scratch_operands = 2 : i64, tpu.core_type = #tpu.core_type<tc>, window_params = [{transform_indices = @transform_0, window_bounds = array<i64: 8, 8, 128>}, {pipeline_mode = #tpu.pipeline_mode<synchronous>, transform_indices = @transform_1, window_bounds = array<i64: 32, 128>}, {transform_indices = @transform_2, window_bounds = array<i64: 8, 32>}, {transform_indices = @transform_3, window_bounds = array<i64: 8, 8, 32>}]} {
    %c0_i32 = arith.constant 0 : i32
    %0 = arith.cmpi eq, %arg1, %c0_i32 : i32
    %1 = arith.extui %0 : i1 to i32
    %c0_i32_0 = arith.constant 0 : i32
    %2 = arith.cmpi ne, %1, %c0_i32_0 : i32
    scf.if %2 {
      %cst_140 = arith.constant 0.000000e+00 : f32
      %301 = vector.broadcast %cst_140 : f32 to vector<8x32xf32>
      %c0_141 = arith.constant 0 : index
      %c0_142 = arith.constant 0 : index
      %302 = vector.load %arg6[%c0_141, %c0_142] : memref<8x32xf32, #tpu.memory_space<vmem>>, vector<8x32xf32>
      tpu.vector_store %arg6[%c0_141, %c0_142], %301 {strides = array<i32>} : memref<8x32xf32, #tpu.memory_space<vmem>>, vector<8x32xf32>,
      %cst_143 = arith.constant 0.000000e+00 : f32
      %303 = vector.broadcast %cst_143 : f32 to vector<8x32xf32>
      %c0_144 = arith.constant 0 : index
      %c0_145 = arith.constant 0 : index
      %304 = vector.load %arg7[%c0_144, %c0_145] : memref<8x32xf32, #tpu.memory_space<vmem>>, vector<8x32xf32>
      tpu.vector_store %arg7[%c0_144, %c0_145], %303 {strides = array<i32>} : memref<8x32xf32, #tpu.memory_space<vmem>>, vector<8x32xf32>,
    } else {
    }
    %c0 = arith.constant 0 : index
    %c0_1 = arith.constant 0 : index
    %3 = vector.load %arg3[%c0, %c0_1] : memref<32x128xf32, #tpu.memory_space<vmem>>, vector<32x128xf32>
    %c0_2 = arith.constant 0 : index
    %c0_3 = arith.constant 0 : index
    %4 = vector.load %arg4[%c0_2, %c0_3] : memref<8x32xf32, #tpu.memory_space<vmem>>, vector<8x32xf32>
    %c0_4 = arith.constant 0 : index
    %c0_5 = arith.constant 0 : index
    %c0_6 = arith.constant 0 : index
    %5 = vector.load %arg2[%c0_4, %c0_5, %c0_6] : memref<8x8x128xf32, #tpu.memory_space<vmem>>, vector<8x1x128xf32>
    %6 = vector.shape_cast %5 : vector<8x1x128xf32> to vector<8x128xf32>
    %c0_7 = arith.constant 0 : index
    %c0_8 = arith.constant 0 : index
    %7 = vector.load %arg6[%c0_7, %c0_8] : memref<8x32xf32, #tpu.memory_space<vmem>>, vector<8x32xf32>
    %cst = arith.constant dense<0.000000e+00> : vector<8x128xf32>
    %8 = tpu.matmul %7, %3, %cst {dimension_numbers = #tpu.dot_dimension_numbers<[1], [0], [0], [1], [0, 0, 1, 1], [], []>} : vector<8x32xf32>, vector<32x128xf32>, vector<8x128xf32> -> vector<8x128xf32>
    %9 = arith.addf %6, %8 : vector<8x128xf32>
    %10 = vector.extract_strided_slice %9 {offsets = [0, 0], sizes = [8, 32], strides = [1, 1]} : vector<8x128xf32> to vector<8x32xf32>
    %11 = arith.negf %10 : vector<8x32xf32>
    %12 = math.exp %11 : vector<8x32xf32>
    %cst_9 = arith.constant 1.000000e+00 : f32
    %13 = vector.broadcast %cst_9 : f32 to vector<8x32xf32>
    %14 = arith.addf %13, %12 : vector<8x32xf32>
    %15 = arith.divf %13, %14 : vector<8x32xf32>
    %16 = vector.extract_strided_slice %9 {offsets = [0, 32], sizes = [8, 32], strides = [1, 1]} : vector<8x128xf32> to vector<8x32xf32>
    %17 = arith.negf %16 : vector<8x32xf32>
    %18 = math.exp %17 : vector<8x32xf32>
    %cst_10 = arith.constant 1.000000e+00 : f32
    %19 = vector.broadcast %cst_10 : f32 to vector<8x32xf32>
    %20 = arith.addf %19, %18 : vector<8x32xf32>
    %21 = arith.divf %19, %20 : vector<8x32xf32>
    %22 = vector.extract_strided_slice %9 {offsets = [0, 64], sizes = [8, 32], strides = [1, 1]} : vector<8x128xf32> to vector<8x32xf32>
    %23 = math.tanh %22 : vector<8x32xf32>
    %24 = vector.extract_strided_slice %9 {offsets = [0, 96], sizes = [8, 32], strides = [1, 1]} : vector<8x128xf32> to vector<8x32xf32>
    %25 = arith.negf %24 : vector<8x32xf32>
    %26 = math.exp %25 : vector<8x32xf32>
    %cst_11 = arith.constant 1.000000e+00 : f32
    %27 = vector.broadcast %cst_11 : f32 to vector<8x32xf32>
    %28 = arith.addf %27, %26 : vector<8x32xf32>
    %29 = arith.divf %27, %28 : vector<8x32xf32>
    %c0_12 = arith.constant 0 : index
    %c0_13 = arith.constant 0 : index
    %30 = vector.load %arg7[%c0_12, %c0_13] : memref<8x32xf32, #tpu.memory_space<vmem>>, vector<8x32xf32>
    %31 = arith.mulf %21, %30 : vector<8x32xf32>
    %32 = arith.mulf %15, %23 : vector<8x32xf32>
    %33 = arith.addf %31, %32 : vector<8x32xf32>
    %34 = math.tanh %33 : vector<8x32xf32>
    %35 = arith.mulf %29, %34 : vector<8x32xf32>
    %c0_14 = arith.constant 0 : index
    %c0_15 = arith.constant 0 : index
    %36 = vector.load %arg7[%c0_14, %c0_15] : memref<8x32xf32, #tpu.memory_space<vmem>>, vector<8x32xf32>
    tpu.vector_store %arg7[%c0_14, %c0_15], %33 {strides = array<i32>} : memref<8x32xf32, #tpu.memory_space<vmem>>, vector<8x32xf32>,
    %c0_16 = arith.constant 0 : index
    %c0_17 = arith.constant 0 : index
    %37 = vector.load %arg6[%c0_16, %c0_17] : memref<8x32xf32, #tpu.memory_space<vmem>>, vector<8x32xf32>
    tpu.vector_store %arg6[%c0_16, %c0_17], %35 {strides = array<i32>} : memref<8x32xf32, #tpu.memory_space<vmem>>, vector<8x32xf32>,
    %38 = arith.mulf %35, %4 : vector<8x32xf32>
    %c0_18 = arith.constant 0 : index
    %c0_19 = arith.constant 0 : index
    %c0_20 = arith.constant 0 : index
    %39 = vector.load %arg5[%c0_18, %c0_19, %c0_20] : memref<8x8x32xf32, #tpu.memory_space<vmem>>, vector<8x1x32xf32>
    %40 = vector.shape_cast %39 : vector<8x1x32xf32> to vector<8x32xf32>
    %41 = vector.shape_cast %38 : vector<8x32xf32> to vector<8x1x32xf32>
    tpu.vector_store %arg5[%c0_18, %c0_19, %c0_20], %41 {strides = array<i32>} : memref<8x8x32xf32, #tpu.memory_space<vmem>>, vector<8x1x32xf32>,
    %c0_21 = arith.constant 0 : index
    %c1 = arith.constant 1 : index
    %c0_22 = arith.constant 0 : index
    %42 = vector.load %arg2[%c0_21, %c1, %c0_22] : memref<8x8x128xf32, #tpu.memory_space<vmem>>, vector<8x1x128xf32>
    %43 = vector.shape_cast %42 : vector<8x1x128xf32> to vector<8x128xf32>
    %c0_23 = arith.constant 0 : index
    %c0_24 = arith.constant 0 : index
    %44 = vector.load %arg6[%c0_23, %c0_24] : memref<8x32xf32, #tpu.memory_space<vmem>>, vector<8x32xf32>
    %cst_25 = arith.constant dense<0.000000e+00> : vector<8x128xf32>
    %45 = tpu.matmul %44, %3, %cst_25 {dimension_numbers = #tpu.dot_dimension_numbers<[1], [0], [0], [1], [0, 0, 1, 1], [], []>} : vector<8x32xf32>, vector<32x128xf32>, vector<8x128xf32> -> vector<8x128xf32>
    %46 = arith.addf %43, %45 : vector<8x128xf32>
    %47 = vector.extract_strided_slice %46 {offsets = [0, 0], sizes = [8, 32], strides = [1, 1]} : vector<8x128xf32> to vector<8x32xf32>
    %48 = arith.negf %47 : vector<8x32xf32>
    %49 = math.exp %48 : vector<8x32xf32>
    %cst_26 = arith.constant 1.000000e+00 : f32
    %50 = vector.broadcast %cst_26 : f32 to vector<8x32xf32>
    %51 = arith.addf %50, %49 : vector<8x32xf32>
    %52 = arith.divf %50, %51 : vector<8x32xf32>
    %53 = vector.extract_strided_slice %46 {offsets = [0, 32], sizes = [8, 32], strides = [1, 1]} : vector<8x128xf32> to vector<8x32xf32>
    %54 = arith.negf %53 : vector<8x32xf32>
    %55 = math.exp %54 : vector<8x32xf32>
    %cst_27 = arith.constant 1.000000e+00 : f32
    %56 = vector.broadcast %cst_27 : f32 to vector<8x32xf32>
    %57 = arith.addf %56, %55 : vector<8x32xf32>
    %58 = arith.divf %56, %57 : vector<8x32xf32>
    %59 = vector.extract_strided_slice %46 {offsets = [0, 64], sizes = [8, 32], strides = [1, 1]} : vector<8x128xf32> to vector<8x32xf32>
    %60 = math.tanh %59 : vector<8x32xf32>
    %61 = vector.extract_strided_slice %46 {offsets = [0, 96], sizes = [8, 32], strides = [1, 1]} : vector<8x128xf32> to vector<8x32xf32>
    %62 = arith.negf %61 : vector<8x32xf32>
    %63 = math.exp %62 : vector<8x32xf32>
    %cst_28 = arith.constant 1.000000e+00 : f32
    %64 = vector.broadcast %cst_28 : f32 to vector<8x32xf32>
    %65 = arith.addf %64, %63 : vector<8x32xf32>
    %66 = arith.divf %64, %65 : vector<8x32xf32>
    %c0_29 = arith.constant 0 : index
    %c0_30 = arith.constant 0 : index
    %67 = vector.load %arg7[%c0_29, %c0_30] : memref<8x32xf32, #tpu.memory_space<vmem>>, vector<8x32xf32>
    %68 = arith.mulf %58, %67 : vector<8x32xf32>
    %69 = arith.mulf %52, %60 : vector<8x32xf32>
    %70 = arith.addf %68, %69 : vector<8x32xf32>
    %71 = math.tanh %70 : vector<8x32xf32>
    %72 = arith.mulf %66, %71 : vector<8x32xf32>
    %c0_31 = arith.constant 0 : index
    %c0_32 = arith.constant 0 : index
    %73 = vector.load %arg7[%c0_31, %c0_32] : memref<8x32xf32, #tpu.memory_space<vmem>>, vector<8x32xf32>
    tpu.vector_store %arg7[%c0_31, %c0_32], %70 {strides = array<i32>} : memref<8x32xf32, #tpu.memory_space<vmem>>, vector<8x32xf32>,
    %c0_33 = arith.constant 0 : index
    %c0_34 = arith.constant 0 : index
    %74 = vector.load %arg6[%c0_33, %c0_34] : memref<8x32xf32, #tpu.memory_space<vmem>>, vector<8x32xf32>
    tpu.vector_store %arg6[%c0_33, %c0_34], %72 {strides = array<i32>} : memref<8x32xf32, #tpu.memory_space<vmem>>, vector<8x32xf32>,
    %75 = arith.mulf %72, %4 : vector<8x32xf32>
    %c0_35 = arith.constant 0 : index
    %c1_36 = arith.constant 1 : index
    %c0_37 = arith.constant 0 : index
    %76 = vector.load %arg5[%c0_35, %c1_36, %c0_37] : memref<8x8x32xf32, #tpu.memory_space<vmem>>, vector<8x1x32xf32>
    %77 = vector.shape_cast %76 : vector<8x1x32xf32> to vector<8x32xf32>
    %78 = vector.shape_cast %75 : vector<8x32xf32> to vector<8x1x32xf32>
    tpu.vector_store %arg5[%c0_35, %c1_36, %c0_37], %78 {strides = array<i32>} : memref<8x8x32xf32, #tpu.memory_space<vmem>>, vector<8x1x32xf32>,
    %c0_38 = arith.constant 0 : index
    %c2 = arith.constant 2 : index
    %c0_39 = arith.constant 0 : index
    %79 = vector.load %arg2[%c0_38, %c2, %c0_39] : memref<8x8x128xf32, #tpu.memory_space<vmem>>, vector<8x1x128xf32>
    %80 = vector.shape_cast %79 : vector<8x1x128xf32> to vector<8x128xf32>
    %c0_40 = arith.constant 0 : index
    %c0_41 = arith.constant 0 : index
    %81 = vector.load %arg6[%c0_40, %c0_41] : memref<8x32xf32, #tpu.memory_space<vmem>>, vector<8x32xf32>
    %cst_42 = arith.constant dense<0.000000e+00> : vector<8x128xf32>
    %82 = tpu.matmul %81, %3, %cst_42 {dimension_numbers = #tpu.dot_dimension_numbers<[1], [0], [0], [1], [0, 0, 1, 1], [], []>} : vector<8x32xf32>, vector<32x128xf32>, vector<8x128xf32> -> vector<8x128xf32>
    %83 = arith.addf %80, %82 : vector<8x128xf32>
    %84 = vector.extract_strided_slice %83 {offsets = [0, 0], sizes = [8, 32], strides = [1, 1]} : vector<8x128xf32> to vector<8x32xf32>
    %85 = arith.negf %84 : vector<8x32xf32>
    %86 = math.exp %85 : vector<8x32xf32>
    %cst_43 = arith.constant 1.000000e+00 : f32
    %87 = vector.broadcast %cst_43 : f32 to vector<8x32xf32>
    %88 = arith.addf %87, %86 : vector<8x32xf32>
    %89 = arith.divf %87, %88 : vector<8x32xf32>
    %90 = vector.extract_strided_slice %83 {offsets = [0, 32], sizes = [8, 32], strides = [1, 1]} : vector<8x128xf32> to vector<8x32xf32>
    %91 = arith.negf %90 : vector<8x32xf32>
    %92 = math.exp %91 : vector<8x32xf32>
    %cst_44 = arith.constant 1.000000e+00 : f32
    %93 = vector.broadcast %cst_44 : f32 to vector<8x32xf32>
    %94 = arith.addf %93, %92 : vector<8x32xf32>
    %95 = arith.divf %93, %94 : vector<8x32xf32>
    %96 = vector.extract_strided_slice %83 {offsets = [0, 64], sizes = [8, 32], strides = [1, 1]} : vector<8x128xf32> to vector<8x32xf32>
    %97 = math.tanh %96 : vector<8x32xf32>
    %98 = vector.extract_strided_slice %83 {offsets = [0, 96], sizes = [8, 32], strides = [1, 1]} : vector<8x128xf32> to vector<8x32xf32>
    %99 = arith.negf %98 : vector<8x32xf32>
    %100 = math.exp %99 : vector<8x32xf32>
    %cst_45 = arith.constant 1.000000e+00 : f32
    %101 = vector.broadcast %cst_45 : f32 to vector<8x32xf32>
    %102 = arith.addf %101, %100 : vector<8x32xf32>
    %103 = arith.divf %101, %102 : vector<8x32xf32>
    %c0_46 = arith.constant 0 : index
    %c0_47 = arith.constant 0 : index
    %104 = vector.load %arg7[%c0_46, %c0_47] : memref<8x32xf32, #tpu.memory_space<vmem>>, vector<8x32xf32>
    %105 = arith.mulf %95, %104 : vector<8x32xf32>
    %106 = arith.mulf %89, %97 : vector<8x32xf32>
    %107 = arith.addf %105, %106 : vector<8x32xf32>
    %108 = math.tanh %107 : vector<8x32xf32>
    %109 = arith.mulf %103, %108 : vector<8x32xf32>
    %c0_48 = arith.constant 0 : index
    %c0_49 = arith.constant 0 : index
    %110 = vector.load %arg7[%c0_48, %c0_49] : memref<8x32xf32, #tpu.memory_space<vmem>>, vector<8x32xf32>
    tpu.vector_store %arg7[%c0_48, %c0_49], %107 {strides = array<i32>} : memref<8x32xf32, #tpu.memory_space<vmem>>, vector<8x32xf32>,
    %c0_50 = arith.constant 0 : index
    %c0_51 = arith.constant 0 : index
    %111 = vector.load %arg6[%c0_50, %c0_51] : memref<8x32xf32, #tpu.memory_space<vmem>>, vector<8x32xf32>
    tpu.vector_store %arg6[%c0_50, %c0_51], %109 {strides = array<i32>} : memref<8x32xf32, #tpu.memory_space<vmem>>, vector<8x32xf32>,
    %112 = arith.mulf %109, %4 : vector<8x32xf32>
    %c0_52 = arith.constant 0 : index
    %c2_53 = arith.constant 2 : index
    %c0_54 = arith.constant 0 : index
    %113 = vector.load %arg5[%c0_52, %c2_53, %c0_54] : memref<8x8x32xf32, #tpu.memory_space<vmem>>, vector<8x1x32xf32>
    %114 = vector.shape_cast %113 : vector<8x1x32xf32> to vector<8x32xf32>
    %115 = vector.shape_cast %112 : vector<8x32xf32> to vector<8x1x32xf32>
    tpu.vector_store %arg5[%c0_52, %c2_53, %c0_54], %115 {strides = array<i32>} : memref<8x8x32xf32, #tpu.memory_space<vmem>>, vector<8x1x32xf32>,
    %c0_55 = arith.constant 0 : index
    %c3 = arith.constant 3 : index
    %c0_56 = arith.constant 0 : index
    %116 = vector.load %arg2[%c0_55, %c3, %c0_56] : memref<8x8x128xf32, #tpu.memory_space<vmem>>, vector<8x1x128xf32>
    %117 = vector.shape_cast %116 : vector<8x1x128xf32> to vector<8x128xf32>
    %c0_57 = arith.constant 0 : index
    %c0_58 = arith.constant 0 : index
    %118 = vector.load %arg6[%c0_57, %c0_58] : memref<8x32xf32, #tpu.memory_space<vmem>>, vector<8x32xf32>
    %cst_59 = arith.constant dense<0.000000e+00> : vector<8x128xf32>
    %119 = tpu.matmul %118, %3, %cst_59 {dimension_numbers = #tpu.dot_dimension_numbers<[1], [0], [0], [1], [0, 0, 1, 1], [], []>} : vector<8x32xf32>, vector<32x128xf32>, vector<8x128xf32> -> vector<8x128xf32>
    %120 = arith.addf %117, %119 : vector<8x128xf32>
    %121 = vector.extract_strided_slice %120 {offsets = [0, 0], sizes = [8, 32], strides = [1, 1]} : vector<8x128xf32> to vector<8x32xf32>
    %122 = arith.negf %121 : vector<8x32xf32>
    %123 = math.exp %122 : vector<8x32xf32>
    %cst_60 = arith.constant 1.000000e+00 : f32
    %124 = vector.broadcast %cst_60 : f32 to vector<8x32xf32>
    %125 = arith.addf %124, %123 : vector<8x32xf32>
    %126 = arith.divf %124, %125 : vector<8x32xf32>
    %127 = vector.extract_strided_slice %120 {offsets = [0, 32], sizes = [8, 32], strides = [1, 1]} : vector<8x128xf32> to vector<8x32xf32>
    %128 = arith.negf %127 : vector<8x32xf32>
    %129 = math.exp %128 : vector<8x32xf32>
    %cst_61 = arith.constant 1.000000e+00 : f32
    %130 = vector.broadcast %cst_61 : f32 to vector<8x32xf32>
    %131 = arith.addf %130, %129 : vector<8x32xf32>
    %132 = arith.divf %130, %131 : vector<8x32xf32>
    %133 = vector.extract_strided_slice %120 {offsets = [0, 64], sizes = [8, 32], strides = [1, 1]} : vector<8x128xf32> to vector<8x32xf32>
    %134 = math.tanh %133 : vector<8x32xf32>
    %135 = vector.extract_strided_slice %120 {offsets = [0, 96], sizes = [8, 32], strides = [1, 1]} : vector<8x128xf32> to vector<8x32xf32>
    %136 = arith.negf %135 : vector<8x32xf32>
    %137 = math.exp %136 : vector<8x32xf32>
    %cst_62 = arith.constant 1.000000e+00 : f32
    %138 = vector.broadcast %cst_62 : f32 to vector<8x32xf32>
    %139 = arith.addf %138, %137 : vector<8x32xf32>
    %140 = arith.divf %138, %139 : vector<8x32xf32>
    %c0_63 = arith.constant 0 : index
    %c0_64 = arith.constant 0 : index
    %141 = vector.load %arg7[%c0_63, %c0_64] : memref<8x32xf32, #tpu.memory_space<vmem>>, vector<8x32xf32>
    %142 = arith.mulf %132, %141 : vector<8x32xf32>
    %143 = arith.mulf %126, %134 : vector<8x32xf32>
    %144 = arith.addf %142, %143 : vector<8x32xf32>
    %145 = math.tanh %144 : vector<8x32xf32>
    %146 = arith.mulf %140, %145 : vector<8x32xf32>
    %c0_65 = arith.constant 0 : index
    %c0_66 = arith.constant 0 : index
    %147 = vector.load %arg7[%c0_65, %c0_66] : memref<8x32xf32, #tpu.memory_space<vmem>>, vector<8x32xf32>
    tpu.vector_store %arg7[%c0_65, %c0_66], %144 {strides = array<i32>} : memref<8x32xf32, #tpu.memory_space<vmem>>, vector<8x32xf32>,
    %c0_67 = arith.constant 0 : index
    %c0_68 = arith.constant 0 : index
    %148 = vector.load %arg6[%c0_67, %c0_68] : memref<8x32xf32, #tpu.memory_space<vmem>>, vector<8x32xf32>
    tpu.vector_store %arg6[%c0_67, %c0_68], %146 {strides = array<i32>} : memref<8x32xf32, #tpu.memory_space<vmem>>, vector<8x32xf32>,
    %149 = arith.mulf %146, %4 : vector<8x32xf32>
    %c0_69 = arith.constant 0 : index
    %c3_70 = arith.constant 3 : index
    %c0_71 = arith.constant 0 : index
    %150 = vector.load %arg5[%c0_69, %c3_70, %c0_71] : memref<8x8x32xf32, #tpu.memory_space<vmem>>, vector<8x1x32xf32>
    %151 = vector.shape_cast %150 : vector<8x1x32xf32> to vector<8x32xf32>
    %152 = vector.shape_cast %149 : vector<8x32xf32> to vector<8x1x32xf32>
    tpu.vector_store %arg5[%c0_69, %c3_70, %c0_71], %152 {strides = array<i32>} : memref<8x8x32xf32, #tpu.memory_space<vmem>>, vector<8x1x32xf32>,
    %c0_72 = arith.constant 0 : index
    %c4 = arith.constant 4 : index
    %c0_73 = arith.constant 0 : index
    %153 = vector.load %arg2[%c0_72, %c4, %c0_73] : memref<8x8x128xf32, #tpu.memory_space<vmem>>, vector<8x1x128xf32>
    %154 = vector.shape_cast %153 : vector<8x1x128xf32> to vector<8x128xf32>
    %c0_74 = arith.constant 0 : index
    %c0_75 = arith.constant 0 : index
    %155 = vector.load %arg6[%c0_74, %c0_75] : memref<8x32xf32, #tpu.memory_space<vmem>>, vector<8x32xf32>
    %cst_76 = arith.constant dense<0.000000e+00> : vector<8x128xf32>
    %156 = tpu.matmul %155, %3, %cst_76 {dimension_numbers = #tpu.dot_dimension_numbers<[1], [0], [0], [1], [0, 0, 1, 1], [], []>} : vector<8x32xf32>, vector<32x128xf32>, vector<8x128xf32> -> vector<8x128xf32>
    %157 = arith.addf %154, %156 : vector<8x128xf32>
    %158 = vector.extract_strided_slice %157 {offsets = [0, 0], sizes = [8, 32], strides = [1, 1]} : vector<8x128xf32> to vector<8x32xf32>
    %159 = arith.negf %158 : vector<8x32xf32>
    %160 = math.exp %159 : vector<8x32xf32>
    %cst_77 = arith.constant 1.000000e+00 : f32
    %161 = vector.broadcast %cst_77 : f32 to vector<8x32xf32>
    %162 = arith.addf %161, %160 : vector<8x32xf32>
    %163 = arith.divf %161, %162 : vector<8x32xf32>
    %164 = vector.extract_strided_slice %157 {offsets = [0, 32], sizes = [8, 32], strides = [1, 1]} : vector<8x128xf32> to vector<8x32xf32>
    %165 = arith.negf %164 : vector<8x32xf32>
    %166 = math.exp %165 : vector<8x32xf32>
    %cst_78 = arith.constant 1.000000e+00 : f32
    %167 = vector.broadcast %cst_78 : f32 to vector<8x32xf32>
    %168 = arith.addf %167, %166 : vector<8x32xf32>
    %169 = arith.divf %167, %168 : vector<8x32xf32>
    %170 = vector.extract_strided_slice %157 {offsets = [0, 64], sizes = [8, 32], strides = [1, 1]} : vector<8x128xf32> to vector<8x32xf32>
    %171 = math.tanh %170 : vector<8x32xf32>
    %172 = vector.extract_strided_slice %157 {offsets = [0, 96], sizes = [8, 32], strides = [1, 1]} : vector<8x128xf32> to vector<8x32xf32>
    %173 = arith.negf %172 : vector<8x32xf32>
    %174 = math.exp %173 : vector<8x32xf32>
    %cst_79 = arith.constant 1.000000e+00 : f32
    %175 = vector.broadcast %cst_79 : f32 to vector<8x32xf32>
    %176 = arith.addf %175, %174 : vector<8x32xf32>
    %177 = arith.divf %175, %176 : vector<8x32xf32>
    %c0_80 = arith.constant 0 : index
    %c0_81 = arith.constant 0 : index
    %178 = vector.load %arg7[%c0_80, %c0_81] : memref<8x32xf32, #tpu.memory_space<vmem>>, vector<8x32xf32>
    %179 = arith.mulf %169, %178 : vector<8x32xf32>
    %180 = arith.mulf %163, %171 : vector<8x32xf32>
    %181 = arith.addf %179, %180 : vector<8x32xf32>
    %182 = math.tanh %181 : vector<8x32xf32>
    %183 = arith.mulf %177, %182 : vector<8x32xf32>
    %c0_82 = arith.constant 0 : index
    %c0_83 = arith.constant 0 : index
    %184 = vector.load %arg7[%c0_82, %c0_83] : memref<8x32xf32, #tpu.memory_space<vmem>>, vector<8x32xf32>
    tpu.vector_store %arg7[%c0_82, %c0_83], %181 {strides = array<i32>} : memref<8x32xf32, #tpu.memory_space<vmem>>, vector<8x32xf32>,
    %c0_84 = arith.constant 0 : index
    %c0_85 = arith.constant 0 : index
    %185 = vector.load %arg6[%c0_84, %c0_85] : memref<8x32xf32, #tpu.memory_space<vmem>>, vector<8x32xf32>
    tpu.vector_store %arg6[%c0_84, %c0_85], %183 {strides = array<i32>} : memref<8x32xf32, #tpu.memory_space<vmem>>, vector<8x32xf32>,
    %186 = arith.mulf %183, %4 : vector<8x32xf32>
    %c0_86 = arith.constant 0 : index
    %c4_87 = arith.constant 4 : index
    %c0_88 = arith.constant 0 : index
    %187 = vector.load %arg5[%c0_86, %c4_87, %c0_88] : memref<8x8x32xf32, #tpu.memory_space<vmem>>, vector<8x1x32xf32>
    %188 = vector.shape_cast %187 : vector<8x1x32xf32> to vector<8x32xf32>
    %189 = vector.shape_cast %186 : vector<8x32xf32> to vector<8x1x32xf32>
    tpu.vector_store %arg5[%c0_86, %c4_87, %c0_88], %189 {strides = array<i32>} : memref<8x8x32xf32, #tpu.memory_space<vmem>>, vector<8x1x32xf32>,
    %c0_89 = arith.constant 0 : index
    %c5 = arith.constant 5 : index
    %c0_90 = arith.constant 0 : index
    %190 = vector.load %arg2[%c0_89, %c5, %c0_90] : memref<8x8x128xf32, #tpu.memory_space<vmem>>, vector<8x1x128xf32>
    %191 = vector.shape_cast %190 : vector<8x1x128xf32> to vector<8x128xf32>
    %c0_91 = arith.constant 0 : index
    %c0_92 = arith.constant 0 : index
    %192 = vector.load %arg6[%c0_91, %c0_92] : memref<8x32xf32, #tpu.memory_space<vmem>>, vector<8x32xf32>
    %cst_93 = arith.constant dense<0.000000e+00> : vector<8x128xf32>
    %193 = tpu.matmul %192, %3, %cst_93 {dimension_numbers = #tpu.dot_dimension_numbers<[1], [0], [0], [1], [0, 0, 1, 1], [], []>} : vector<8x32xf32>, vector<32x128xf32>, vector<8x128xf32> -> vector<8x128xf32>
    %194 = arith.addf %191, %193 : vector<8x128xf32>
    %195 = vector.extract_strided_slice %194 {offsets = [0, 0], sizes = [8, 32], strides = [1, 1]} : vector<8x128xf32> to vector<8x32xf32>
    %196 = arith.negf %195 : vector<8x32xf32>
    %197 = math.exp %196 : vector<8x32xf32>
    %cst_94 = arith.constant 1.000000e+00 : f32
    %198 = vector.broadcast %cst_94 : f32 to vector<8x32xf32>
    %199 = arith.addf %198, %197 : vector<8x32xf32>
    %200 = arith.divf %198, %199 : vector<8x32xf32>
    %201 = vector.extract_strided_slice %194 {offsets = [0, 32], sizes = [8, 32], strides = [1, 1]} : vector<8x128xf32> to vector<8x32xf32>
    %202 = arith.negf %201 : vector<8x32xf32>
    %203 = math.exp %202 : vector<8x32xf32>
    %cst_95 = arith.constant 1.000000e+00 : f32
    %204 = vector.broadcast %cst_95 : f32 to vector<8x32xf32>
    %205 = arith.addf %204, %203 : vector<8x32xf32>
    %206 = arith.divf %204, %205 : vector<8x32xf32>
    %207 = vector.extract_strided_slice %194 {offsets = [0, 64], sizes = [8, 32], strides = [1, 1]} : vector<8x128xf32> to vector<8x32xf32>
    %208 = math.tanh %207 : vector<8x32xf32>
    %209 = vector.extract_strided_slice %194 {offsets = [0, 96], sizes = [8, 32], strides = [1, 1]} : vector<8x128xf32> to vector<8x32xf32>
    %210 = arith.negf %209 : vector<8x32xf32>
    %211 = math.exp %210 : vector<8x32xf32>
    %cst_96 = arith.constant 1.000000e+00 : f32
    %212 = vector.broadcast %cst_96 : f32 to vector<8x32xf32>
    %213 = arith.addf %212, %211 : vector<8x32xf32>
    %214 = arith.divf %212, %213 : vector<8x32xf32>
    %c0_97 = arith.constant 0 : index
    %c0_98 = arith.constant 0 : index
    %215 = vector.load %arg7[%c0_97, %c0_98] : memref<8x32xf32, #tpu.memory_space<vmem>>, vector<8x32xf32>
    %216 = arith.mulf %206, %215 : vector<8x32xf32>
    %217 = arith.mulf %200, %208 : vector<8x32xf32>
    %218 = arith.addf %216, %217 : vector<8x32xf32>
    %219 = math.tanh %218 : vector<8x32xf32>
    %220 = arith.mulf %214, %219 : vector<8x32xf32>
    %c0_99 = arith.constant 0 : index
    %c0_100 = arith.constant 0 : index
    %221 = vector.load %arg7[%c0_99, %c0_100] : memref<8x32xf32, #tpu.memory_space<vmem>>, vector<8x32xf32>
    tpu.vector_store %arg7[%c0_99, %c0_100], %218 {strides = array<i32>} : memref<8x32xf32, #tpu.memory_space<vmem>>, vector<8x32xf32>,
    %c0_101 = arith.constant 0 : index
    %c0_102 = arith.constant 0 : index
    %222 = vector.load %arg6[%c0_101, %c0_102] : memref<8x32xf32, #tpu.memory_space<vmem>>, vector<8x32xf32>
    tpu.vector_store %arg6[%c0_101, %c0_102], %220 {strides = array<i32>} : memref<8x32xf32, #tpu.memory_space<vmem>>, vector<8x32xf32>,
    %223 = arith.mulf %220, %4 : vector<8x32xf32>
    %c0_103 = arith.constant 0 : index
    %c5_104 = arith.constant 5 : index
    %c0_105 = arith.constant 0 : index
    %224 = vector.load %arg5[%c0_103, %c5_104, %c0_105] : memref<8x8x32xf32, #tpu.memory_space<vmem>>, vector<8x1x32xf32>
    %225 = vector.shape_cast %224 : vector<8x1x32xf32> to vector<8x32xf32>
    %226 = vector.shape_cast %223 : vector<8x32xf32> to vector<8x1x32xf32>
    tpu.vector_store %arg5[%c0_103, %c5_104, %c0_105], %226 {strides = array<i32>} : memref<8x8x32xf32, #tpu.memory_space<vmem>>, vector<8x1x32xf32>,
    %c0_106 = arith.constant 0 : index
    %c6 = arith.constant 6 : index
    %c0_107 = arith.constant 0 : index
    %227 = vector.load %arg2[%c0_106, %c6, %c0_107] : memref<8x8x128xf32, #tpu.memory_space<vmem>>, vector<8x1x128xf32>
    %228 = vector.shape_cast %227 : vector<8x1x128xf32> to vector<8x128xf32>
    %c0_108 = arith.constant 0 : index
    %c0_109 = arith.constant 0 : index
    %229 = vector.load %arg6[%c0_108, %c0_109] : memref<8x32xf32, #tpu.memory_space<vmem>>, vector<8x32xf32>
    %cst_110 = arith.constant dense<0.000000e+00> : vector<8x128xf32>
    %230 = tpu.matmul %229, %3, %cst_110 {dimension_numbers = #tpu.dot_dimension_numbers<[1], [0], [0], [1], [0, 0, 1, 1], [], []>} : vector<8x32xf32>, vector<32x128xf32>, vector<8x128xf32> -> vector<8x128xf32>
    %231 = arith.addf %228, %230 : vector<8x128xf32>
    %232 = vector.extract_strided_slice %231 {offsets = [0, 0], sizes = [8, 32], strides = [1, 1]} : vector<8x128xf32> to vector<8x32xf32>
    %233 = arith.negf %232 : vector<8x32xf32>
    %234 = math.exp %233 : vector<8x32xf32>
    %cst_111 = arith.constant 1.000000e+00 : f32
    %235 = vector.broadcast %cst_111 : f32 to vector<8x32xf32>
    %236 = arith.addf %235, %234 : vector<8x32xf32>
    %237 = arith.divf %235, %236 : vector<8x32xf32>
    %238 = vector.extract_strided_slice %231 {offsets = [0, 32], sizes = [8, 32], strides = [1, 1]} : vector<8x128xf32> to vector<8x32xf32>
    %239 = arith.negf %238 : vector<8x32xf32>
    %240 = math.exp %239 : vector<8x32xf32>
    %cst_112 = arith.constant 1.000000e+00 : f32
    %241 = vector.broadcast %cst_112 : f32 to vector<8x32xf32>
    %242 = arith.addf %241, %240 : vector<8x32xf32>
    %243 = arith.divf %241, %242 : vector<8x32xf32>
    %244 = vector.extract_strided_slice %231 {offsets = [0, 64], sizes = [8, 32], strides = [1, 1]} : vector<8x128xf32> to vector<8x32xf32>
    %245 = math.tanh %244 : vector<8x32xf32>
    %246 = vector.extract_strided_slice %231 {offsets = [0, 96], sizes = [8, 32], strides = [1, 1]} : vector<8x128xf32> to vector<8x32xf32>
    %247 = arith.negf %246 : vector<8x32xf32>
    %248 = math.exp %247 : vector<8x32xf32>
    %cst_113 = arith.constant 1.000000e+00 : f32
    %249 = vector.broadcast %cst_113 : f32 to vector<8x32xf32>
    %250 = arith.addf %249, %248 : vector<8x32xf32>
    %251 = arith.divf %249, %250 : vector<8x32xf32>
    %c0_114 = arith.constant 0 : index
    %c0_115 = arith.constant 0 : index
    %252 = vector.load %arg7[%c0_114, %c0_115] : memref<8x32xf32, #tpu.memory_space<vmem>>, vector<8x32xf32>
    %253 = arith.mulf %243, %252 : vector<8x32xf32>
    %254 = arith.mulf %237, %245 : vector<8x32xf32>
    %255 = arith.addf %253, %254 : vector<8x32xf32>
    %256 = math.tanh %255 : vector<8x32xf32>
    %257 = arith.mulf %251, %256 : vector<8x32xf32>
    %c0_116 = arith.constant 0 : index
    %c0_117 = arith.constant 0 : index
    %258 = vector.load %arg7[%c0_116, %c0_117] : memref<8x32xf32, #tpu.memory_space<vmem>>, vector<8x32xf32>
    tpu.vector_store %arg7[%c0_116, %c0_117], %255 {strides = array<i32>} : memref<8x32xf32, #tpu.memory_space<vmem>>, vector<8x32xf32>,
    %c0_118 = arith.constant 0 : index
    %c0_119 = arith.constant 0 : index
    %259 = vector.load %arg6[%c0_118, %c0_119] : memref<8x32xf32, #tpu.memory_space<vmem>>, vector<8x32xf32>
    tpu.vector_store %arg6[%c0_118, %c0_119], %257 {strides = array<i32>} : memref<8x32xf32, #tpu.memory_space<vmem>>, vector<8x32xf32>,
    %260 = arith.mulf %257, %4 : vector<8x32xf32>
    %c0_120 = arith.constant 0 : index
    %c6_121 = arith.constant 6 : index
    %c0_122 = arith.constant 0 : index
    %261 = vector.load %arg5[%c0_120, %c6_121, %c0_122] : memref<8x8x32xf32, #tpu.memory_space<vmem>>, vector<8x1x32xf32>
    %262 = vector.shape_cast %261 : vector<8x1x32xf32> to vector<8x32xf32>
    %263 = vector.shape_cast %260 : vector<8x32xf32> to vector<8x1x32xf32>
    tpu.vector_store %arg5[%c0_120, %c6_121, %c0_122], %263 {strides = array<i32>} : memref<8x8x32xf32, #tpu.memory_space<vmem>>, vector<8x1x32xf32>,
    %c0_123 = arith.constant 0 : index
    %c7 = arith.constant 7 : index
    %c0_124 = arith.constant 0 : index
    %264 = vector.load %arg2[%c0_123, %c7, %c0_124] : memref<8x8x128xf32, #tpu.memory_space<vmem>>, vector<8x1x128xf32>
    %265 = vector.shape_cast %264 : vector<8x1x128xf32> to vector<8x128xf32>
    %c0_125 = arith.constant 0 : index
    %c0_126 = arith.constant 0 : index
    %266 = vector.load %arg6[%c0_125, %c0_126] : memref<8x32xf32, #tpu.memory_space<vmem>>, vector<8x32xf32>
    %cst_127 = arith.constant dense<0.000000e+00> : vector<8x128xf32>
    %267 = tpu.matmul %266, %3, %cst_127 {dimension_numbers = #tpu.dot_dimension_numbers<[1], [0], [0], [1], [0, 0, 1, 1], [], []>} : vector<8x32xf32>, vector<32x128xf32>, vector<8x128xf32> -> vector<8x128xf32>
    %268 = arith.addf %265, %267 : vector<8x128xf32>
    %269 = vector.extract_strided_slice %268 {offsets = [0, 0], sizes = [8, 32], strides = [1, 1]} : vector<8x128xf32> to vector<8x32xf32>
    %270 = arith.negf %269 : vector<8x32xf32>
    %271 = math.exp %270 : vector<8x32xf32>
    %cst_128 = arith.constant 1.000000e+00 : f32
    %272 = vector.broadcast %cst_128 : f32 to vector<8x32xf32>
    %273 = arith.addf %272, %271 : vector<8x32xf32>
    %274 = arith.divf %272, %273 : vector<8x32xf32>
    %275 = vector.extract_strided_slice %268 {offsets = [0, 32], sizes = [8, 32], strides = [1, 1]} : vector<8x128xf32> to vector<8x32xf32>
    %276 = arith.negf %275 : vector<8x32xf32>
    %277 = math.exp %276 : vector<8x32xf32>
    %cst_129 = arith.constant 1.000000e+00 : f32
    %278 = vector.broadcast %cst_129 : f32 to vector<8x32xf32>
    %279 = arith.addf %278, %277 : vector<8x32xf32>
    %280 = arith.divf %278, %279 : vector<8x32xf32>
    %281 = vector.extract_strided_slice %268 {offsets = [0, 64], sizes = [8, 32], strides = [1, 1]} : vector<8x128xf32> to vector<8x32xf32>
    %282 = math.tanh %281 : vector<8x32xf32>
    %283 = vector.extract_strided_slice %268 {offsets = [0, 96], sizes = [8, 32], strides = [1, 1]} : vector<8x128xf32> to vector<8x32xf32>
    %284 = arith.negf %283 : vector<8x32xf32>
    %285 = math.exp %284 : vector<8x32xf32>
    %cst_130 = arith.constant 1.000000e+00 : f32
    %286 = vector.broadcast %cst_130 : f32 to vector<8x32xf32>
    %287 = arith.addf %286, %285 : vector<8x32xf32>
    %288 = arith.divf %286, %287 : vector<8x32xf32>
    %c0_131 = arith.constant 0 : index
    %c0_132 = arith.constant 0 : index
    %289 = vector.load %arg7[%c0_131, %c0_132] : memref<8x32xf32, #tpu.memory_space<vmem>>, vector<8x32xf32>
    %290 = arith.mulf %280, %289 : vector<8x32xf32>
    %291 = arith.mulf %274, %282 : vector<8x32xf32>
    %292 = arith.addf %290, %291 : vector<8x32xf32>
    %293 = math.tanh %292 : vector<8x32xf32>
    %294 = arith.mulf %288, %293 : vector<8x32xf32>
    %c0_133 = arith.constant 0 : index
    %c0_134 = arith.constant 0 : index
    %295 = vector.load %arg7[%c0_133, %c0_134] : memref<8x32xf32, #tpu.memory_space<vmem>>, vector<8x32xf32>
    tpu.vector_store %arg7[%c0_133, %c0_134], %292 {strides = array<i32>} : memref<8x32xf32, #tpu.memory_space<vmem>>, vector<8x32xf32>,
    %c0_135 = arith.constant 0 : index
    %c0_136 = arith.constant 0 : index
    %296 = vector.load %arg6[%c0_135, %c0_136] : memref<8x32xf32, #tpu.memory_space<vmem>>, vector<8x32xf32>
    tpu.vector_store %arg6[%c0_135, %c0_136], %294 {strides = array<i32>} : memref<8x32xf32, #tpu.memory_space<vmem>>, vector<8x32xf32>,
    %297 = arith.mulf %294, %4 : vector<8x32xf32>
    %c0_137 = arith.constant 0 : index
    %c7_138 = arith.constant 7 : index
    %c0_139 = arith.constant 0 : index
    %298 = vector.load %arg5[%c0_137, %c7_138, %c0_139] : memref<8x8x32xf32, #tpu.memory_space<vmem>>, vector<8x1x32xf32>
    %299 = vector.shape_cast %298 : vector<8x1x32xf32> to vector<8x32xf32>
    %300 = vector.shape_cast %297 : vector<8x32xf32> to vector<8x1x32xf32>
    tpu.vector_store %arg5[%c0_137, %c7_138, %c0_139], %300 {strides = array<i32>} : memref<8x8x32xf32, #tpu.memory_space<vmem>>, vector<8x1x32xf32>,
    return
  }
  func.func @transform_0(%arg0: i32, %arg1: i32) -> (i32, i32, i32) {
    %c0_i32 = arith.constant 0 : i32
    %c0_i32_0 = arith.constant 0 : i32
    return %arg0, %arg1, %c0_i32 : i32, i32, i32
  }
  func.func @transform_1(%arg0: i32, %arg1: i32) -> (i32, i32) {
    %c0_i32 = arith.constant 0 : i32
    %c0_i32_0 = arith.constant 0 : i32
    %c0_i32_1 = arith.constant 0 : i32
    return %c0_i32, %c0_i32_0 : i32, i32
  }
  func.func @transform_2(%arg0: i32, %arg1: i32) -> (i32, i32) {
    %c0_i32 = arith.constant 0 : i32
    %c0_i32_0 = arith.constant 0 : i32
    return %arg0, %c0_i32 : i32, i32
  }
  func.func @transform_3(%arg0: i32, %arg1: i32) -> (i32, i32, i32) {
    %c0_i32 = arith.constant 0 : i32
    %c0_i32_0 = arith.constant 0 : i32
    return %arg0, %arg1, %c0_i32 : i32, i32, i32
  }
}

</mosaic_0001>

<llo_original>
// kernel: tpu_custom_call.1
$region0: #{tpu_custom_call.1}
  #allocation0 [shape = 'u32[]', space=smem, size = 0x4, offset = 0x4, fixed_abs, tag = 'smem constant byte address 0x4 - core index']
  #allocation1 [shape = 'u32[144,128]{1,0:T(1,128)}', space=vmem, size = 0x12000, scoped, tag = 'internal scratch']
  #allocation2 [shape = 'f32[8,32]{1,0:T(8,128)}', space=vmem, size = 0x1000, scoped, tag = 'scratch operand']
  #allocation3 [shape = 'f32[8,32]{1,0:T(8,128)}', space=vmem, size = 0x1000, scoped, tag = 'scratch operand']
  %s0 = inlined_call_operand.hbm [shape: f32[8,8,128], index: 0, kind: input, shape index: {}]
  %s1 = inlined_call_operand.hbm [shape: f32[32,128], index: 1, kind: input, shape index: {}]
  %s2 = inlined_call_operand.hbm [shape: f32[8,32], index: 2, kind: input, shape index: {}]
  %s3 = inlined_call_operand.hbm [shape: f32[8,8,32], index: 3, kind: output, shape index: {}]
  %s4 = sld [smem:[#allocation0]]
  $region38: #{tpu_custom_call.1} parent=0
    _
  %s6 = ssub.s32 1, %s4
  %s7 = scalar_select 0, %s6, %s4
  $region1: #{tpu_custom_call.1} parent=0
    #allocation4 [shape = 'u8[32768]{0}', space=vmem, size = 0x8000, scoped, tag = 'input window, operand 0, single buffered']
    #allocation5 [shape = 's32[1]{0}', space=sflag, size = 0x4, scoped, tag = 'scoped memory for tpu_custom_call.1']
    #allocation6 [shape = 's32[1]{0}', space=sflag, size = 0x4, scoped, tag = 'scoped memory for tpu_custom_call.1']
    #allocation7 [shape = 'u8[16384]{0}', space=vmem, size = 0x4000, scoped, tag = 'input window, operand 1, single buffered']
    #allocation8 [shape = 's32[1]{0}', space=sflag, size = 0x4, scoped, tag = 'scoped memory for tpu_custom_call.1']
    #allocation9 [shape = 'u8[4096]{0}', space=vmem, size = 0x1000, scoped, tag = 'input window, operand 2, single buffered']
    #allocation10 [shape = 'u8[32768]{0}', space=vmem, size = 0x8000, scoped, tag = 'output window, operand 0, single buffered']
    %8 = vsyncpa [#allocation5], 0
    %9 = vsyncpa [#allocation8], 0
    %10 = vsyncpa [#allocation6], 0
    // Predicated region
    $region2: #{tpu_custom_call.1} parent=1 // pred_check
      _
    $region3: #{tpu_custom_call.1} parent=1 // pred_check_branch
      %12 = sbr.rel (0) target = $region5
    $region4: #{tpu_custom_call.1} parent=1 // pred_region
      %s14 = ssub.s32 1024, 1024
      %15 = vsyncadd [#allocation5], %s14
      %s16 = sshll.u32 [#allocation4], 4
      %s17 = int_to_ptr.vmem [resolvable:$true] %s16
      %22 = dma.hbm_to_vmem [thread:$0]  %s0, 1024, %s17, [#allocation5], 128, 128, 8
    $region5: #{tpu_custom_call.1} parent=1 // pred_fallthru
      _
    // Predicated region
    $region6: #{tpu_custom_call.1} parent=1 // pred_check
      _
    $region7: #{tpu_custom_call.1} parent=1 // pred_check_branch
      %24 = sbr.rel (0) target = $region9
    $region8: #{tpu_custom_call.1} parent=1 // pred_region
      %s26 = ssub.s32 512, 512
      %27 = vsyncadd [#allocation8], %s26
      %s28 = sshll.u32 [#allocation7], 4
      %s29 = int_to_ptr.vmem [resolvable:$true] %s28
      %34 = dma.hbm_to_vmem [thread:$0]  %s1, 512, %s29, [#allocation8], 128, 128, 8
    $region9: #{tpu_custom_call.1} parent=1 // pred_fallthru
      _
    // Predicated region
    $region10: #{tpu_custom_call.1} parent=1 // pred_check
      _
    $region11: #{tpu_custom_call.1} parent=1 // pred_check_branch
      %36 = sbr.rel (0) target = $region13
    $region12: #{tpu_custom_call.1} parent=1 // pred_region
      %s38 = ssub.s32 128, 128
      %39 = vsyncadd [#allocation8], %s38
      %s41 = sshll.u32 [#allocation9], 4
      %s42 = int_to_ptr.vmem [resolvable:$true] %s41
      %44 = dma.hbm_to_vmem [thread:$0]  %s2, 128, %s42, [#allocation8]
    $region13: #{tpu_custom_call.1} parent=1 // pred_fallthru
      _
    // Predicated region
    $region14: #{tpu_custom_call.1} parent=1 // pred_check
      _
    $region15: #{tpu_custom_call.1} parent=1 // pred_check_branch
      %46 = sbr.rel (0) target = $region17
    $region16: #{tpu_custom_call.1} parent=1 // pred_region
      %47 = dma.done [#allocation5], 1024
    $region17: #{tpu_custom_call.1} parent=1 // pred_fallthru
      _
    // Predicated region
    $region18: #{tpu_custom_call.1} parent=1 // pred_check
      _
    $region19: #{tpu_custom_call.1} parent=1 // pred_check_branch
      %49 = sbr.rel (0) target = $region21
    $region20: #{tpu_custom_call.1} parent=1 // pred_region
      %50 = dma.done [#allocation8], 512
    $region21: #{tpu_custom_call.1} parent=1 // pred_fallthru
      _
    // Predicated region
    $region22: #{tpu_custom_call.1} parent=1 // pred_check
      _
    $region23: #{tpu_custom_call.1} parent=1 // pred_check_branch
      %52 = sbr.rel (0) target = $region25
    $region24: #{tpu_custom_call.1} parent=1 // pred_region
      %53 = dma.done [#allocation8], 128
    $region25: #{tpu_custom_call.1} parent=1 // pred_fallthru
      _
    %p54 = scmp.eq.s32.totalorder 0, 0
    // Predicated region
    $region26: #{tpu_custom_call.1} parent=1 // pred_check
      %p55 = pneg %p54
    $region27: #{tpu_custom_call.1} parent=1 // pred_check_branch
      %57 = sbr.rel (%p55) target = $region29
    $region28: #{tpu_custom_call.1} parent=1 // pred_region
      %vm58 = vcmask 261120
      %59 = vst.msk [vmem:[#allocation2] sm:$0xff] %vm58, 0.0
      %60 = vst.msk [vmem:[#allocation3] sm:$0xff] %vm58, 0.0
    $region29: #{tpu_custom_call.1} parent=1 // pred_fallthru
      _
    %v61 = vld [vmem:[#allocation7] sm:$0xff]
    %v62 = vld [vmem:[#allocation7 + $0x8] sm:$0xff]
    %v63 = vld [vmem:[#allocation7 + $0x10] sm:$0xff]
    %v64 = vld [vmem:[#allocation7 + $0x18] sm:$0xff]
    %v65 = vld [vmem:[#allocation9] sm:$0xff]
    %v66 = vld [vmem:[#allocation4] sm:$0x1]
    %v67 = vld [vmem:[#allocation4 + $0x8] sm:$0x1]
    %v68 = vld [vmem:[#allocation4 + $0x10] sm:$0x1]
    %v69 = vld [vmem:[#allocation4 + $0x18] sm:$0x1]
    %v70 = vld [vmem:[#allocation4 + $0x20] sm:$0x1]
    %v71 = vld [vmem:[#allocation4 + $0x28] sm:$0x1]
    %v72 = vld [vmem:[#allocation4 + $0x30] sm:$0x1]
    %v73 = vld [vmem:[#allocation4 + $0x38] sm:$0x1]
    %v74 = vld [vmem:[#allocation2] sm:$0xff]
    %vm75 = vcmask 261120
    %v77 = vsel %vm75, %v74, 0
    %79 = vmatprep.subr.mxu0 0.0
    %80 = vmatpush1.msra.mxu0 %v61
    %81 = vmatprep.subr.mxu0 0.0
    %82 = vmatpush1.msra.mxu0 %v62
    %83 = vmatprep.subr.mxu0 0.0
    %84 = vmatpush1.msra.mxu0 %v63
    %85 = vmatprep.subr.mxu0 0.0
    %86 = vmatpush1.msra.mxu0 %v64
    %87 = vmatprep.subr.mxu0 0.0
    %88 = vmatpush1.msra.mxu0 0.0
    %89 = vmatprep.subr.mxu0 0.0
    %90 = vmatpush1.msra.mxu0 0.0
    %91 = vmatprep.subr.mxu0 0.0
    %92 = vmatpush1.msra.mxu0 0.0
    %93 = vmatprep.subr.mxu0 0.0
    %94 = vmatpush1.msra.mxu0 0.0
    %95 = vmatprep.subr.mxu0 0.0
    %96 = vmatpush1.msra.mxu0 0.0
    %97 = vmatprep.subr.mxu0 0.0
    %98 = vmatpush1.msra.mxu0 0.0
    %99 = vmatprep.subr.mxu0 0.0
    %100 = vmatpush1.msra.mxu0 0.0
    %101 = vmatprep.subr.mxu0 0.0
    %102 = vmatpush1.msra.mxu0 0.0
    %103 = vmatprep.subr.mxu0 0.0
    %104 = vmatpush1.msra.mxu0 0.0
    %105 = vmatprep.subr.mxu0 0.0
    %106 = vmatpush1.msra.mxu0 0.0
    %107 = vmatprep.subr.mxu0 0.0
    %108 = vmatpush1.msra.mxu0 0.0
    %109 = vmatprep.subr.mxu0 0.0
    %110 = vmatpush1.msra.mxu0 0.0
    %111 = vmatprep.subr.mxu0 0.0
    %112 = vmatpush1.msra.mxu0 0.0
    %113 = vmatprep.subr.mxu0 0.0
    %114 = vmatpush1.msra.mxu0 0.0
    %115 = vmatprep.subr.mxu0 0.0
    %116 = vmatpush1.msra.mxu0 0.0
    %117 = vmatprep.subr.mxu0 0.0
    %118 = vmatpush1.msra.mxu0 0.0
    %119 = vmatprep.subr.mxu0 0.0
    %120 = vmatpush1.msra.mxu0 0.0
    %121 = vmatprep.subr.mxu0 0.0
    %122 = vmatpush1.msra.mxu0 0.0
    %123 = vmatprep.subr.mxu0 0.0
    %124 = vmatpush1.msra.mxu0 0.0
    %125 = vmatprep.subr.mxu0 0.0
    %126 = vmatpush1.msra.mxu0 0.0
    %127 = vmatprep.subr.mxu0 0.0
    %128 = vmatpush1.msra.mxu0 0.0
    %129 = vmatprep.subr.mxu0 0.0
    %130 = vmatpush1.msra.mxu0 0.0
    %131 = vmatprep.subr.mxu0 0.0
    %132 = vmatpush1.msra.mxu0 0.0
    %133 = vmatprep.subr.mxu0 0.0
    %134 = vmatpush1.msra.mxu0 0.0
    %135 = vmatprep.subr.mxu0 0.0
    %136 = vmatpush1.msra.mxu0 0.0
    %137 = vmatprep.subr.mxu0 0.0
    %138 = vmatpush1.msra.mxu0 0.0
    %139 = vmatprep.subr.mxu0 0.0
    %140 = vmatpush1.msra.mxu0 0.0
    %141 = vmatprep.subr.mxu0 0.0
    %142 = vmatpush1.msra.mxu0 0.0
    %143 = vmatprep.mubr.f32.mxu0 0.0
    %144 = vmatmul.mubr.f32.gmra.mrb[0].mxu0 %v77
    %v145 = vpop.f32.mrb[0].mxu0
    %v146 = vadd.f32 0.0, %v145
    %v147 = vpop.f32.mrb[0].mxu0
    %148 = vdwg.mxu0
    %v150 = vrot.slane %v146, 1
    %v151 = vrot.slane %v146, 2
    %v152 = vrot.slane %v146, 3
    %v153 = vrot.slane %v146, 4
    %v154 = vrot.slane %v146, 5
    %v155 = vrot.slane %v146, 6
    %v156 = vrot.slane %v146, 7
    %v165 = vadd.f32 %v66, %v146
    %v166 = vadd.f32 %v67, %v150
    %v167 = vadd.f32 %v68, %v151
    %v168 = vadd.f32 %v69, %v152
    %v169 = vadd.f32 %v70, %v153
    %v170 = vadd.f32 %v71, %v154
    %v171 = vadd.f32 %v72, %v155
    %v172 = vadd.f32 %v73, %v156
    %v173 = vxor.u32 %v165, 2147483648
    %v174 = vxor.u32 %v166, 2147483648
    %v175 = vxor.u32 %v167, 2147483648
    %v176 = vxor.u32 %v168, 2147483648
    %v177 = vxor.u32 %v169, 2147483648
    %v178 = vxor.u32 %v170, 2147483648
    %v179 = vxor.u32 %v171, 2147483648
    %v180 = vxor.u32 %v172, 2147483648
    %v181 = vmul.f32 %v173, 1.442695
    %v182 = vpow.pop %v181
    %v183 = vmul.f32 %v174, 1.442695
    %v184 = vpow.pop %v183
    %v185 = vmul.f32 %v175, 1.442695
    %v186 = vpow.pop %v185
    %v187 = vmul.f32 %v176, 1.442695
    %v188 = vpow.pop %v187
    %v189 = vmul.f32 %v177, 1.442695
    %v190 = vpow.pop %v189
    %v191 = vmul.f32 %v178, 1.442695
    %v192 = vpow.pop %v191
    %v193 = vmul.f32 %v179, 1.442695
    %v194 = vpow.pop %v193
    %v195 = vmul.f32 %v180, 1.442695
    %v196 = vpow.pop %v195
    %v197 = vadd.f32 %v182, 1.0
    %v198 = vadd.f32 %v184, 1.0
    %v199 = vadd.f32 %v186, 1.0
    %v200 = vadd.f32 %v188, 1.0
    %v201 = vadd.f32 %v190, 1.0
    %v202 = vadd.f32 %v192, 1.0
    %v203 = vadd.f32 %v194, 1.0
    %v204 = vadd.f32 %v196, 1.0
    %v205 = vrcp.pop %v197
    %v206 = vmul.f32 1.0, %v205
    %v207 = vrcp.pop %v198
    %v208 = vmul.f32 1.0, %v207
    %v209 = vrcp.pop %v199
    %v210 = vmul.f32 1.0, %v209
    %v211 = vrcp.pop %v200
    %v212 = vmul.f32 1.0, %v211
    %v213 = vrcp.pop %v201
    %v214 = vmul.f32 1.0, %v213
    %v215 = vrcp.pop %v202
    %v216 = vmul.f32 1.0, %v215
    %v217 = vrcp.pop %v203
    %v218 = vmul.f32 1.0, %v217
    %v219 = vrcp.pop %v204
    %v220 = vmul.f32 1.0, %v219
    %v221 = vtanh.pop %v165
    %v222 = vtanh.pop %v166
    %v223 = vtanh.pop %v167
    %v224 = vtanh.pop %v168
    %v225 = vtanh.pop %v169
    %v226 = vtanh.pop %v170
    %v227 = vtanh.pop %v171
    %v228 = vtanh.pop %v172
    %v229 = vld [vmem:[#allocation3] sm:$0xff]
    %v231 = vrot.slane %v229, 1
    %v232 = vrot.slane %v229, 2
    %v233 = vrot.slane %v229, 3
    %v234 = vrot.slane %v229, 4
    %v235 = vrot.slane %v229, 5
    %v236 = vrot.slane %v229, 6
    %v237 = vrot.slane %v229, 7
    %238 = vrot.lane.b32.xlu0 %v229, 32
    %v239 = vpop.permute.xlu0 %238
    %240 = vrot.lane.b32.xlu0 %v231, 32
    %v241 = vpop.permute.xlu0 %240
    %242 = vrot.lane.b32.xlu0 %v232, 32
    %v243 = vpop.permute.xlu0 %242
    %244 = vrot.lane.b32.xlu0 %v233, 32
    %v245 = vpop.permute.xlu0 %244
    %246 = vrot.lane.b32.xlu0 %v234, 32
    %v247 = vpop.permute.xlu0 %246
    %248 = vrot.lane.b32.xlu0 %v235, 32
    %v249 = vpop.permute.xlu0 %248
    %250 = vrot.lane.b32.xlu0 %v236, 32
    %v251 = vpop.permute.xlu0 %250
    %252 = vrot.lane.b32.xlu0 %v237, 32
    %v253 = vpop.permute.xlu0 %252
    %v262 = vmul.f32 %v206, %v239
    %v263 = vmul.f32 %v208, %v241
    %v264 = vmul.f32 %v210, %v243
    %v265 = vmul.f32 %v212, %v245
    %v266 = vmul.f32 %v214, %v247
    %v267 = vmul.f32 %v216, %v249
    %v268 = vmul.f32 %v218, %v251
    %v269 = vmul.f32 %v220, %v253
    %278 = vrot.lane.b32.xlu0 %v221, 64
    %v279 = vpop.permute.xlu0 %278
    %280 = vrot.lane.b32.xlu0 %v222, 64
    %v281 = vpop.permute.xlu0 %280
    %282 = vrot.lane.b32.xlu0 %v223, 64
    %v283 = vpop.permute.xlu0 %282
    %284 = vrot.lane.b32.xlu0 %v224, 64
    %v285 = vpop.permute.xlu0 %284
    %286 = vrot.lane.b32.xlu0 %v225, 64
    %v287 = vpop.permute.xlu0 %286
    %288 = vrot.lane.b32.xlu0 %v226, 64
    %v289 = vpop.permute.xlu0 %288
    %290 = vrot.lane.b32.xlu0 %v227, 64
    %v291 = vpop.permute.xlu0 %290
    %292 = vrot.lane.b32.xlu0 %v228, 64
    %v293 = vpop.permute.xlu0 %292
    %v302 = vmul.f32 %v206, %v279
    %v303 = vmul.f32 %v208, %v281
    %v304 = vmul.f32 %v210, %v283
    %v305 = vmul.f32 %v212, %v285
    %v306 = vmul.f32 %v214, %v287
    %v307 = vmul.f32 %v216, %v289
    %v308 = vmul.f32 %v218, %v291
    %v309 = vmul.f32 %v220, %v293
    %318 = vrot.lane.b32.xlu0 %v302, 32
    %v319 = vpop.permute.xlu0 %318
    %320 = vrot.lane.b32.xlu0 %v303, 32
    %v321 = vpop.permute.xlu0 %320
    %322 = vrot.lane.b32.xlu0 %v304, 32
    %v323 = vpop.permute.xlu0 %322
    %324 = vrot.lane.b32.xlu0 %v305, 32
    %v325 = vpop.permute.xlu0 %324
    %326 = vrot.lane.b32.xlu0 %v306, 32
    %v327 = vpop.permute.xlu0 %326
    %328 = vrot.lane.b32.xlu0 %v307, 32
    %v329 = vpop.permute.xlu0 %328
    %330 = vrot.lane.b32.xlu0 %v308, 32
    %v331 = vpop.permute.xlu0 %330
    %332 = vrot.lane.b32.xlu0 %v309, 32
    %v333 = vpop.permute.xlu0 %332
    %v342 = vadd.f32 %v262, %v319
    %v343 = vadd.f32 %v263, %v321
    %v344 = vadd.f32 %v264, %v323
    %v345 = vadd.f32 %v265, %v325
    %v346 = vadd.f32 %v266, %v327
    %v347 = vadd.f32 %v267, %v329
    %v348 = vadd.f32 %v268, %v331
    %v349 = vadd.f32 %v269, %v333
    %v350 = vtanh.pop %v342
    %v351 = vtanh.pop %v343
    %v352 = vtanh.pop %v344
    %v353 = vtanh.pop %v345
    %v354 = vtanh.pop %v346
    %v355 = vtanh.pop %v347
    %v356 = vtanh.pop %v348
    %v357 = vtanh.pop %v349
    %366 = vrot.lane.b32.xlu0 %v350, 64
    %v367 = vpop.permute.xlu0 %366
    %368 = vrot.lane.b32.xlu0 %v351, 64
    %v369 = vpop.permute.xlu0 %368
    %370 = vrot.lane.b32.xlu0 %v352, 64
    %v371 = vpop.permute.xlu0 %370
    %372 = vrot.lane.b32.xlu0 %v353, 64
    %v373 = vpop.permute.xlu0 %372
    %374 = vrot.lane.b32.xlu0 %v354, 64
    %v375 = vpop.permute.xlu0 %374
    %376 = vrot.lane.b32.xlu0 %v355, 64
    %v377 = vpop.permute.xlu0 %376
    %378 = vrot.lane.b32.xlu0 %v356, 64
    %v379 = vpop.permute.xlu0 %378
    %380 = vrot.lane.b32.xlu0 %v357, 64
    %v381 = vpop.permute.xlu0 %380
    %v390 = vmul.f32 %v206, %v367
    %v391 = vmul.f32 %v208, %v369
    %v392 = vmul.f32 %v210, %v371
    %v393 = vmul.f32 %v212, %v373
    %v394 = vmul.f32 %v214, %v375
    %v395 = vmul.f32 %v216, %v377
    %v396 = vmul.f32 %v218, %v379
    %v397 = vmul.f32 %v220, %v381
    %v406 = vrot.slane %v343, 7
    %vm407 = vcmask 1041409
    %v408 = vsel %vm407, %v406, %v342
    %v409 = vrot.slane %v344, 6
    %vm410 = vcmask 1042434
    %v411 = vsel %vm410, %v409, %v408
    %v412 = vrot.slane %v345, 5
    %vm413 = vcmask 1043459
    %v414 = vsel %vm413, %v412, %v411
    %v415 = vrot.slane %v346, 4
    %vm416 = vcmask 1044484
    %v417 = vsel %vm416, %v415, %v414
    %v418 = vrot.slane %v347, 3
    %vm419 = vcmask 1045509
    %v420 = vsel %vm419, %v418, %v417
    %v421 = vrot.slane %v348, 2
    %vm422 = vcmask 1046534
    %v423 = vsel %vm422, %v421, %v420
    %v424 = vrot.slane %v349, 1
    %vm425 = vcmask 1047559
    %v426 = vsel %vm425, %v424, %v423
    %427 = vrot.lane.b32.xlu0 %v426, 96
    %v428 = vpop.permute.xlu0 %427
    %430 = vst.msk [vmem:[#allocation3] sm:$0xff] %vm75, %v428
    %v439 = vrot.slane %v391, 7
    %v440 = vsel %vm407, %v439, %v390
    %v441 = vrot.slane %v392, 6
    %v442 = vsel %vm410, %v441, %v440
    %v443 = vrot.slane %v393, 5
    %v444 = vsel %vm413, %v443, %v442
    %v445 = vrot.slane %v394, 4
    %v446 = vsel %vm416, %v445, %v444
    %v447 = vrot.slane %v395, 3
    %v448 = vsel %vm419, %v447, %v446
    %v449 = vrot.slane %v396, 2
    %v450 = vsel %vm422, %v449, %v448
    %v451 = vrot.slane %v397, 1
    %v452 = vsel %vm425, %v451, %v450
    %453 = vrot.lane.b32.xlu0 %v452, 32
    %v454 = vpop.permute.xlu0 %453
    %456 = vst.msk [vmem:[#allocation2] sm:$0xff] %vm75, %v454
    %v458 = vrot.slane %v65, 1
    %v459 = vrot.slane %v65, 2
    %v460 = vrot.slane %v65, 3
    %v461 = vrot.slane %v65, 4
    %v462 = vrot.slane %v65, 5
    %v463 = vrot.slane %v65, 6
    %v464 = vrot.slane %v65, 7
    %465 = vrot.lane.b32.xlu0 %v65, 96
    %v466 = vpop.permute.xlu0 %465
    %467 = vrot.lane.b32.xlu0 %v458, 96
    %v468 = vpop.permute.xlu0 %467
    %469 = vrot.lane.b32.xlu0 %v459, 96
    %v470 = vpop.permute.xlu0 %469
    %471 = vrot.lane.b32.xlu0 %v460, 96
    %v472 = vpop.permute.xlu0 %471
    %473 = vrot.lane.b32.xlu0 %v461, 96
    %v474 = vpop.permute.xlu0 %473
    %475 = vrot.lane.b32.xlu0 %v462, 96
    %v476 = vpop.permute.xlu0 %475
    %477 = vrot.lane.b32.xlu0 %v463, 96
    %v478 = vpop.permute.xlu0 %477
    %479 = vrot.lane.b32.xlu0 %v464, 96
    %v480 = vpop.permute.xlu0 %479
    %v489 = vmul.f32 %v390, %v466
    %v490 = vmul.f32 %v391, %v468
    %v491 = vmul.f32 %v392, %v470
    %v492 = vmul.f32 %v393, %v472
    %v493 = vmul.f32 %v394, %v474
    %v494 = vmul.f32 %v395, %v476
    %v495 = vmul.f32 %v396, %v478
    %v496 = vmul.f32 %v397, %v480
    %505 = vrot.lane.b32.xlu0 %v489, 32
    %v506 = vpop.permute.xlu0 %505
    %507 = vrot.lane.b32.xlu0 %v490, 32
    %v508 = vpop.permute.xlu0 %507
    %509 = vrot.lane.b32.xlu0 %v491, 32
    %v510 = vpop.permute.xlu0 %509
    %511 = vrot.lane.b32.xlu0 %v492, 32
    %v512 = vpop.permute.xlu0 %511
    %513 = vrot.lane.b32.xlu0 %v493, 32
    %v514 = vpop.permute.xlu0 %513
    %515 = vrot.lane.b32.xlu0 %v494, 32
    %v516 = vpop.permute.xlu0 %515
    %517 = vrot.lane.b32.xlu0 %v495, 32
    %v518 = vpop.permute.xlu0 %517
    %519 = vrot.lane.b32.xlu0 %v496, 32
    %v520 = vpop.permute.xlu0 %519
    %vm529 = vcmask 253952
    %530 = vst.msk [vmem:[#allocation10] sm:$0x1] %vm529, %v506
    %531 = vst.msk [vmem:[#allocation10 + $0x8] sm:$0x1] %vm529, %v508
    %532 = vst.msk [vmem:[#allocation10 + $0x10] sm:$0x1] %vm529, %v510
    %533 = vst.msk [vmem:[#allocation10 + $0x18] sm:$0x1] %vm529, %v512
    %534 = vst.msk [vmem:[#allocation10 + $0x20] sm:$0x1] %vm529, %v514
    %535 = vst.msk [vmem:[#allocation10 + $0x28] sm:$0x1] %vm529, %v516
    %536 = vst.msk [vmem:[#allocation10 + $0x30] sm:$0x1] %vm529, %v518
    %537 = vst.msk [vmem:[#allocation10 + $0x38] sm:$0x1] %vm529, %v520
    %v538 = vld [vmem:[#allocation4 + $0x1] sm:$0x1]
    %v539 = vld [vmem:[#allocation4 + $0x9] sm:$0x1]
    %v540 = vld [vmem:[#allocation4 + $0x11] sm:$0x1]
    %v541 = vld [vmem:[#allocation4 + $0x19] sm:$0x1]
    %v542 = vld [vmem:[#allocation4 + $0x21] sm:$0x1]
    %v543 = vld [vmem:[#allocation4 + $0x29] sm:$0x1]
    %v544 = vld [vmem:[#allocation4 + $0x31] sm:$0x1]
    %v545 = vld [vmem:[#allocation4 + $0x39] sm:$0x1]
    %v546 = vld [vmem:[#allocation2] sm:$0xff]
    %v548 = vsel %vm75, %v546, 0
    %550 = vmatprep.subr.mxu0 0.0
    %551 = vmatpush1.msra.mxu0 %v61
    %552 = vmatprep.subr.mxu0 0.0
    %553 = vmatpush1.msra.mxu0 %v62
    %554 = vmatprep.subr.mxu0 0.0
    %555 = vmatpush1.msra.mxu0 %v63
    %556 = vmatprep.subr.mxu0 0.0
    %557 = vmatpush1.msra.mxu0 %v64
    %558 = vmatprep.subr.mxu0 0.0
    %559 = vmatpush1.msra.mxu0 0.0
    %560 = vmatprep.subr.mxu0 0.0
    %561 = vmatpush1.msra.mxu0 0.0
    %562 = vmatprep.subr.mxu0 0.0
    %563 = vmatpush1.msra.mxu0 0.0
    %564 = vmatprep.subr.mxu0 0.0
    %565 = vmatpush1.msra.mxu0 0.0
    %566 = vmatprep.subr.mxu0 0.0
    %567 = vmatpush1.msra.mxu0 0.0
    %568 = vmatprep.subr.mxu0 0.0
    %569 = vmatpush1.msra.mxu0 0.0
    %570 = vmatprep.subr.mxu0 0.0
    %571 = vmatpush1.msra.mxu0 0.0
    %572 = vmatprep.subr.mxu0 0.0
    %573 = vmatpush1.msra.mxu0 0.0
    %574 = vmatprep.subr.mxu0 0.0
    %575 = vmatpush1.msra.mxu0 0.0
    %576 = vmatprep.subr.mxu0 0.0
    %577 = vmatpush1.msra.mxu0 0.0
    %578 = vmatprep.subr.mxu0 0.0
    %579 = vmatpush1.msra.mxu0 0.0
    %580 = vmatprep.subr.mxu0 0.0
    %581 = vmatpush1.msra.mxu0 0.0
    %582 = vmatprep.subr.mxu0 0.0
    %583 = vmatpush1.msra.mxu0 0.0
    %584 = vmatprep.subr.mxu0 0.0
    %585 = vmatpush1.msra.mxu0 0.0
    %586 = vmatprep.subr.mxu0 0.0
    %587 = vmatpush1.msra.mxu0 0.0
    %588 = vmatprep.subr.mxu0 0.0
    %589 = vmatpush1.msra.mxu0 0.0
    %590 = vmatprep.subr.mxu0 0.0
    %591 = vmatpush1.msra.mxu0 0.0
    %592 = vmatprep.subr.mxu0 0.0
    %593 = vmatpush1.msra.mxu0 0.0
    %594 = vmatprep.subr.mxu0 0.0
    %595 = vmatpush1.msra.mxu0 0.0
    %596 = vmatprep.subr.mxu0 0.0
    %597 = vmatpush1.msra.mxu0 0.0
    %598 = vmatprep.subr.mxu0 0.0
    %599 = vmatpush1.msra.mxu0 0.0
    %600 = vmatprep.subr.mxu0 0.0
    %601 = vmatpush1.msra.mxu0 0.0
    %602 = vmatprep.subr.mxu0 0.0
    %603 = vmatpush1.msra.mxu0 0.0
    %604 = vmatprep.subr.mxu0 0.0
    %605 = vmatpush1.msra.mxu0 0.0
    %606 = vmatprep.subr.mxu0 0.0
    %607 = vmatpush1.msra.mxu0 0.0
    %608 = vmatprep.subr.mxu0 0.0
    %609 = vmatpush1.msra.mxu0 0.0
    %610 = vmatprep.subr.mxu0 0.0
    %611 = vmatpush1.msra.mxu0 0.0
    %612 = vmatprep.subr.mxu0 0.0
    %613 = vmatpush1.msra.mxu0 0.0
    %614 = vmatprep.mubr.f32.mxu0 0.0
    %615 = vmatmul.mubr.f32.gmra.mrb[0].mxu0 %v548
    %v616 = vpop.f32.mrb[0].mxu0
    %v617 = vadd.f32 0.0, %v616
    %v618 = vpop.f32.mrb[0].mxu0
    %619 = vdwg.mxu0
    %v621 = vrot.slane %v617, 1
    %v622 = vrot.slane %v617, 2
    %v623 = vrot.slane %v617, 3
    %v624 = vrot.slane %v617, 4
    %v625 = vrot.slane %v617, 5
    %v626 = vrot.slane %v617, 6
    %v627 = vrot.slane %v617, 7
    %v636 = vadd.f32 %v538, %v617
    %v637 = vadd.f32 %v539, %v621
    %v638 = vadd.f32 %v540, %v622
    %v639 = vadd.f32 %v541, %v623
    %v640 = vadd.f32 %v542, %v624
    %v641 = vadd.f32 %v543, %v625
    %v642 = vadd.f32 %v544, %v626
    %v643 = vadd.f32 %v545, %v627
    %v644 = vxor.u32 %v636, 2147483648
    %v645 = vxor.u32 %v637, 2147483648
    %v646 = vxor.u32 %v638, 2147483648
    %v647 = vxor.u32 %v639, 2147483648
    %v648 = vxor.u32 %v640, 2147483648
    %v649 = vxor.u32 %v641, 2147483648
    %v650 = vxor.u32 %v642, 2147483648
    %v651 = vxor.u32 %v643, 2147483648
    %v652 = vmul.f32 %v644, 1.442695
    %v653 = vpow.pop %v652
    %v654 = vmul.f32 %v645, 1.442695
    %v655 = vpow.pop %v654
    %v656 = vmul.f32 %v646, 1.442695
    %v657 = vpow.pop %v656
    %v658 = vmul.f32 %v647, 1.442695
    %v659 = vpow.pop %v658
    %v660 = vmul.f32 %v648, 1.442695
    %v661 = vpow.pop %v660
    %v662 = vmul.f32 %v649, 1.442695
    %v663 = vpow.pop %v662
    %v664 = vmul.f32 %v650, 1.442695
    %v665 = vpow.pop %v664
    %v666 = vmul.f32 %v651, 1.442695
    %v667 = vpow.pop %v666
    %v668 = vadd.f32 %v653, 1.0
    %v669 = vadd.f32 %v655, 1.0
    %v670 = vadd.f32 %v657, 1.0
    %v671 = vadd.f32 %v659, 1.0
    %v672 = vadd.f32 %v661, 1.0
    %v673 = vadd.f32 %v663, 1.0
    %v674 = vadd.f32 %v665, 1.0
    %v675 = vadd.f32 %v667, 1.0
    %v676 = vrcp.pop %v668
    %v677 = vmul.f32 1.0, %v676
    %v678 = vrcp.pop %v669
    %v679 = vmul.f32 1.0, %v678
    %v680 = vrcp.pop %v670
    %v681 = vmul.f32 1.0, %v680
    %v682 = vrcp.pop %v671
    %v683 = vmul.f32 1.0, %v682
    %v684 = vrcp.pop %v672
    %v685 = vmul.f32 1.0, %v684
    %v686 = vrcp.pop %v673
    %v687 = vmul.f32 1.0, %v686
    %v688 = vrcp.pop %v674
    %v689 = vmul.f32 1.0, %v688
    %v690 = vrcp.pop %v675
    %v691 = vmul.f32 1.0, %v690
    %v692 = vtanh.pop %v636
    %v693 = vtanh.pop %v637
    %v694 = vtanh.pop %v638
    %v695 = vtanh.pop %v639
    %v696 = vtanh.pop %v640
    %v697 = vtanh.pop %v641
    %v698 = vtanh.pop %v642
    %v699 = vtanh.pop %v643
    %v700 = vld [vmem:[#allocation3] sm:$0xff]
    %v702 = vrot.slane %v700, 1
    %v703 = vrot.slane %v700, 2
    %v704 = vrot.slane %v700, 3
    %v705 = vrot.slane %v700, 4
    %v706 = vrot.slane %v700, 5
    %v707 = vrot.slane %v700, 6
    %v708 = vrot.slane %v700, 7
    %709 = vrot.lane.b32.xlu0 %v700, 32
    %v710 = vpop.permute.xlu0 %709
    %711 = vrot.lane.b32.xlu0 %v702, 32
    %v712 = vpop.permute.xlu0 %711
    %713 = vrot.lane.b32.xlu0 %v703, 32
    %v714 = vpop.permute.xlu0 %713
    %715 = vrot.lane.b32.xlu0 %v704, 32
    %v716 = vpop.permute.xlu0 %715
    %717 = vrot.lane.b32.xlu0 %v705, 32
    %v718 = vpop.permute.xlu0 %717
    %719 = vrot.lane.b32.xlu0 %v706, 32
    %v720 = vpop.permute.xlu0 %719
    %721 = vrot.lane.b32.xlu0 %v707, 32
    %v722 = vpop.permute.xlu0 %721
    %723 = vrot.lane.b32.xlu0 %v708, 32
    %v724 = vpop.permute.xlu0 %723
    %v733 = vmul.f32 %v677, %v710
    %v734 = vmul.f32 %v679, %v712
    %v735 = vmul.f32 %v681, %v714
    %v736 = vmul.f32 %v683, %v716
    %v737 = vmul.f32 %v685, %v718
    %v738 = vmul.f32 %v687, %v720
    %v739 = vmul.f32 %v689, %v722
    %v740 = vmul.f32 %v691, %v724
    %749 = vrot.lane.b32.xlu0 %v692, 64
    %v750 = vpop.permute.xlu0 %749
    %751 = vrot.lane.b32.xlu0 %v693, 64
    %v752 = vpop.permute.xlu0 %751
    %753 = vrot.lane.b32.xlu0 %v694, 64
    %v754 = vpop.permute.xlu0 %753
    %755 = vrot.lane.b32.xlu0 %v695, 64
    %v756 = vpop.permute.xlu0 %755
    %757 = vrot.lane.b32.xlu0 %v696, 64
    %v758 = vpop.permute.xlu0 %757
    %759 = vrot.lane.b32.xlu0 %v697, 64
    %v760 = vpop.permute.xlu0 %759
    %761 = vrot.lane.b32.xlu0 %v698, 64
    %v762 = vpop.permute.xlu0 %761
    %763 = vrot.lane.b32.xlu0 %v699, 64
    %v764 = vpop.permute.xlu0 %763
    %v773 = vmul.f32 %v677, %v750
    %v774 = vmul.f32 %v679, %v752
    %v775 = vmul.f32 %v681, %v754
    %v776 = vmul.f32 %v683, %v756
    %v777 = vmul.f32 %v685, %v758
    %v778 = vmul.f32 %v687, %v760
    %v779 = vmul.f32 %v689, %v762
    %v780 = vmul.f32 %v691, %v764
    %789 = vrot.lane.b32.xlu0 %v773, 32
    %v790 = vpop.permute.xlu0 %789
    %791 = vrot.lane.b32.xlu0 %v774, 32
    %v792 = vpop.permute.xlu0 %791
    %793 = vrot.lane.b32.xlu0 %v775, 32
    %v794 = vpop.permute.xlu0 %793
    %795 = vrot.lane.b32.xlu0 %v776, 32
    %v796 = vpop.permute.xlu0 %795
    %797 = vrot.lane.b32.xlu0 %v777, 32
    %v798 = vpop.permute.xlu0 %797
    %799 = vrot.lane.b32.xlu0 %v778, 32
    %v800 = vpop.permute.xlu0 %799
    %801 = vrot.lane.b32.xlu0 %v779, 32
    %v802 = vpop.permute.xlu0 %801
    %803 = vrot.lane.b32.xlu0 %v780, 32
    %v804 = vpop.permute.xlu0 %803
    %v813 = vadd.f32 %v733, %v790
    %v814 = vadd.f32 %v734, %v792
    %v815 = vadd.f32 %v735, %v794
    %v816 = vadd.f32 %v736, %v796
    %v817 = vadd.f32 %v737, %v798
    %v818 = vadd.f32 %v738, %v800
    %v819 = vadd.f32 %v739, %v802
    %v820 = vadd.f32 %v740, %v804
    %v821 = vtanh.pop %v813
    %v822 = vtanh.pop %v814
    %v823 = vtanh.pop %v815
    %v824 = vtanh.pop %v816
    %v825 = vtanh.pop %v817
    %v826 = vtanh.pop %v818
    %v827 = vtanh.pop %v819
    %v828 = vtanh.pop %v820
    %837 = vrot.lane.b32.xlu0 %v821, 64
    %v838 = vpop.permute.xlu0 %837
    %839 = vrot.lane.b32.xlu0 %v822, 64
    %v840 = vpop.permute.xlu0 %839
    %841 = vrot.lane.b32.xlu0 %v823, 64
    %v842 = vpop.permute.xlu0 %841
    %843 = vrot.lane.b32.xlu0 %v824, 64
    %v844 = vpop.permute.xlu0 %843
    %845 = vrot.lane.b32.xlu0 %v825, 64
    %v846 = vpop.permute.xlu0 %845
    %847 = vrot.lane.b32.xlu0 %v826, 64
    %v848 = vpop.permute.xlu0 %847
    %849 = vrot.lane.b32.xlu0 %v827, 64
    %v850 = vpop.permute.xlu0 %849
    %851 = vrot.lane.b32.xlu0 %v828, 64
    %v852 = vpop.permute.xlu0 %851
    %v861 = vmul.f32 %v677, %v838
    %v862 = vmul.f32 %v679, %v840
    %v863 = vmul.f32 %v681, %v842
    %v864 = vmul.f32 %v683, %v844
    %v865 = vmul.f32 %v685, %v846
    %v866 = vmul.f32 %v687, %v848
    %v867 = vmul.f32 %v689, %v850
    %v868 = vmul.f32 %v691, %v852
    %v877 = vrot.slane %v814, 7
    %v878 = vsel %vm407, %v877, %v813
    %v879 = vrot.slane %v815, 6
    %v880 = vsel %vm410, %v879, %v878
    %v881 = vrot.slane %v816, 5
    %v882 = vsel %vm413, %v881, %v880
    %v883 = vrot.slane %v817, 4
    %v884 = vsel %vm416, %v883, %v882
    %v885 = vrot.slane %v818, 3
    %v886 = vsel %vm419, %v885, %v884
    %v887 = vrot.slane %v819, 2
    %v888 = vsel %vm422, %v887, %v886
    %v889 = vrot.slane %v820, 1
    %v890 = vsel %vm425, %v889, %v888
    %891 = vrot.lane.b32.xlu0 %v890, 96
    %v892 = vpop.permute.xlu0 %891
    %894 = vst.msk [vmem:[#allocation3] sm:$0xff] %vm75, %v892
    %v903 = vrot.slane %v862, 7
    %v904 = vsel %vm407, %v903, %v861
    %v905 = vrot.slane %v863, 6
    %v906 = vsel %vm410, %v905, %v904
    %v907 = vrot.slane %v864, 5
    %v908 = vsel %vm413, %v907, %v906
    %v909 = vrot.slane %v865, 4
    %v910 = vsel %vm416, %v909, %v908
    %v911 = vrot.slane %v866, 3
    %v912 = vsel %vm419, %v911, %v910
    %v913 = vrot.slane %v867, 2
    %v914 = vsel %vm422, %v913, %v912
    %v915 = vrot.slane %v868, 1
    %v916 = vsel %vm425, %v915, %v914
    %917 = vrot.lane.b32.xlu0 %v916, 32
    %v918 = vpop.permute.xlu0 %917
    %920 = vst.msk [vmem:[#allocation2] sm:$0xff] %vm75, %v918
    %v921 = vmul.f32 %v861, %v466
    %v922 = vmul.f32 %v862, %v468
    %v923 = vmul.f32 %v863, %v470
    %v924 = vmul.f32 %v864, %v472
    %v925 = vmul.f32 %v865, %v474
    %v926 = vmul.f32 %v866, %v476
    %v927 = vmul.f32 %v867, %v478
    %v928 = vmul.f32 %v868, %v480
    %937 = vrot.lane.b32.xlu0 %v921, 32
    %v938 = vpop.permute.xlu0 %937
    %939 = vrot.lane.b32.xlu0 %v922, 32
    %v940 = vpop.permute.xlu0 %939
    %941 = vrot.lane.b32.xlu0 %v923, 32
    %v942 = vpop.permute.xlu0 %941
    %943 = vrot.lane.b32.xlu0 %v924, 32
    %v944 = vpop.permute.xlu0 %943
    %945 = vrot.lane.b32.xlu0 %v925, 32
    %v946 = vpop.permute.xlu0 %945
    %947 = vrot.lane.b32.xlu0 %v926, 32
    %v948 = vpop.permute.xlu0 %947
    %949 = vrot.lane.b32.xlu0 %v927, 32
    %v950 = vpop.permute.xlu0 %949
    %951 = vrot.lane.b32.xlu0 %v928, 32
    %v952 = vpop.permute.xlu0 %951
    %961 = vst.msk [vmem:[#allocation10 + $0x1] sm:$0x1] %vm529, %v938
    %962 = vst.msk [vmem:[#allocation10 + $0x9] sm:$0x1] %vm529, %v940
    %963 = vst.msk [vmem:[#allocation10 + $0x11] sm:$0x1] %vm529, %v942
    %964 = vst.msk [vmem:[#allocation10 + $0x19] sm:$0x1] %vm529, %v944
    %965 = vst.msk [vmem:[#allocation10 + $0x21] sm:$0x1] %vm529, %v946
    %966 = vst.msk [vmem:[#allocation10 + $0x29] sm:$0x1] %vm529, %v948
    %967 = vst.msk [vmem:[#allocation10 + $0x31] sm:$0x1] %vm529, %v950
    %968 = vst.msk [vmem:[#allocation10 + $0x39] sm:$0x1] %vm529, %v952
    %v969 = vld [vmem:[#allocation4 + $0x2] sm:$0x1]
    %v970 = vld [vmem:[#allocation4 + $0xa] sm:$0x1]
    %v971 = vld [vmem:[#allocation4 + $0x12] sm:$0x1]
    %v972 = vld [vmem:[#allocation4 + $0x1a] sm:$0x1]
    %v973 = vld [vmem:[#allocation4 + $0x22] sm:$0x1]
    %v974 = vld [vmem:[#allocation4 + $0x2a] sm:$0x1]
    %v975 = vld [vmem:[#allocation4 + $0x32] sm:$0x1]
    %v976 = vld [vmem:[#allocation4 + $0x3a] sm:$0x1]
    %v977 = vld [vmem:[#allocation2] sm:$0xff]
    %v979 = vsel %vm75, %v977, 0
    %981 = vmatprep.subr.mxu0 0.0
    %982 = vmatpush1.msra.mxu0 %v61
    %983 = vmatprep.subr.mxu0 0.0
    %984 = vmatpush1.msra.mxu0 %v62
    %985 = vmatprep.subr.mxu0 0.0
    %986 = vmatpush1.msra.mxu0 %v63
    %987 = vmatprep.subr.mxu0 0.0
    %988 = vmatpush1.msra.mxu0 %v64
    %989 = vmatprep.subr.mxu0 0.0
    %990 = vmatpush1.msra.mxu0 0.0
    %991 = vmatprep.subr.mxu0 0.0
    %992 = vmatpush1.msra.mxu0 0.0
    %993 = vmatprep.subr.mxu0 0.0
    %994 = vmatpush1.msra.mxu0 0.0
    %995 = vmatprep.subr.mxu0 0.0
    %996 = vmatpush1.msra.mxu0 0.0
    %997 = vmatprep.subr.mxu0 0.0
    %998 = vmatpush1.msra.mxu0 0.0
    %999 = vmatprep.subr.mxu0 0.0
    %1000 = vmatpush1.msra.mxu0 0.0
    %1001 = vmatprep.subr.mxu0 0.0
    %1002 = vmatpush1.msra.mxu0 0.0
    %1003 = vmatprep.subr.mxu0 0.0
    %1004 = vmatpush1.msra.mxu0 0.0
    %1005 = vmatprep.subr.mxu0 0.0
    %1006 = vmatpush1.msra.mxu0 0.0
    %1007 = vmatprep.subr.mxu0 0.0
    %1008 = vmatpush1.msra.mxu0 0.0
    %1009 = vmatprep.subr.mxu0 0.0
    %1010 = vmatpush1.msra.mxu0 0.0
    %1011 = vmatprep.subr.mxu0 0.0
    %1012 = vmatpush1.msra.mxu0 0.0
    %1013 = vmatprep.subr.mxu0 0.0
    %1014 = vmatpush1.msra.mxu0 0.0
    %1015 = vmatprep.subr.mxu0 0.0
    %1016 = vmatpush1.msra.mxu0 0.0
    %1017 = vmatprep.subr.mxu0 0.0
    %1018 = vmatpush1.msra.mxu0 0.0
    %1019 = vmatprep.subr.mxu0 0.0
    %1020 = vmatpush1.msra.mxu0 0.0
    %1021 = vmatprep.subr.mxu0 0.0
    %1022 = vmatpush1.msra.mxu0 0.0
    %1023 = vmatprep.subr.mxu0 0.0
    %1024 = vmatpush1.msra.mxu0 0.0
    %1025 = vmatprep.subr.mxu0 0.0
    %1026 = vmatpush1.msra.mxu0 0.0
    %1027 = vmatprep.subr.mxu0 0.0
    %1028 = vmatpush1.msra.mxu0 0.0
    %1029 = vmatprep.subr.mxu0 0.0
    %1030 = vmatpush1.msra.mxu0 0.0
    %1031 = vmatprep.subr.mxu0 0.0
    %1032 = vmatpush1.msra.mxu0 0.0
    %1033 = vmatprep.subr.mxu0 0.0
    %1034 = vmatpush1.msra.mxu0 0.0
    %1035 = vmatprep.subr.mxu0 0.0
    %1036 = vmatpush1.msra.mxu0 0.0
    %1037 = vmatprep.subr.mxu0 0.0
    %1038 = vmatpush1.msra.mxu0 0.0
    %1039 = vmatprep.subr.mxu0 0.0
    %1040 = vmatpush1.msra.mxu0 0.0
    %1041 = vmatprep.subr.mxu0 0.0
    %1042 = vmatpush1.msra.mxu0 0.0
    %1043 = vmatprep.subr.mxu0 0.0
    %1044 = vmatpush1.msra.mxu0 0.0
    %1045 = vmatprep.mubr.f32.mxu0 0.0
    %1046 = vmatmul.mubr.f32.gmra.mrb[0].mxu0 %v979
    %v1047 = vpop.f32.mrb[0].mxu0
    %v1048 = vadd.f32 0.0, %v1047
    %v1049 = vpop.f32.mrb[0].mxu0
    %1050 = vdwg.mxu0
    %v1052 = vrot.slane %v1048, 1
    %v1053 = vrot.slane %v1048, 2
    %v1054 = vrot.slane %v1048, 3
    %v1055 = vrot.slane %v1048, 4
    %v1056 = vrot.slane %v1048, 5
    %v1057 = vrot.slane %v1048, 6
    %v1058 = vrot.slane %v1048, 7
    %v1067 = vadd.f32 %v969, %v1048
    %v1068 = vadd.f32 %v970, %v1052
    %v1069 = vadd.f32 %v971, %v1053
    %v1070 = vadd.f32 %v972, %v1054
    %v1071 = vadd.f32 %v973, %v1055
    %v1072 = vadd.f32 %v974, %v1056
    %v1073 = vadd.f32 %v975, %v1057
    %v1074 = vadd.f32 %v976, %v1058
    %v1075 = vxor.u32 %v1067, 2147483648
    %v1076 = vxor.u32 %v1068, 2147483648
    %v1077 = vxor.u32 %v1069, 2147483648
    %v1078 = vxor.u32 %v1070, 2147483648
    %v1079 = vxor.u32 %v1071, 2147483648
    %v1080 = vxor.u32 %v1072, 2147483648
    %v1081 = vxor.u32 %v1073, 2147483648
    %v1082 = vxor.u32 %v1074, 2147483648
    %v1083 = vmul.f32 %v1075, 1.442695
    %v1084 = vpow.pop %v1083
    %v1085 = vmul.f32 %v1076, 1.442695
    %v1086 = vpow.pop %v1085
    %v1087 = vmul.f32 %v1077, 1.442695
    %v1088 = vpow.pop %v1087
    %v1089 = vmul.f32 %v1078, 1.442695
    %v1090 = vpow.pop %v1089
    %v1091 = vmul.f32 %v1079, 1.442695
    %v1092 = vpow.pop %v1091
    %v1093 = vmul.f32 %v1080, 1.442695
    %v1094 = vpow.pop %v1093
    %v1095 = vmul.f32 %v1081, 1.442695
    %v1096 = vpow.pop %v1095
    %v1097 = vmul.f32 %v1082, 1.442695
    %v1098 = vpow.pop %v1097
    %v1099 = vadd.f32 %v1084, 1.0
    %v1100 = vadd.f32 %v1086, 1.0
    %v1101 = vadd.f32 %v1088, 1.0
    %v1102 = vadd.f32 %v1090, 1.0
    %v1103 = vadd.f32 %v1092, 1.0
    %v1104 = vadd.f32 %v1094, 1.0
    %v1105 = vadd.f32 %v1096, 1.0
    %v1106 = vadd.f32 %v1098, 1.0
    %v1107 = vrcp.pop %v1099
    %v1108 = vmul.f32 1.0, %v1107
    %v1109 = vrcp.pop %v1100
    %v1110 = vmul.f32 1.0, %v1109
    %v1111 = vrcp.pop %v1101
    %v1112 = vmul.f32 1.0, %v1111
    %v1113 = vrcp.pop %v1102
    %v1114 = vmul.f32 1.0, %v1113
    %v1115 = vrcp.pop %v1103
    %v1116 = vmul.f32 1.0, %v1115
    %v1117 = vrcp.pop %v1104
    %v1118 = vmul.f32 1.0, %v1117
    %v1119 = vrcp.pop %v1105
    %v1120 = vmul.f32 1.0, %v1119
    %v1121 = vrcp.pop %v1106
    %v1122 = vmul.f32 1.0, %v1121
    %v1123 = vtanh.pop %v1067
    %v1124 = vtanh.pop %v1068
    %v1125 = vtanh.pop %v1069
    %v1126 = vtanh.pop %v1070
    %v1127 = vtanh.pop %v1071
    %v1128 = vtanh.pop %v1072
    %v1129 = vtanh.pop %v1073
    %v1130 = vtanh.pop %v1074
    %v1131 = vld [vmem:[#allocation3] sm:$0xff]
    %v1133 = vrot.slane %v1131, 1
    %v1134 = vrot.slane %v1131, 2
    %v1135 = vrot.slane %v1131, 3
    %v1136 = vrot.slane %v1131, 4
    %v1137 = vrot.slane %v1131, 5
    %v1138 = vrot.slane %v1131, 6
    %v1139 = vrot.slane %v1131, 7
    %1140 = vrot.lane.b32.xlu0 %v1131, 32
    %v1141 = vpop.permute.xlu0 %1140
    %1142 = vrot.lane.b32.xlu0 %v1133, 32
    %v1143 = vpop.permute.xlu0 %1142
    %1144 = vrot.lane.b32.xlu0 %v1134, 32
    %v1145 = vpop.permute.xlu0 %1144
    %1146 = vrot.lane.b32.xlu0 %v1135, 32
    %v1147 = vpop.permute.xlu0 %1146
    %1148 = vrot.lane.b32.xlu0 %v1136, 32
    %v1149 = vpop.permute.xlu0 %1148
    %1150 = vrot.lane.b32.xlu0 %v1137, 32
    %v1151 = vpop.permute.xlu0 %1150
    %1152 = vrot.lane.b32.xlu0 %v1138, 32
    %v1153 = vpop.permute.xlu0 %1152
    %1154 = vrot.lane.b32.xlu0 %v1139, 32
    %v1155 = vpop.permute.xlu0 %1154
    %v1164 = vmul.f32 %v1108, %v1141
    %v1165 = vmul.f32 %v1110, %v1143
    %v1166 = vmul.f32 %v1112, %v1145
    %v1167 = vmul.f32 %v1114, %v1147
    %v1168 = vmul.f32 %v1116, %v1149
    %v1169 = vmul.f32 %v1118, %v1151
    %v1170 = vmul.f32 %v1120, %v1153
    %v1171 = vmul.f32 %v1122, %v1155
    %1180 = vrot.lane.b32.xlu0 %v1123, 64
    %v1181 = vpop.permute.xlu0 %1180
    %1182 = vrot.lane.b32.xlu0 %v1124, 64
    %v1183 = vpop.permute.xlu0 %1182
    %1184 = vrot.lane.b32.xlu0 %v1125, 64
    %v1185 = vpop.permute.xlu0 %1184
    %1186 = vrot.lane.b32.xlu0 %v1126, 64
    %v1187 = vpop.permute.xlu0 %1186
    %1188 = vrot.lane.b32.xlu0 %v1127, 64
    %v1189 = vpop.permute.xlu0 %1188
    %1190 = vrot.lane.b32.xlu0 %v1128, 64
    %v1191 = vpop.permute.xlu0 %1190
    %1192 = vrot.lane.b32.xlu0 %v1129, 64
    %v1193 = vpop.permute.xlu0 %1192
    %1194 = vrot.lane.b32.xlu0 %v1130, 64
    %v1195 = vpop.permute.xlu0 %1194
    %v1204 = vmul.f32 %v1108, %v1181
    %v1205 = vmul.f32 %v1110, %v1183
    %v1206 = vmul.f32 %v1112, %v1185
    %v1207 = vmul.f32 %v1114, %v1187
    %v1208 = vmul.f32 %v1116, %v1189
    %v1209 = vmul.f32 %v1118, %v1191
    %v1210 = vmul.f32 %v1120, %v1193
    %v1211 = vmul.f32 %v1122, %v1195
    %1220 = vrot.lane.b32.xlu0 %v1204, 32
    %v1221 = vpop.permute.xlu0 %1220
    %1222 = vrot.lane.b32.xlu0 %v1205, 32
    %v1223 = vpop.permute.xlu0 %1222
    %1224 = vrot.lane.b32.xlu0 %v1206, 32
    %v1225 = vpop.permute.xlu0 %1224
    %1226 = vrot.lane.b32.xlu0 %v1207, 32
    %v1227 = vpop.permute.xlu0 %1226
    %1228 = vrot.lane.b32.xlu0 %v1208, 32
    %v1229 = vpop.permute.xlu0 %1228
    %1230 = vrot.lane.b32.xlu0 %v1209, 32
    %v1231 = vpop.permute.xlu0 %1230
    %1232 = vrot.lane.b32.xlu0 %v1210, 32
    %v1233 = vpop.permute.xlu0 %1232
    %1234 = vrot.lane.b32.xlu0 %v1211, 32
    %v1235 = vpop.permute.xlu0 %1234
    %v1244 = vadd.f32 %v1164, %v1221
    %v1245 = vadd.f32 %v1165, %v1223
    %v1246 = vadd.f32 %v1166, %v1225
    %v1247 = vadd.f32 %v1167, %v1227
    %v1248 = vadd.f32 %v1168, %v1229
    %v1249 = vadd.f32 %v1169, %v1231
    %v1250 = vadd.f32 %v1170, %v1233
    %v1251 = vadd.f32 %v1171, %v1235
    %v1252 = vtanh.pop %v1244
    %v1253 = vtanh.pop %v1245
    %v1254 = vtanh.pop %v1246
    %v1255 = vtanh.pop %v1247
    %v1256 = vtanh.pop %v1248
    %v1257 = vtanh.pop %v1249
    %v1258 = vtanh.pop %v1250
    %v1259 = vtanh.pop %v1251
    %1268 = vrot.lane.b32.xlu0 %v1252, 64
    %v1269 = vpop.permute.xlu0 %1268
    %1270 = vrot.lane.b32.xlu0 %v1253, 64
    %v1271 = vpop.permute.xlu0 %1270
    %1272 = vrot.lane.b32.xlu0 %v1254, 64
    %v1273 = vpop.permute.xlu0 %1272
    %1274 = vrot.lane.b32.xlu0 %v1255, 64
    %v1275 = vpop.permute.xlu0 %1274
    %1276 = vrot.lane.b32.xlu0 %v1256, 64
    %v1277 = vpop.permute.xlu0 %1276
    %1278 = vrot.lane.b32.xlu0 %v1257, 64
    %v1279 = vpop.permute.xlu0 %1278
    %1280 = vrot.lane.b32.xlu0 %v1258, 64
    %v1281 = vpop.permute.xlu0 %1280
    %1282 = vrot.lane.b32.xlu0 %v1259, 64
    %v1283 = vpop.permute.xlu0 %1282
    %v1292 = vmul.f32 %v1108, %v1269
    %v1293 = vmul.f32 %v1110, %v1271
    %v1294 = vmul.f32 %v1112, %v1273
    %v1295 = vmul.f32 %v1114, %v1275
    %v1296 = vmul.f32 %v1116, %v1277
    %v1297 = vmul.f32 %v1118, %v1279
    %v1298 = vmul.f32 %v1120, %v1281
    %v1299 = vmul.f32 %v1122, %v1283
    %v1308 = vrot.slane %v1245, 7
    %v1309 = vsel %vm407, %v1308, %v1244
    %v1310 = vrot.slane %v1246, 6
    %v1311 = vsel %vm410, %v1310, %v1309
    %v1312 = vrot.slane %v1247, 5
    %v1313 = vsel %vm413, %v1312, %v1311
    %v1314 = vrot.slane %v1248, 4
    %v1315 = vsel %vm416, %v1314, %v1313
    %v1316 = vrot.slane %v1249, 3
    %v1317 = vsel %vm419, %v1316, %v1315
    %v1318 = vrot.slane %v1250, 2
    %v1319 = vsel %vm422, %v1318, %v1317
    %v1320 = vrot.slane %v1251, 1
    %v1321 = vsel %vm425, %v1320, %v1319
    %1322 = vrot.lane.b32.xlu0 %v1321, 96
    %v1323 = vpop.permute.xlu0 %1322
    %1325 = vst.msk [vmem:[#allocation3] sm:$0xff] %vm75, %v1323
    %v1334 = vrot.slane %v1293, 7
    %v1335 = vsel %vm407, %v1334, %v1292
    %v1336 = vrot.slane %v1294, 6
    %v1337 = vsel %vm410, %v1336, %v1335
    %v1338 = vrot.slane %v1295, 5
    %v1339 = vsel %vm413, %v1338, %v1337
    %v1340 = vrot.slane %v1296, 4
    %v1341 = vsel %vm416, %v1340, %v1339
    %v1342 = vrot.slane %v1297, 3
    %v1343 = vsel %vm419, %v1342, %v1341
    %v1344 = vrot.slane %v1298, 2
    %v1345 = vsel %vm422, %v1344, %v1343
    %v1346 = vrot.slane %v1299, 1
    %v1347 = vsel %vm425, %v1346, %v1345
    %1348 = vrot.lane.b32.xlu0 %v1347, 32
    %v1349 = vpop.permute.xlu0 %1348
    %1351 = vst.msk [vmem:[#allocation2] sm:$0xff] %vm75, %v1349
    %v1352 = vmul.f32 %v1292, %v466
    %v1353 = vmul.f32 %v1293, %v468
    %v1354 = vmul.f32 %v1294, %v470
    %v1355 = vmul.f32 %v1295, %v472
    %v1356 = vmul.f32 %v1296, %v474
    %v1357 = vmul.f32 %v1297, %v476
    %v1358 = vmul.f32 %v1298, %v478
    %v1359 = vmul.f32 %v1299, %v480
    %1368 = vrot.lane.b32.xlu0 %v1352, 32
    %v1369 = vpop.permute.xlu0 %1368
    %1370 = vrot.lane.b32.xlu0 %v1353, 32
    %v1371 = vpop.permute.xlu0 %1370
    %1372 = vrot.lane.b32.xlu0 %v1354, 32
    %v1373 = vpop.permute.xlu0 %1372
    %1374 = vrot.lane.b32.xlu0 %v1355, 32
    %v1375 = vpop.permute.xlu0 %1374
    %1376 = vrot.lane.b32.xlu0 %v1356, 32
    %v1377 = vpop.permute.xlu0 %1376
    %1378 = vrot.lane.b32.xlu0 %v1357, 32
    %v1379 = vpop.permute.xlu0 %1378
    %1380 = vrot.lane.b32.xlu0 %v1358, 32
    %v1381 = vpop.permute.xlu0 %1380
    %1382 = vrot.lane.b32.xlu0 %v1359, 32
    %v1383 = vpop.permute.xlu0 %1382
    %1392 = vst.msk [vmem:[#allocation10 + $0x2] sm:$0x1] %vm529, %v1369
    %1393 = vst.msk [vmem:[#allocation10 + $0xa] sm:$0x1] %vm529, %v1371
    %1394 = vst.msk [vmem:[#allocation10 + $0x12] sm:$0x1] %vm529, %v1373
    %1395 = vst.msk [vmem:[#allocation10 + $0x1a] sm:$0x1] %vm529, %v1375
    %1396 = vst.msk [vmem:[#allocation10 + $0x22] sm:$0x1] %vm529, %v1377
    %1397 = vst.msk [vmem:[#allocation10 + $0x2a] sm:$0x1] %vm529, %v1379
    %1398 = vst.msk [vmem:[#allocation10 + $0x32] sm:$0x1] %vm529, %v1381
    %1399 = vst.msk [vmem:[#allocation10 + $0x3a] sm:$0x1] %vm529, %v1383
    %v1400 = vld [vmem:[#allocation4 + $0x3] sm:$0x1]
    %v1401 = vld [vmem:[#allocation4 + $0xb] sm:$0x1]
    %v1402 = vld [vmem:[#allocation4 + $0x13] sm:$0x1]
    %v1403 = vld [vmem:[#allocation4 + $0x1b] sm:$0x1]
    %v1404 = vld [vmem:[#allocation4 + $0x23] sm:$0x1]
    %v1405 = vld [vmem:[#allocation4 + $0x2b] sm:$0x1]
    %v1406 = vld [vmem:[#allocation4 + $0x33] sm:$0x1]
    %v1407 = vld [vmem:[#allocation4 + $0x3b] sm:$0x1]
    %v1408 = vld [vmem:[#allocation2] sm:$0xff]
    %v1410 = vsel %vm75, %v1408, 0
    %1412 = vmatprep.subr.mxu0 0.0
    %1413 = vmatpush1.msra.mxu0 %v61
    %1414 = vmatprep.subr.mxu0 0.0
    %1415 = vmatpush1.msra.mxu0 %v62
    %1416 = vmatprep.subr.mxu0 0.0
    %1417 = vmatpush1.msra.mxu0 %v63
    %1418 = vmatprep.subr.mxu0 0.0
    %1419 = vmatpush1.msra.mxu0 %v64
    %1420 = vmatprep.subr.mxu0 0.0
    %1421 = vmatpush1.msra.mxu0 0.0
    %1422 = vmatprep.subr.mxu0 0.0
    %1423 = vmatpush1.msra.mxu0 0.0
    %1424 = vmatprep.subr.mxu0 0.0
    %1425 = vmatpush1.msra.mxu0 0.0
    %1426 = vmatprep.subr.mxu0 0.0
    %1427 = vmatpush1.msra.mxu0 0.0
    %1428 = vmatprep.subr.mxu0 0.0
    %1429 = vmatpush1.msra.mxu0 0.0
    %1430 = vmatprep.subr.mxu0 0.0
    %1431 = vmatpush1.msra.mxu0 0.0
    %1432 = vmatprep.subr.mxu0 0.0
    %1433 = vmatpush1.msra.mxu0 0.0
    %1434 = vmatprep.subr.mxu0 0.0
    %1435 = vmatpush1.msra.mxu0 0.0
    %1436 = vmatprep.subr.mxu0 0.0
    %1437 = vmatpush1.msra.mxu0 0.0
    %1438 = vmatprep.subr.mxu0 0.0
    %1439 = vmatpush1.msra.mxu0 0.0
    %1440 = vmatprep.subr.mxu0 0.0
    %1441 = vmatpush1.msra.mxu0 0.0
    %1442 = vmatprep.subr.mxu0 0.0
    %1443 = vmatpush1.msra.mxu0 0.0
    %1444 = vmatprep.subr.mxu0 0.0
    %1445 = vmatpush1.msra.mxu0 0.0
    %1446 = vmatprep.subr.mxu0 0.0
    %1447 = vmatpush1.msra.mxu0 0.0
    %1448 = vmatprep.subr.mxu0 0.0
    %1449 = vmatpush1.msra.mxu0 0.0
    %1450 = vmatprep.subr.mxu0 0.0
    %1451 = vmatpush1.msra.mxu0 0.0
    %1452 = vmatprep.subr.mxu0 0.0
    %1453 = vmatpush1.msra.mxu0 0.0
    %1454 = vmatprep.subr.mxu0 0.0
    %1455 = vmatpush1.msra.mxu0 0.0
    %1456 = vmatprep.subr.mxu0 0.0
    %1457 = vmatpush1.msra.mxu0 0.0
    %1458 = vmatprep.subr.mxu0 0.0
    %1459 = vmatpush1.msra.mxu0 0.0
    %1460 = vmatprep.subr.mxu0 0.0
    %1461 = vmatpush1.msra.mxu0 0.0
    %1462 = vmatprep.subr.mxu0 0.0
    %1463 = vmatpush1.msra.mxu0 0.0
    %1464 = vmatprep.subr.mxu0 0.0
    %1465 = vmatpush1.msra.mxu0 0.0
    %1466 = vmatprep.subr.mxu0 0.0
    %1467 = vmatpush1.msra.mxu0 0.0
    %1468 = vmatprep.subr.mxu0 0.0
    %1469 = vmatpush1.msra.mxu0 0.0
    %1470 = vmatprep.subr.mxu0 0.0
    %1471 = vmatpush1.msra.mxu0 0.0
    %1472 = vmatprep.subr.mxu0 0.0
    %1473 = vmatpush1.msra.mxu0 0.0
    %1474 = vmatprep.subr.mxu0 0.0
    %1475 = vmatpush1.msra.mxu0 0.0
    %1476 = vmatprep.mubr.f32.mxu0 0.0
    %1477 = vmatmul.mubr.f32.gmra.mrb[0].mxu0 %v1410
    %v1478 = vpop.f32.mrb[0].mxu0
    %v1479 = vadd.f32 0.0, %v1478
    %v1480 = vpop.f32.mrb[0].mxu0
    %1481 = vdwg.mxu0
    %v1483 = vrot.slane %v1479, 1
    %v1484 = vrot.slane %v1479, 2
    %v1485 = vrot.slane %v1479, 3
    %v1486 = vrot.slane %v1479, 4
    %v1487 = vrot.slane %v1479, 5
    %v1488 = vrot.slane %v1479, 6
    %v1489 = vrot.slane %v1479, 7
    %v1498 = vadd.f32 %v1400, %v1479
    %v1499 = vadd.f32 %v1401, %v1483
    %v1500 = vadd.f32 %v1402, %v1484
    %v1501 = vadd.f32 %v1403, %v1485
    %v1502 = vadd.f32 %v1404, %v1486
    %v1503 = vadd.f32 %v1405, %v1487
    %v1504 = vadd.f32 %v1406, %v1488
    %v1505 = vadd.f32 %v1407, %v1489
    %v1506 = vxor.u32 %v1498, 2147483648
    %v1507 = vxor.u32 %v1499, 2147483648
    %v1508 = vxor.u32 %v1500, 2147483648
    %v1509 = vxor.u32 %v1501, 2147483648
    %v1510 = vxor.u32 %v1502, 2147483648
    %v1511 = vxor.u32 %v1503, 2147483648
    %v1512 = vxor.u32 %v1504, 2147483648
    %v1513 = vxor.u32 %v1505, 2147483648
    %v1514 = vmul.f32 %v1506, 1.442695
    %v1515 = vpow.pop %v1514
    %v1516 = vmul.f32 %v1507, 1.442695
    %v1517 = vpow.pop %v1516
    %v1518 = vmul.f32 %v1508, 1.442695
    %v1519 = vpow.pop %v1518
    %v1520 = vmul.f32 %v1509, 1.442695
    %v1521 = vpow.pop %v1520
    %v1522 = vmul.f32 %v1510, 1.442695
    %v1523 = vpow.pop %v1522
    %v1524 = vmul.f32 %v1511, 1.442695
    %v1525 = vpow.pop %v1524
    %v1526 = vmul.f32 %v1512, 1.442695
    %v1527 = vpow.pop %v1526
    %v1528 = vmul.f32 %v1513, 1.442695
    %v1529 = vpow.pop %v1528
    %v1530 = vadd.f32 %v1515, 1.0
    %v1531 = vadd.f32 %v1517, 1.0
    %v1532 = vadd.f32 %v1519, 1.0
    %v1533 = vadd.f32 %v1521, 1.0
    %v1534 = vadd.f32 %v1523, 1.0
    %v1535 = vadd.f32 %v1525, 1.0
    %v1536 = vadd.f32 %v1527, 1.0
    %v1537 = vadd.f32 %v1529, 1.0
    %v1538 = vrcp.pop %v1530
    %v1539 = vmul.f32 1.0, %v1538
    %v1540 = vrcp.pop %v1531
    %v1541 = vmul.f32 1.0, %v1540
    %v1542 = vrcp.pop %v1532
    %v1543 = vmul.f32 1.0, %v1542
    %v1544 = vrcp.pop %v1533
    %v1545 = vmul.f32 1.0, %v1544
    %v1546 = vrcp.pop %v1534
    %v1547 = vmul.f32 1.0, %v1546
    %v1548 = vrcp.pop %v1535
    %v1549 = vmul.f32 1.0, %v1548
    %v1550 = vrcp.pop %v1536
    %v1551 = vmul.f32 1.0, %v1550
    %v1552 = vrcp.pop %v1537
    %v1553 = vmul.f32 1.0, %v1552
    %v1554 = vtanh.pop %v1498
    %v1555 = vtanh.pop %v1499
    %v1556 = vtanh.pop %v1500
    %v1557 = vtanh.pop %v1501
    %v1558 = vtanh.pop %v1502
    %v1559 = vtanh.pop %v1503
    %v1560 = vtanh.pop %v1504
    %v1561 = vtanh.pop %v1505
    %v1562 = vld [vmem:[#allocation3] sm:$0xff]
    %v1564 = vrot.slane %v1562, 1
    %v1565 = vrot.slane %v1562, 2
    %v1566 = vrot.slane %v1562, 3
    %v1567 = vrot.slane %v1562, 4
    %v1568 = vrot.slane %v1562, 5
    %v1569 = vrot.slane %v1562, 6
    %v1570 = vrot.slane %v1562, 7
    %1571 = vrot.lane.b32.xlu0 %v1562, 32
    %v1572 = vpop.permute.xlu0 %1571
    %1573 = vrot.lane.b32.xlu0 %v1564, 32
    %v1574 = vpop.permute.xlu0 %1573
    %1575 = vrot.lane.b32.xlu0 %v1565, 32
    %v1576 = vpop.permute.xlu0 %1575
    %1577 = vrot.lane.b32.xlu0 %v1566, 32
    %v1578 = vpop.permute.xlu0 %1577
    %1579 = vrot.lane.b32.xlu0 %v1567, 32
    %v1580 = vpop.permute.xlu0 %1579
    %1581 = vrot.lane.b32.xlu0 %v1568, 32
    %v1582 = vpop.permute.xlu0 %1581
    %1583 = vrot.lane.b32.xlu0 %v1569, 32
    %v1584 = vpop.permute.xlu0 %1583
    %1585 = vrot.lane.b32.xlu0 %v1570, 32
    %v1586 = vpop.permute.xlu0 %1585
    %v1595 = vmul.f32 %v1539, %v1572
    %v1596 = vmul.f32 %v1541, %v1574
    %v1597 = vmul.f32 %v1543, %v1576
    %v1598 = vmul.f32 %v1545, %v1578
    %v1599 = vmul.f32 %v1547, %v1580
    %v1600 = vmul.f32 %v1549, %v1582
    %v1601 = vmul.f32 %v1551, %v1584
    %v1602 = vmul.f32 %v1553, %v1586
    %1611 = vrot.lane.b32.xlu0 %v1554, 64
    %v1612 = vpop.permute.xlu0 %1611
    %1613 = vrot.lane.b32.xlu0 %v1555, 64
    %v1614 = vpop.permute.xlu0 %1613
    %1615 = vrot.lane.b32.xlu0 %v1556, 64
    %v1616 = vpop.permute.xlu0 %1615
    %1617 = vrot.lane.b32.xlu0 %v1557, 64
    %v1618 = vpop.permute.xlu0 %1617
    %1619 = vrot.lane.b32.xlu0 %v1558, 64
    %v1620 = vpop.permute.xlu0 %1619
    %1621 = vrot.lane.b32.xlu0 %v1559, 64
    %v1622 = vpop.permute.xlu0 %1621
    %1623 = vrot.lane.b32.xlu0 %v1560, 64
    %v1624 = vpop.permute.xlu0 %1623
    %1625 = vrot.lane.b32.xlu0 %v1561, 64
    %v1626 = vpop.permute.xlu0 %1625
    %v1635 = vmul.f32 %v1539, %v1612
    %v1636 = vmul.f32 %v1541, %v1614
    %v1637 = vmul.f32 %v1543, %v1616
    %v1638 = vmul.f32 %v1545, %v1618
    %v1639 = vmul.f32 %v1547, %v1620
    %v1640 = vmul.f32 %v1549, %v1622
    %v1641 = vmul.f32 %v1551, %v1624
    %v1642 = vmul.f32 %v1553, %v1626
    %1651 = vrot.lane.b32.xlu0 %v1635, 32
    %v1652 = vpop.permute.xlu0 %1651
    %1653 = vrot.lane.b32.xlu0 %v1636, 32
    %v1654 = vpop.permute.xlu0 %1653
    %1655 = vrot.lane.b32.xlu0 %v1637, 32
    %v1656 = vpop.permute.xlu0 %1655
    %1657 = vrot.lane.b32.xlu0 %v1638, 32
    %v1658 = vpop.permute.xlu0 %1657
    %1659 = vrot.lane.b32.xlu0 %v1639, 32
    %v1660 = vpop.permute.xlu0 %1659
    %1661 = vrot.lane.b32.xlu0 %v1640, 32
    %v1662 = vpop.permute.xlu0 %1661
    %1663 = vrot.lane.b32.xlu0 %v1641, 32
    %v1664 = vpop.permute.xlu0 %1663
    %1665 = vrot.lane.b32.xlu0 %v1642, 32
    %v1666 = vpop.permute.xlu0 %1665
    %v1675 = vadd.f32 %v1595, %v1652
    %v1676 = vadd.f32 %v1596, %v1654
    %v1677 = vadd.f32 %v1597, %v1656
    %v1678 = vadd.f32 %v1598, %v1658
    %v1679 = vadd.f32 %v1599, %v1660
    %v1680 = vadd.f32 %v1600, %v1662
    %v1681 = vadd.f32 %v1601, %v1664
    %v1682 = vadd.f32 %v1602, %v1666
    %v1683 = vtanh.pop %v1675
    %v1684 = vtanh.pop %v1676
    %v1685 = vtanh.pop %v1677
    %v1686 = vtanh.pop %v1678
    %v1687 = vtanh.pop %v1679
    %v1688 = vtanh.pop %v1680
    %v1689 = vtanh.pop %v1681
    %v1690 = vtanh.pop %v1682
    %1699 = vrot.lane.b32.xlu0 %v1683, 64
    %v1700 = vpop.permute.xlu0 %1699
    %1701 = vrot.lane.b32.xlu0 %v1684, 64
    %v1702 = vpop.permute.xlu0 %1701
    %1703 = vrot.lane.b32.xlu0 %v1685, 64
    %v1704 = vpop.permute.xlu0 %1703
    %1705 = vrot.lane.b32.xlu0 %v1686, 64
    %v1706 = vpop.permute.xlu0 %1705
    %1707 = vrot.lane.b32.xlu0 %v1687, 64
    %v1708 = vpop.permute.xlu0 %1707
    %1709 = vrot.lane.b32.xlu0 %v1688, 64
    %v1710 = vpop.permute.xlu0 %1709
    %1711 = vrot.lane.b32.xlu0 %v1689, 64
    %v1712 = vpop.permute.xlu0 %1711
    %1713 = vrot.lane.b32.xlu0 %v1690, 64
    %v1714 = vpop.permute.xlu0 %1713
    %v1723 = vmul.f32 %v1539, %v1700
    %v1724 = vmul.f32 %v1541, %v1702
    %v1725 = vmul.f32 %v1543, %v1704
    %v1726 = vmul.f32 %v1545, %v1706
    %v1727 = vmul.f32 %v1547, %v1708
    %v1728 = vmul.f32 %v1549, %v1710
    %v1729 = vmul.f32 %v1551, %v1712
    %v1730 = vmul.f32 %v1553, %v1714
    %v1739 = vrot.slane %v1676, 7
    %v1740 = vsel %vm407, %v1739, %v1675
    %v1741 = vrot.slane %v1677, 6
    %v1742 = vsel %vm410, %v1741, %v1740
    %v1743 = vrot.slane %v1678, 5
    %v1744 = vsel %vm413, %v1743, %v1742
    %v1745 = vrot.slane %v1679, 4
    %v1746 = vsel %vm416, %v1745, %v1744
    %v1747 = vrot.slane %v1680, 3
    %v1748 = vsel %vm419, %v1747, %v1746
    %v1749 = vrot.slane %v1681, 2
    %v1750 = vsel %vm422, %v1749, %v1748
    %v1751 = vrot.slane %v1682, 1
    %v1752 = vsel %vm425, %v1751, %v1750
    %1753 = vrot.lane.b32.xlu0 %v1752, 96
    %v1754 = vpop.permute.xlu0 %1753
    %1756 = vst.msk [vmem:[#allocation3] sm:$0xff] %vm75, %v1754
    %v1765 = vrot.slane %v1724, 7
    %v1766 = vsel %vm407, %v1765, %v1723
    %v1767 = vrot.slane %v1725, 6
    %v1768 = vsel %vm410, %v1767, %v1766
    %v1769 = vrot.slane %v1726, 5
    %v1770 = vsel %vm413, %v1769, %v1768
    %v1771 = vrot.slane %v1727, 4
    %v1772 = vsel %vm416, %v1771, %v1770
    %v1773 = vrot.slane %v1728, 3
    %v1774 = vsel %vm419, %v1773, %v1772
    %v1775 = vrot.slane %v1729, 2
    %v1776 = vsel %vm422, %v1775, %v1774
    %v1777 = vrot.slane %v1730, 1
    %v1778 = vsel %vm425, %v1777, %v1776
    %1779 = vrot.lane.b32.xlu0 %v1778, 32
    %v1780 = vpop.permute.xlu0 %1779
    %1782 = vst.msk [vmem:[#allocation2] sm:$0xff] %vm75, %v1780
    %v1783 = vmul.f32 %v1723, %v466
    %v1784 = vmul.f32 %v1724, %v468
    %v1785 = vmul.f32 %v1725, %v470
    %v1786 = vmul.f32 %v1726, %v472
    %v1787 = vmul.f32 %v1727, %v474
    %v1788 = vmul.f32 %v1728, %v476
    %v1789 = vmul.f32 %v1729, %v478
    %v1790 = vmul.f32 %v1730, %v480
    %1799 = vrot.lane.b32.xlu0 %v1783, 32
    %v1800 = vpop.permute.xlu0 %1799
    %1801 = vrot.lane.b32.xlu0 %v1784, 32
    %v1802 = vpop.permute.xlu0 %1801
    %1803 = vrot.lane.b32.xlu0 %v1785, 32
    %v1804 = vpop.permute.xlu0 %1803
    %1805 = vrot.lane.b32.xlu0 %v1786, 32
    %v1806 = vpop.permute.xlu0 %1805
    %1807 = vrot.lane.b32.xlu0 %v1787, 32
    %v1808 = vpop.permute.xlu0 %1807
    %1809 = vrot.lane.b32.xlu0 %v1788, 32
    %v1810 = vpop.permute.xlu0 %1809
    %1811 = vrot.lane.b32.xlu0 %v1789, 32
    %v1812 = vpop.permute.xlu0 %1811
    %1813 = vrot.lane.b32.xlu0 %v1790, 32
    %v1814 = vpop.permute.xlu0 %1813
    %1823 = vst.msk [vmem:[#allocation10 + $0x3] sm:$0x1] %vm529, %v1800
    %1824 = vst.msk [vmem:[#allocation10 + $0xb] sm:$0x1] %vm529, %v1802
    %1825 = vst.msk [vmem:[#allocation10 + $0x13] sm:$0x1] %vm529, %v1804
    %1826 = vst.msk [vmem:[#allocation10 + $0x1b] sm:$0x1] %vm529, %v1806
    %1827 = vst.msk [vmem:[#allocation10 + $0x23] sm:$0x1] %vm529, %v1808
    %1828 = vst.msk [vmem:[#allocation10 + $0x2b] sm:$0x1] %vm529, %v1810
    %1829 = vst.msk [vmem:[#allocation10 + $0x33] sm:$0x1] %vm529, %v1812
    %1830 = vst.msk [vmem:[#allocation10 + $0x3b] sm:$0x1] %vm529, %v1814
    %v1831 = vld [vmem:[#allocation4 + $0x4] sm:$0x1]
    %v1832 = vld [vmem:[#allocation4 + $0xc] sm:$0x1]
    %v1833 = vld [vmem:[#allocation4 + $0x14] sm:$0x1]
    %v1834 = vld [vmem:[#allocation4 + $0x1c] sm:$0x1]
    %v1835 = vld [vmem:[#allocation4 + $0x24] sm:$0x1]
    %v1836 = vld [vmem:[#allocation4 + $0x2c] sm:$0x1]
    %v1837 = vld [vmem:[#allocation4 + $0x34] sm:$0x1]
    %v1838 = vld [vmem:[#allocation4 + $0x3c] sm:$0x1]
    %v1839 = vld [vmem:[#allocation2] sm:$0xff]
    %v1841 = vsel %vm75, %v1839, 0
    %1843 = vmatprep.subr.mxu0 0.0
    %1844 = vmatpush1.msra.mxu0 %v61
    %1845 = vmatprep.subr.mxu0 0.0
    %1846 = vmatpush1.msra.mxu0 %v62
    %1847 = vmatprep.subr.mxu0 0.0
    %1848 = vmatpush1.msra.mxu0 %v63
    %1849 = vmatprep.subr.mxu0 0.0
    %1850 = vmatpush1.msra.mxu0 %v64
    %1851 = vmatprep.subr.mxu0 0.0
    %1852 = vmatpush1.msra.mxu0 0.0
    %1853 = vmatprep.subr.mxu0 0.0
    %1854 = vmatpush1.msra.mxu0 0.0
    %1855 = vmatprep.subr.mxu0 0.0
    %1856 = vmatpush1.msra.mxu0 0.0
    %1857 = vmatprep.subr.mxu0 0.0
    %1858 = vmatpush1.msra.mxu0 0.0
    %1859 = vmatprep.subr.mxu0 0.0
    %1860 = vmatpush1.msra.mxu0 0.0
    %1861 = vmatprep.subr.mxu0 0.0
    %1862 = vmatpush1.msra.mxu0 0.0
    %1863 = vmatprep.subr.mxu0 0.0
    %1864 = vmatpush1.msra.mxu0 0.0
    %1865 = vmatprep.subr.mxu0 0.0
    %1866 = vmatpush1.msra.mxu0 0.0
    %1867 = vmatprep.subr.mxu0 0.0
    %1868 = vmatpush1.msra.mxu0 0.0
    %1869 = vmatprep.subr.mxu0 0.0
    %1870 = vmatpush1.msra.mxu0 0.0
    %1871 = vmatprep.subr.mxu0 0.0
    %1872 = vmatpush1.msra.mxu0 0.0
    %1873 = vmatprep.subr.mxu0 0.0
    %1874 = vmatpush1.msra.mxu0 0.0
    %1875 = vmatprep.subr.mxu0 0.0
    %1876 = vmatpush1.msra.mxu0 0.0
    %1877 = vmatprep.subr.mxu0 0.0
    %1878 = vmatpush1.msra.mxu0 0.0
    %1879 = vmatprep.subr.mxu0 0.0
    %1880 = vmatpush1.msra.mxu0 0.0
    %1881 = vmatprep.subr.mxu0 0.0
    %1882 = vmatpush1.msra.mxu0 0.0
    %1883 = vmatprep.subr.mxu0 0.0
    %1884 = vmatpush1.msra.mxu0 0.0
    %1885 = vmatprep.subr.mxu0 0.0
    %1886 = vmatpush1.msra.mxu0 0.0
    %1887 = vmatprep.subr.mxu0 0.0
    %1888 = vmatpush1.msra.mxu0 0.0
    %1889 = vmatprep.subr.mxu0 0.0
    %1890 = vmatpush1.msra.mxu0 0.0
    %1891 = vmatprep.subr.mxu0 0.0
    %1892 = vmatpush1.msra.mxu0 0.0
    %1893 = vmatprep.subr.mxu0 0.0
    %1894 = vmatpush1.msra.mxu0 0.0
    %1895 = vmatprep.subr.mxu0 0.0
    %1896 = vmatpush1.msra.mxu0 0.0
    %1897 = vmatprep.subr.mxu0 0.0
    %1898 = vmatpush1.msra.mxu0 0.0
    %1899 = vmatprep.subr.mxu0 0.0
    %1900 = vmatpush1.msra.mxu0 0.0
    %1901 = vmatprep.subr.mxu0 0.0
    %1902 = vmatpush1.msra.mxu0 0.0
    %1903 = vmatprep.subr.mxu0 0.0
    %1904 = vmatpush1.msra.mxu0 0.0
    %1905 = vmatprep.subr.mxu0 0.0
    %1906 = vmatpush1.msra.mxu0 0.0
    %1907 = vmatprep.mubr.f32.mxu0 0.0
    %1908 = vmatmul.mubr.f32.gmra.mrb[0].mxu0 %v1841
    %v1909 = vpop.f32.mrb[0].mxu0
    %v1910 = vadd.f32 0.0, %v1909
    %v1911 = vpop.f32.mrb[0].mxu0
    %1912 = vdwg.mxu0
    %v1914 = vrot.slane %v1910, 1
    %v1915 = vrot.slane %v1910, 2
    %v1916 = vrot.slane %v1910, 3
    %v1917 = vrot.slane %v1910, 4
    %v1918 = vrot.slane %v1910, 5
    %v1919 = vrot.slane %v1910, 6
    %v1920 = vrot.slane %v1910, 7
    %v1929 = vadd.f32 %v1831, %v1910
    %v1930 = vadd.f32 %v1832, %v1914
    %v1931 = vadd.f32 %v1833, %v1915
    %v1932 = vadd.f32 %v1834, %v1916
    %v1933 = vadd.f32 %v1835, %v1917
    %v1934 = vadd.f32 %v1836, %v1918
    %v1935 = vadd.f32 %v1837, %v1919
    %v1936 = vadd.f32 %v1838, %v1920
    %v1937 = vxor.u32 %v1929, 2147483648
    %v1938 = vxor.u32 %v1930, 2147483648
    %v1939 = vxor.u32 %v1931, 2147483648
    %v1940 = vxor.u32 %v1932, 2147483648
    %v1941 = vxor.u32 %v1933, 2147483648
    %v1942 = vxor.u32 %v1934, 2147483648
    %v1943 = vxor.u32 %v1935, 2147483648
    %v1944 = vxor.u32 %v1936, 2147483648
    %v1945 = vmul.f32 %v1937, 1.442695
    %v1946 = vpow.pop %v1945
    %v1947 = vmul.f32 %v1938, 1.442695
    %v1948 = vpow.pop %v1947
    %v1949 = vmul.f32 %v1939, 1.442695
    %v1950 = vpow.pop %v1949
    %v1951 = vmul.f32 %v1940, 1.442695
    %v1952 = vpow.pop %v1951
    %v1953 = vmul.f32 %v1941, 1.442695
    %v1954 = vpow.pop %v1953
    %v1955 = vmul.f32 %v1942, 1.442695
    %v1956 = vpow.pop %v1955
    %v1957 = vmul.f32 %v1943, 1.442695
    %v1958 = vpow.pop %v1957
    %v1959 = vmul.f32 %v1944, 1.442695
    %v1960 = vpow.pop %v1959
    %v1961 = vadd.f32 %v1946, 1.0
    %v1962 = vadd.f32 %v1948, 1.0
    %v1963 = vadd.f32 %v1950, 1.0
    %v1964 = vadd.f32 %v1952, 1.0
    %v1965 = vadd.f32 %v1954, 1.0
    %v1966 = vadd.f32 %v1956, 1.0
    %v1967 = vadd.f32 %v1958, 1.0
    %v1968 = vadd.f32 %v1960, 1.0
    %v1969 = vrcp.pop %v1961
    %v1970 = vmul.f32 1.0, %v1969
    %v1971 = vrcp.pop %v1962
    %v1972 = vmul.f32 1.0, %v1971
    %v1973 = vrcp.pop %v1963
    %v1974 = vmul.f32 1.0, %v1973
    %v1975 = vrcp.pop %v1964
    %v1976 = vmul.f32 1.0, %v1975
    %v1977 = vrcp.pop %v1965
    %v1978 = vmul.f32 1.0, %v1977
    %v1979 = vrcp.pop %v1966
    %v1980 = vmul.f32 1.0, %v1979
    %v1981 = vrcp.pop %v1967
    %v1982 = vmul.f32 1.0, %v1981
    %v1983 = vrcp.pop %v1968
    %v1984 = vmul.f32 1.0, %v1983
    %v1985 = vtanh.pop %v1929
    %v1986 = vtanh.pop %v1930
    %v1987 = vtanh.pop %v1931
    %v1988 = vtanh.pop %v1932
    %v1989 = vtanh.pop %v1933
    %v1990 = vtanh.pop %v1934
    %v1991 = vtanh.pop %v1935
    %v1992 = vtanh.pop %v1936
    %v1993 = vld [vmem:[#allocation3] sm:$0xff]
    %v1995 = vrot.slane %v1993, 1
    %v1996 = vrot.slane %v1993, 2
    %v1997 = vrot.slane %v1993, 3
    %v1998 = vrot.slane %v1993, 4
    %v1999 = vrot.slane %v1993, 5
    %v2000 = vrot.slane %v1993, 6
    %v2001 = vrot.slane %v1993, 7
    %2002 = vrot.lane.b32.xlu0 %v1993, 32
    %v2003 = vpop.permute.xlu0 %2002
    %2004 = vrot.lane.b32.xlu0 %v1995, 32
    %v2005 = vpop.permute.xlu0 %2004
    %2006 = vrot.lane.b32.xlu0 %v1996, 32
    %v2007 = vpop.permute.xlu0 %2006
    %2008 = vrot.lane.b32.xlu0 %v1997, 32
    %v2009 = vpop.permute.xlu0 %2008
    %2010 = vrot.lane.b32.xlu0 %v1998, 32
    %v2011 = vpop.permute.xlu0 %2010
    %2012 = vrot.lane.b32.xlu0 %v1999, 32
    %v2013 = vpop.permute.xlu0 %2012
    %2014 = vrot.lane.b32.xlu0 %v2000, 32
    %v2015 = vpop.permute.xlu0 %2014
    %2016 = vrot.lane.b32.xlu0 %v2001, 32
    %v2017 = vpop.permute.xlu0 %2016
    %v2026 = vmul.f32 %v1970, %v2003
    %v2027 = vmul.f32 %v1972, %v2005
    %v2028 = vmul.f32 %v1974, %v2007
    %v2029 = vmul.f32 %v1976, %v2009
    %v2030 = vmul.f32 %v1978, %v2011
    %v2031 = vmul.f32 %v1980, %v2013
    %v2032 = vmul.f32 %v1982, %v2015
    %v2033 = vmul.f32 %v1984, %v2017
    %2042 = vrot.lane.b32.xlu0 %v1985, 64
    %v2043 = vpop.permute.xlu0 %2042
    %2044 = vrot.lane.b32.xlu0 %v1986, 64
    %v2045 = vpop.permute.xlu0 %2044
    %2046 = vrot.lane.b32.xlu0 %v1987, 64
    %v2047 = vpop.permute.xlu0 %2046
    %2048 = vrot.lane.b32.xlu0 %v1988, 64
    %v2049 = vpop.permute.xlu0 %2048
    %2050 = vrot.lane.b32.xlu0 %v1989, 64
    %v2051 = vpop.permute.xlu0 %2050
    %2052 = vrot.lane.b32.xlu0 %v1990, 64
    %v2053 = vpop.permute.xlu0 %2052
    %2054 = vrot.lane.b32.xlu0 %v1991, 64
    %v2055 = vpop.permute.xlu0 %2054
    %2056 = vrot.lane.b32.xlu0 %v1992, 64
    %v2057 = vpop.permute.xlu0 %2056
    %v2066 = vmul.f32 %v1970, %v2043
    %v2067 = vmul.f32 %v1972, %v2045
    %v2068 = vmul.f32 %v1974, %v2047
    %v2069 = vmul.f32 %v1976, %v2049
    %v2070 = vmul.f32 %v1978, %v2051
    %v2071 = vmul.f32 %v1980, %v2053
    %v2072 = vmul.f32 %v1982, %v2055
    %v2073 = vmul.f32 %v1984, %v2057
    %2082 = vrot.lane.b32.xlu0 %v2066, 32
    %v2083 = vpop.permute.xlu0 %2082
    %2084 = vrot.lane.b32.xlu0 %v2067, 32
    %v2085 = vpop.permute.xlu0 %2084
    %2086 = vrot.lane.b32.xlu0 %v2068, 32
    %v2087 = vpop.permute.xlu0 %2086
    %2088 = vrot.lane.b32.xlu0 %v2069, 32
    %v2089 = vpop.permute.xlu0 %2088
    %2090 = vrot.lane.b32.xlu0 %v2070, 32
    %v2091 = vpop.permute.xlu0 %2090
    %2092 = vrot.lane.b32.xlu0 %v2071, 32
    %v2093 = vpop.permute.xlu0 %2092
    %2094 = vrot.lane.b32.xlu0 %v2072, 32
    %v2095 = vpop.permute.xlu0 %2094
    %2096 = vrot.lane.b32.xlu0 %v2073, 32
    %v2097 = vpop.permute.xlu0 %2096
    %v2106 = vadd.f32 %v2026, %v2083
    %v2107 = vadd.f32 %v2027, %v2085
    %v2108 = vadd.f32 %v2028, %v2087
    %v2109 = vadd.f32 %v2029, %v2089
    %v2110 = vadd.f32 %v2030, %v2091
    %v2111 = vadd.f32 %v2031, %v2093
    %v2112 = vadd.f32 %v2032, %v2095
    %v2113 = vadd.f32 %v2033, %v2097
    %v2114 = vtanh.pop %v2106
    %v2115 = vtanh.pop %v2107
    %v2116 = vtanh.pop %v2108
    %v2117 = vtanh.pop %v2109
    %v2118 = vtanh.pop %v2110
    %v2119 = vtanh.pop %v2111
    %v2120 = vtanh.pop %v2112
    %v2121 = vtanh.pop %v2113
    %2130 = vrot.lane.b32.xlu0 %v2114, 64
    %v2131 = vpop.permute.xlu0 %2130
    %2132 = vrot.lane.b32.xlu0 %v2115, 64
    %v2133 = vpop.permute.xlu0 %2132
    %2134 = vrot.lane.b32.xlu0 %v2116, 64
    %v2135 = vpop.permute.xlu0 %2134
    %2136 = vrot.lane.b32.xlu0 %v2117, 64
    %v2137 = vpop.permute.xlu0 %2136
    %2138 = vrot.lane.b32.xlu0 %v2118, 64
    %v2139 = vpop.permute.xlu0 %2138
    %2140 = vrot.lane.b32.xlu0 %v2119, 64
    %v2141 = vpop.permute.xlu0 %2140
    %2142 = vrot.lane.b32.xlu0 %v2120, 64
    %v2143 = vpop.permute.xlu0 %2142
    %2144 = vrot.lane.b32.xlu0 %v2121, 64
    %v2145 = vpop.permute.xlu0 %2144
    %v2154 = vmul.f32 %v1970, %v2131
    %v2155 = vmul.f32 %v1972, %v2133
    %v2156 = vmul.f32 %v1974, %v2135
    %v2157 = vmul.f32 %v1976, %v2137
    %v2158 = vmul.f32 %v1978, %v2139
    %v2159 = vmul.f32 %v1980, %v2141
    %v2160 = vmul.f32 %v1982, %v2143
    %v2161 = vmul.f32 %v1984, %v2145
    %v2170 = vrot.slane %v2107, 7
    %v2171 = vsel %vm407, %v2170, %v2106
    %v2172 = vrot.slane %v2108, 6
    %v2173 = vsel %vm410, %v2172, %v2171
    %v2174 = vrot.slane %v2109, 5
    %v2175 = vsel %vm413, %v2174, %v2173
    %v2176 = vrot.slane %v2110, 4
    %v2177 = vsel %vm416, %v2176, %v2175
    %v2178 = vrot.slane %v2111, 3
    %v2179 = vsel %vm419, %v2178, %v2177
    %v2180 = vrot.slane %v2112, 2
    %v2181 = vsel %vm422, %v2180, %v2179
    %v2182 = vrot.slane %v2113, 1
    %v2183 = vsel %vm425, %v2182, %v2181
    %2184 = vrot.lane.b32.xlu0 %v2183, 96
    %v2185 = vpop.permute.xlu0 %2184
    %2187 = vst.msk [vmem:[#allocation3] sm:$0xff] %vm75, %v2185
    %v2196 = vrot.slane %v2155, 7
    %v2197 = vsel %vm407, %v2196, %v2154
    %v2198 = vrot.slane %v2156, 6
    %v2199 = vsel %vm410, %v2198, %v2197
    %v2200 = vrot.slane %v2157, 5
    %v2201 = vsel %vm413, %v2200, %v2199
    %v2202 = vrot.slane %v2158, 4
    %v2203 = vsel %vm416, %v2202, %v2201
    %v2204 = vrot.slane %v2159, 3
    %v2205 = vsel %vm419, %v2204, %v2203
    %v2206 = vrot.slane %v2160, 2
    %v2207 = vsel %vm422, %v2206, %v2205
    %v2208 = vrot.slane %v2161, 1
    %v2209 = vsel %vm425, %v2208, %v2207
    %2210 = vrot.lane.b32.xlu0 %v2209, 32
    %v2211 = vpop.permute.xlu0 %2210
    %2213 = vst.msk [vmem:[#allocation2] sm:$0xff] %vm75, %v2211
    %v2214 = vmul.f32 %v2154, %v466
    %v2215 = vmul.f32 %v2155, %v468
    %v2216 = vmul.f32 %v2156, %v470
    %v2217 = vmul.f32 %v2157, %v472
    %v2218 = vmul.f32 %v2158, %v474
    %v2219 = vmul.f32 %v2159, %v476
    %v2220 = vmul.f32 %v2160, %v478
    %v2221 = vmul.f32 %v2161, %v480
    %2230 = vrot.lane.b32.xlu0 %v2214, 32
    %v2231 = vpop.permute.xlu0 %2230
    %2232 = vrot.lane.b32.xlu0 %v2215, 32
    %v2233 = vpop.permute.xlu0 %2232
    %2234 = vrot.lane.b32.xlu0 %v2216, 32
    %v2235 = vpop.permute.xlu0 %2234
    %2236 = vrot.lane.b32.xlu0 %v2217, 32
    %v2237 = vpop.permute.xlu0 %2236
    %2238 = vrot.lane.b32.xlu0 %v2218, 32
    %v2239 = vpop.permute.xlu0 %2238
    %2240 = vrot.lane.b32.xlu0 %v2219, 32
    %v2241 = vpop.permute.xlu0 %2240
    %2242 = vrot.lane.b32.xlu0 %v2220, 32
    %v2243 = vpop.permute.xlu0 %2242
    %2244 = vrot.lane.b32.xlu0 %v2221, 32
    %v2245 = vpop.permute.xlu0 %2244
    %2254 = vst.msk [vmem:[#allocation10 + $0x4] sm:$0x1] %vm529, %v2231
    %2255 = vst.msk [vmem:[#allocation10 + $0xc] sm:$0x1] %vm529, %v2233
    %2256 = vst.msk [vmem:[#allocation10 + $0x14] sm:$0x1] %vm529, %v2235
    %2257 = vst.msk [vmem:[#allocation10 + $0x1c] sm:$0x1] %vm529, %v2237
    %2258 = vst.msk [vmem:[#allocation10 + $0x24] sm:$0x1] %vm529, %v2239
    %2259 = vst.msk [vmem:[#allocation10 + $0x2c] sm:$0x1] %vm529, %v2241
    %2260 = vst.msk [vmem:[#allocation10 + $0x34] sm:$0x1] %vm529, %v2243
    %2261 = vst.msk [vmem:[#allocation10 + $0x3c] sm:$0x1] %vm529, %v2245
    %v2262 = vld [vmem:[#allocation4 + $0x5] sm:$0x1]
    %v2263 = vld [vmem:[#allocation4 + $0xd] sm:$0x1]
    %v2264 = vld [vmem:[#allocation4 + $0x15] sm:$0x1]
    %v2265 = vld [vmem:[#allocation4 + $0x1d] sm:$0x1]
    %v2266 = vld [vmem:[#allocation4 + $0x25] sm:$0x1]
    %v2267 = vld [vmem:[#allocation4 + $0x2d] sm:$0x1]
    %v2268 = vld [vmem:[#allocation4 + $0x35] sm:$0x1]
    %v2269 = vld [vmem:[#allocation4 + $0x3d] sm:$0x1]
    %v2270 = vld [vmem:[#allocation2] sm:$0xff]
    %v2272 = vsel %vm75, %v2270, 0
    %2274 = vmatprep.subr.mxu0 0.0
    %2275 = vmatpush1.msra.mxu0 %v61
    %2276 = vmatprep.subr.mxu0 0.0
    %2277 = vmatpush1.msra.mxu0 %v62
    %2278 = vmatprep.subr.mxu0 0.0
    %2279 = vmatpush1.msra.mxu0 %v63
    %2280 = vmatprep.subr.mxu0 0.0
    %2281 = vmatpush1.msra.mxu0 %v64
    %2282 = vmatprep.subr.mxu0 0.0
    %2283 = vmatpush1.msra.mxu0 0.0
    %2284 = vmatprep.subr.mxu0 0.0
    %2285 = vmatpush1.msra.mxu0 0.0
    %2286 = vmatprep.subr.mxu0 0.0
    %2287 = vmatpush1.msra.mxu0 0.0
    %2288 = vmatprep.subr.mxu0 0.0
    %2289 = vmatpush1.msra.mxu0 0.0
    %2290 = vmatprep.subr.mxu0 0.0
    %2291 = vmatpush1.msra.mxu0 0.0
    %2292 = vmatprep.subr.mxu0 0.0
    %2293 = vmatpush1.msra.mxu0 0.0
    %2294 = vmatprep.subr.mxu0 0.0
    %2295 = vmatpush1.msra.mxu0 0.0
    %2296 = vmatprep.subr.mxu0 0.0
    %2297 = vmatpush1.msra.mxu0 0.0
    %2298 = vmatprep.subr.mxu0 0.0
    %2299 = vmatpush1.msra.mxu0 0.0
    %2300 = vmatprep.subr.mxu0 0.0
    %2301 = vmatpush1.msra.mxu0 0.0
    %2302 = vmatprep.subr.mxu0 0.0
    %2303 = vmatpush1.msra.mxu0 0.0
    %2304 = vmatprep.subr.mxu0 0.0
    %2305 = vmatpush1.msra.mxu0 0.0
    %2306 = vmatprep.subr.mxu0 0.0
    %2307 = vmatpush1.msra.mxu0 0.0
    %2308 = vmatprep.subr.mxu0 0.0
    %2309 = vmatpush1.msra.mxu0 0.0
    %2310 = vmatprep.subr.mxu0 0.0
    %2311 = vmatpush1.msra.mxu0 0.0
    %2312 = vmatprep.subr.mxu0 0.0
    %2313 = vmatpush1.msra.mxu0 0.0
    %2314 = vmatprep.subr.mxu0 0.0
    %2315 = vmatpush1.msra.mxu0 0.0
    %2316 = vmatprep.subr.mxu0 0.0
    %2317 = vmatpush1.msra.mxu0 0.0
    %2318 = vmatprep.subr.mxu0 0.0
    %2319 = vmatpush1.msra.mxu0 0.0
    %2320 = vmatprep.subr.mxu0 0.0
    %2321 = vmatpush1.msra.mxu0 0.0
    %2322 = vmatprep.subr.mxu0 0.0
    %2323 = vmatpush1.msra.mxu0 0.0
    %2324 = vmatprep.subr.mxu0 0.0
    %2325 = vmatpush1.msra.mxu0 0.0
    %2326 = vmatprep.subr.mxu0 0.0
    %2327 = vmatpush1.msra.mxu0 0.0
    %2328 = vmatprep.subr.mxu0 0.0
    %2329 = vmatpush1.msra.mxu0 0.0
    %2330 = vmatprep.subr.mxu0 0.0
    %2331 = vmatpush1.msra.mxu0 0.0
    %2332 = vmatprep.subr.mxu0 0.0
    %2333 = vmatpush1.msra.mxu0 0.0
    %2334 = vmatprep.subr.mxu0 0.0
    %2335 = vmatpush1.msra.mxu0 0.0
    %2336 = vmatprep.subr.mxu0 0.0
    %2337 = vmatpush1.msra.mxu0 0.0
    %2338 = vmatprep.mubr.f32.mxu0 0.0
    %2339 = vmatmul.mubr.f32.gmra.mrb[0].mxu0 %v2272
    %v2340 = vpop.f32.mrb[0].mxu0
    %v2341 = vadd.f32 0.0, %v2340
    %v2342 = vpop.f32.mrb[0].mxu0
    %2343 = vdwg.mxu0
    %v2345 = vrot.slane %v2341, 1
    %v2346 = vrot.slane %v2341, 2
    %v2347 = vrot.slane %v2341, 3
    %v2348 = vrot.slane %v2341, 4
    %v2349 = vrot.slane %v2341, 5
    %v2350 = vrot.slane %v2341, 6
    %v2351 = vrot.slane %v2341, 7
    %v2360 = vadd.f32 %v2262, %v2341
    %v2361 = vadd.f32 %v2263, %v2345
    %v2362 = vadd.f32 %v2264, %v2346
    %v2363 = vadd.f32 %v2265, %v2347
    %v2364 = vadd.f32 %v2266, %v2348
    %v2365 = vadd.f32 %v2267, %v2349
    %v2366 = vadd.f32 %v2268, %v2350
    %v2367 = vadd.f32 %v2269, %v2351
    %v2368 = vxor.u32 %v2360, 2147483648
    %v2369 = vxor.u32 %v2361, 2147483648
    %v2370 = vxor.u32 %v2362, 2147483648
    %v2371 = vxor.u32 %v2363, 2147483648
    %v2372 = vxor.u32 %v2364, 2147483648
    %v2373 = vxor.u32 %v2365, 2147483648
    %v2374 = vxor.u32 %v2366, 2147483648
    %v2375 = vxor.u32 %v2367, 2147483648
    %v2376 = vmul.f32 %v2368, 1.442695
    %v2377 = vpow.pop %v2376
    %v2378 = vmul.f32 %v2369, 1.442695
    %v2379 = vpow.pop %v2378
    %v2380 = vmul.f32 %v2370, 1.442695
    %v2381 = vpow.pop %v2380
    %v2382 = vmul.f32 %v2371, 1.442695
    %v2383 = vpow.pop %v2382
    %v2384 = vmul.f32 %v2372, 1.442695
    %v2385 = vpow.pop %v2384
    %v2386 = vmul.f32 %v2373, 1.442695
    %v2387 = vpow.pop %v2386
    %v2388 = vmul.f32 %v2374, 1.442695
    %v2389 = vpow.pop %v2388
    %v2390 = vmul.f32 %v2375, 1.442695
    %v2391 = vpow.pop %v2390
    %v2392 = vadd.f32 %v2377, 1.0
    %v2393 = vadd.f32 %v2379, 1.0
    %v2394 = vadd.f32 %v2381, 1.0
    %v2395 = vadd.f32 %v2383, 1.0
    %v2396 = vadd.f32 %v2385, 1.0
    %v2397 = vadd.f32 %v2387, 1.0
    %v2398 = vadd.f32 %v2389, 1.0
    %v2399 = vadd.f32 %v2391, 1.0
    %v2400 = vrcp.pop %v2392
    %v2401 = vmul.f32 1.0, %v2400
    %v2402 = vrcp.pop %v2393
    %v2403 = vmul.f32 1.0, %v2402
    %v2404 = vrcp.pop %v2394
    %v2405 = vmul.f32 1.0, %v2404
    %v2406 = vrcp.pop %v2395
    %v2407 = vmul.f32 1.0, %v2406
    %v2408 = vrcp.pop %v2396
    %v2409 = vmul.f32 1.0, %v2408
    %v2410 = vrcp.pop %v2397
    %v2411 = vmul.f32 1.0, %v2410
    %v2412 = vrcp.pop %v2398
    %v2413 = vmul.f32 1.0, %v2412
    %v2414 = vrcp.pop %v2399
    %v2415 = vmul.f32 1.0, %v2414
    %v2416 = vtanh.pop %v2360
    %v2417 = vtanh.pop %v2361
    %v2418 = vtanh.pop %v2362
    %v2419 = vtanh.pop %v2363
    %v2420 = vtanh.pop %v2364
    %v2421 = vtanh.pop %v2365
    %v2422 = vtanh.pop %v2366
    %v2423 = vtanh.pop %v2367
    %v2424 = vld [vmem:[#allocation3] sm:$0xff]
    %v2426 = vrot.slane %v2424, 1
    %v2427 = vrot.slane %v2424, 2
    %v2428 = vrot.slane %v2424, 3
    %v2429 = vrot.slane %v2424, 4
    %v2430 = vrot.slane %v2424, 5
    %v2431 = vrot.slane %v2424, 6
    %v2432 = vrot.slane %v2424, 7
    %2433 = vrot.lane.b32.xlu0 %v2424, 32
    %v2434 = vpop.permute.xlu0 %2433
    %2435 = vrot.lane.b32.xlu0 %v2426, 32
    %v2436 = vpop.permute.xlu0 %2435
    %2437 = vrot.lane.b32.xlu0 %v2427, 32
    %v2438 = vpop.permute.xlu0 %2437
    %2439 = vrot.lane.b32.xlu0 %v2428, 32
    %v2440 = vpop.permute.xlu0 %2439
    %2441 = vrot.lane.b32.xlu0 %v2429, 32
    %v2442 = vpop.permute.xlu0 %2441
    %2443 = vrot.lane.b32.xlu0 %v2430, 32
    %v2444 = vpop.permute.xlu0 %2443
    %2445 = vrot.lane.b32.xlu0 %v2431, 32
    %v2446 = vpop.permute.xlu0 %2445
    %2447 = vrot.lane.b32.xlu0 %v2432, 32
    %v2448 = vpop.permute.xlu0 %2447
    %v2457 = vmul.f32 %v2401, %v2434
    %v2458 = vmul.f32 %v2403, %v2436
    %v2459 = vmul.f32 %v2405, %v2438
    %v2460 = vmul.f32 %v2407, %v2440
    %v2461 = vmul.f32 %v2409, %v2442
    %v2462 = vmul.f32 %v2411, %v2444
    %v2463 = vmul.f32 %v2413, %v2446
    %v2464 = vmul.f32 %v2415, %v2448
    %2473 = vrot.lane.b32.xlu0 %v2416, 64
    %v2474 = vpop.permute.xlu0 %2473
    %2475 = vrot.lane.b32.xlu0 %v2417, 64
    %v2476 = vpop.permute.xlu0 %2475
    %2477 = vrot.lane.b32.xlu0 %v2418, 64
    %v2478 = vpop.permute.xlu0 %2477
    %2479 = vrot.lane.b32.xlu0 %v2419, 64
    %v2480 = vpop.permute.xlu0 %2479
    %2481 = vrot.lane.b32.xlu0 %v2420, 64
    %v2482 = vpop.permute.xlu0 %2481
    %2483 = vrot.lane.b32.xlu0 %v2421, 64
    %v2484 = vpop.permute.xlu0 %2483
    %2485 = vrot.lane.b32.xlu0 %v2422, 64
    %v2486 = vpop.permute.xlu0 %2485
    %2487 = vrot.lane.b32.xlu0 %v2423, 64
    %v2488 = vpop.permute.xlu0 %2487
    %v2497 = vmul.f32 %v2401, %v2474
    %v2498 = vmul.f32 %v2403, %v2476
    %v2499 = vmul.f32 %v2405, %v2478
    %v2500 = vmul.f32 %v2407, %v2480
    %v2501 = vmul.f32 %v2409, %v2482
    %v2502 = vmul.f32 %v2411, %v2484
    %v2503 = vmul.f32 %v2413, %v2486
    %v2504 = vmul.f32 %v2415, %v2488
    %2513 = vrot.lane.b32.xlu0 %v2497, 32
    %v2514 = vpop.permute.xlu0 %2513
    %2515 = vrot.lane.b32.xlu0 %v2498, 32
    %v2516 = vpop.permute.xlu0 %2515
    %2517 = vrot.lane.b32.xlu0 %v2499, 32
    %v2518 = vpop.permute.xlu0 %2517
    %2519 = vrot.lane.b32.xlu0 %v2500, 32
    %v2520 = vpop.permute.xlu0 %2519
    %2521 = vrot.lane.b32.xlu0 %v2501, 32
    %v2522 = vpop.permute.xlu0 %2521
    %2523 = vrot.lane.b32.xlu0 %v2502, 32
    %v2524 = vpop.permute.xlu0 %2523
    %2525 = vrot.lane.b32.xlu0 %v2503, 32
    %v2526 = vpop.permute.xlu0 %2525
    %2527 = vrot.lane.b32.xlu0 %v2504, 32
    %v2528 = vpop.permute.xlu0 %2527
    %v2537 = vadd.f32 %v2457, %v2514
    %v2538 = vadd.f32 %v2458, %v2516
    %v2539 = vadd.f32 %v2459, %v2518
    %v2540 = vadd.f32 %v2460, %v2520
    %v2541 = vadd.f32 %v2461, %v2522
    %v2542 = vadd.f32 %v2462, %v2524
    %v2543 = vadd.f32 %v2463, %v2526
    %v2544 = vadd.f32 %v2464, %v2528
    %v2545 = vtanh.pop %v2537
    %v2546 = vtanh.pop %v2538
    %v2547 = vtanh.pop %v2539
    %v2548 = vtanh.pop %v2540
    %v2549 = vtanh.pop %v2541
    %v2550 = vtanh.pop %v2542
    %v2551 = vtanh.pop %v2543
    %v2552 = vtanh.pop %v2544
    %2561 = vrot.lane.b32.xlu0 %v2545, 64
    %v2562 = vpop.permute.xlu0 %2561
    %2563 = vrot.lane.b32.xlu0 %v2546, 64
    %v2564 = vpop.permute.xlu0 %2563
    %2565 = vrot.lane.b32.xlu0 %v2547, 64
    %v2566 = vpop.permute.xlu0 %2565
    %2567 = vrot.lane.b32.xlu0 %v2548, 64
    %v2568 = vpop.permute.xlu0 %2567
    %2569 = vrot.lane.b32.xlu0 %v2549, 64
    %v2570 = vpop.permute.xlu0 %2569
    %2571 = vrot.lane.b32.xlu0 %v2550, 64
    %v2572 = vpop.permute.xlu0 %2571
    %2573 = vrot.lane.b32.xlu0 %v2551, 64
    %v2574 = vpop.permute.xlu0 %2573
    %2575 = vrot.lane.b32.xlu0 %v2552, 64
    %v2576 = vpop.permute.xlu0 %2575
    %v2585 = vmul.f32 %v2401, %v2562
    %v2586 = vmul.f32 %v2403, %v2564
    %v2587 = vmul.f32 %v2405, %v2566
    %v2588 = vmul.f32 %v2407, %v2568
    %v2589 = vmul.f32 %v2409, %v2570
    %v2590 = vmul.f32 %v2411, %v2572
    %v2591 = vmul.f32 %v2413, %v2574
    %v2592 = vmul.f32 %v2415, %v2576
    %v2601 = vrot.slane %v2538, 7
    %v2602 = vsel %vm407, %v2601, %v2537
    %v2603 = vrot.slane %v2539, 6
    %v2604 = vsel %vm410, %v2603, %v2602
    %v2605 = vrot.slane %v2540, 5
    %v2606 = vsel %vm413, %v2605, %v2604
    %v2607 = vrot.slane %v2541, 4
    %v2608 = vsel %vm416, %v2607, %v2606
    %v2609 = vrot.slane %v2542, 3
    %v2610 = vsel %vm419, %v2609, %v2608
    %v2611 = vrot.slane %v2543, 2
    %v2612 = vsel %vm422, %v2611, %v2610
    %v2613 = vrot.slane %v2544, 1
    %v2614 = vsel %vm425, %v2613, %v2612
    %2615 = vrot.lane.b32.xlu0 %v2614, 96
    %v2616 = vpop.permute.xlu0 %2615
    %2618 = vst.msk [vmem:[#allocation3] sm:$0xff] %vm75, %v2616
    %v2627 = vrot.slane %v2586, 7
    %v2628 = vsel %vm407, %v2627, %v2585
    %v2629 = vrot.slane %v2587, 6
    %v2630 = vsel %vm410, %v2629, %v2628
    %v2631 = vrot.slane %v2588, 5
    %v2632 = vsel %vm413, %v2631, %v2630
    %v2633 = vrot.slane %v2589, 4
    %v2634 = vsel %vm416, %v2633, %v2632
    %v2635 = vrot.slane %v2590, 3
    %v2636 = vsel %vm419, %v2635, %v2634
    %v2637 = vrot.slane %v2591, 2
    %v2638 = vsel %vm422, %v2637, %v2636
    %v2639 = vrot.slane %v2592, 1
    %v2640 = vsel %vm425, %v2639, %v2638
    %2641 = vrot.lane.b32.xlu0 %v2640, 32
    %v2642 = vpop.permute.xlu0 %2641
    %2644 = vst.msk [vmem:[#allocation2] sm:$0xff] %vm75, %v2642
    %v2645 = vmul.f32 %v2585, %v466
    %v2646 = vmul.f32 %v2586, %v468
    %v2647 = vmul.f32 %v2587, %v470
    %v2648 = vmul.f32 %v2588, %v472
    %v2649 = vmul.f32 %v2589, %v474
    %v2650 = vmul.f32 %v2590, %v476
    %v2651 = vmul.f32 %v2591, %v478
    %v2652 = vmul.f32 %v2592, %v480
    %2661 = vrot.lane.b32.xlu0 %v2645, 32
    %v2662 = vpop.permute.xlu0 %2661
    %2663 = vrot.lane.b32.xlu0 %v2646, 32
    %v2664 = vpop.permute.xlu0 %2663
    %2665 = vrot.lane.b32.xlu0 %v2647, 32
    %v2666 = vpop.permute.xlu0 %2665
    %2667 = vrot.lane.b32.xlu0 %v2648, 32
    %v2668 = vpop.permute.xlu0 %2667
    %2669 = vrot.lane.b32.xlu0 %v2649, 32
    %v2670 = vpop.permute.xlu0 %2669
    %2671 = vrot.lane.b32.xlu0 %v2650, 32
    %v2672 = vpop.permute.xlu0 %2671
    %2673 = vrot.lane.b32.xlu0 %v2651, 32
    %v2674 = vpop.permute.xlu0 %2673
    %2675 = vrot.lane.b32.xlu0 %v2652, 32
    %v2676 = vpop.permute.xlu0 %2675
    %2685 = vst.msk [vmem:[#allocation10 + $0x5] sm:$0x1] %vm529, %v2662
    %2686 = vst.msk [vmem:[#allocation10 + $0xd] sm:$0x1] %vm529, %v2664
    %2687 = vst.msk [vmem:[#allocation10 + $0x15] sm:$0x1] %vm529, %v2666
    %2688 = vst.msk [vmem:[#allocation10 + $0x1d] sm:$0x1] %vm529, %v2668
    %2689 = vst.msk [vmem:[#allocation10 + $0x25] sm:$0x1] %vm529, %v2670
    %2690 = vst.msk [vmem:[#allocation10 + $0x2d] sm:$0x1] %vm529, %v2672
    %2691 = vst.msk [vmem:[#allocation10 + $0x35] sm:$0x1] %vm529, %v2674
    %2692 = vst.msk [vmem:[#allocation10 + $0x3d] sm:$0x1] %vm529, %v2676
    %v2693 = vld [vmem:[#allocation4 + $0x6] sm:$0x1]
    %v2694 = vld [vmem:[#allocation4 + $0xe] sm:$0x1]
    %v2695 = vld [vmem:[#allocation4 + $0x16] sm:$0x1]
    %v2696 = vld [vmem:[#allocation4 + $0x1e] sm:$0x1]
    %v2697 = vld [vmem:[#allocation4 + $0x26] sm:$0x1]
    %v2698 = vld [vmem:[#allocation4 + $0x2e] sm:$0x1]
    %v2699 = vld [vmem:[#allocation4 + $0x36] sm:$0x1]
    %v2700 = vld [vmem:[#allocation4 + $0x3e] sm:$0x1]
    %v2701 = vld [vmem:[#allocation2] sm:$0xff]
    %v2703 = vsel %vm75, %v2701, 0
    %2705 = vmatprep.subr.mxu0 0.0
    %2706 = vmatpush1.msra.mxu0 %v61
    %2707 = vmatprep.subr.mxu0 0.0
    %2708 = vmatpush1.msra.mxu0 %v62
    %2709 = vmatprep.subr.mxu0 0.0
    %2710 = vmatpush1.msra.mxu0 %v63
    %2711 = vmatprep.subr.mxu0 0.0
    %2712 = vmatpush1.msra.mxu0 %v64
    %2713 = vmatprep.subr.mxu0 0.0
    %2714 = vmatpush1.msra.mxu0 0.0
    %2715 = vmatprep.subr.mxu0 0.0
    %2716 = vmatpush1.msra.mxu0 0.0
    %2717 = vmatprep.subr.mxu0 0.0
    %2718 = vmatpush1.msra.mxu0 0.0
    %2719 = vmatprep.subr.mxu0 0.0
    %2720 = vmatpush1.msra.mxu0 0.0
    %2721 = vmatprep.subr.mxu0 0.0
    %2722 = vmatpush1.msra.mxu0 0.0
    %2723 = vmatprep.subr.mxu0 0.0
    %2724 = vmatpush1.msra.mxu0 0.0
    %2725 = vmatprep.subr.mxu0 0.0
    %2726 = vmatpush1.msra.mxu0 0.0
    %2727 = vmatprep.subr.mxu0 0.0
    %2728 = vmatpush1.msra.mxu0 0.0
    %2729 = vmatprep.subr.mxu0 0.0
    %2730 = vmatpush1.msra.mxu0 0.0
    %2731 = vmatprep.subr.mxu0 0.0
    %2732 = vmatpush1.msra.mxu0 0.0
    %2733 = vmatprep.subr.mxu0 0.0
    %2734 = vmatpush1.msra.mxu0 0.0
    %2735 = vmatprep.subr.mxu0 0.0
    %2736 = vmatpush1.msra.mxu0 0.0
    %2737 = vmatprep.subr.mxu0 0.0
    %2738 = vmatpush1.msra.mxu0 0.0
    %2739 = vmatprep.subr.mxu0 0.0
    %2740 = vmatpush1.msra.mxu0 0.0
    %2741 = vmatprep.subr.mxu0 0.0
    %2742 = vmatpush1.msra.mxu0 0.0
    %2743 = vmatprep.subr.mxu0 0.0
    %2744 = vmatpush1.msra.mxu0 0.0
    %2745 = vmatprep.subr.mxu0 0.0
    %2746 = vmatpush1.msra.mxu0 0.0
    %2747 = vmatprep.subr.mxu0 0.0
    %2748 = vmatpush1.msra.mxu0 0.0
    %2749 = vmatprep.subr.mxu0 0.0
    %2750 = vmatpush1.msra.mxu0 0.0
    %2751 = vmatprep.subr.mxu0 0.0
    %2752 = vmatpush1.msra.mxu0 0.0
    %2753 = vmatprep.subr.mxu0 0.0
    %2754 = vmatpush1.msra.mxu0 0.0
    %2755 = vmatprep.subr.mxu0 0.0
    %2756 = vmatpush1.msra.mxu0 0.0
    %2757 = vmatprep.subr.mxu0 0.0
    %2758 = vmatpush1.msra.mxu0 0.0
    %2759 = vmatprep.subr.mxu0 0.0
    %2760 = vmatpush1.msra.mxu0 0.0
    %2761 = vmatprep.subr.mxu0 0.0
    %2762 = vmatpush1.msra.mxu0 0.0
    %2763 = vmatprep.subr.mxu0 0.0
    %2764 = vmatpush1.msra.mxu0 0.0
    %2765 = vmatprep.subr.mxu0 0.0
    %2766 = vmatpush1.msra.mxu0 0.0
    %2767 = vmatprep.subr.mxu0 0.0
    %2768 = vmatpush1.msra.mxu0 0.0
    %2769 = vmatprep.mubr.f32.mxu0 0.0
    %2770 = vmatmul.mubr.f32.gmra.mrb[0].mxu0 %v2703
    %v2771 = vpop.f32.mrb[0].mxu0
    %v2772 = vadd.f32 0.0, %v2771
    %v2773 = vpop.f32.mrb[0].mxu0
    %2774 = vdwg.mxu0
    %v2776 = vrot.slane %v2772, 1
    %v2777 = vrot.slane %v2772, 2
    %v2778 = vrot.slane %v2772, 3
    %v2779 = vrot.slane %v2772, 4
    %v2780 = vrot.slane %v2772, 5
    %v2781 = vrot.slane %v2772, 6
    %v2782 = vrot.slane %v2772, 7
    %v2791 = vadd.f32 %v2693, %v2772
    %v2792 = vadd.f32 %v2694, %v2776
    %v2793 = vadd.f32 %v2695, %v2777
    %v2794 = vadd.f32 %v2696, %v2778
    %v2795 = vadd.f32 %v2697, %v2779
    %v2796 = vadd.f32 %v2698, %v2780
    %v2797 = vadd.f32 %v2699, %v2781
    %v2798 = vadd.f32 %v2700, %v2782
    %v2799 = vxor.u32 %v2791, 2147483648
    %v2800 = vxor.u32 %v2792, 2147483648
    %v2801 = vxor.u32 %v2793, 2147483648
    %v2802 = vxor.u32 %v2794, 2147483648
    %v2803 = vxor.u32 %v2795, 2147483648
    %v2804 = vxor.u32 %v2796, 2147483648
    %v2805 = vxor.u32 %v2797, 2147483648
    %v2806 = vxor.u32 %v2798, 2147483648
    %v2807 = vmul.f32 %v2799, 1.442695
    %v2808 = vpow.pop %v2807
    %v2809 = vmul.f32 %v2800, 1.442695
    %v2810 = vpow.pop %v2809
    %v2811 = vmul.f32 %v2801, 1.442695
    %v2812 = vpow.pop %v2811
    %v2813 = vmul.f32 %v2802, 1.442695
    %v2814 = vpow.pop %v2813
    %v2815 = vmul.f32 %v2803, 1.442695
    %v2816 = vpow.pop %v2815
    %v2817 = vmul.f32 %v2804, 1.442695
    %v2818 = vpow.pop %v2817
    %v2819 = vmul.f32 %v2805, 1.442695
    %v2820 = vpow.pop %v2819
    %v2821 = vmul.f32 %v2806, 1.442695
    %v2822 = vpow.pop %v2821
    %v2823 = vadd.f32 %v2808, 1.0
    %v2824 = vadd.f32 %v2810, 1.0
    %v2825 = vadd.f32 %v2812, 1.0
    %v2826 = vadd.f32 %v2814, 1.0
    %v2827 = vadd.f32 %v2816, 1.0
    %v2828 = vadd.f32 %v2818, 1.0
    %v2829 = vadd.f32 %v2820, 1.0
    %v2830 = vadd.f32 %v2822, 1.0
    %v2831 = vrcp.pop %v2823
    %v2832 = vmul.f32 1.0, %v2831
    %v2833 = vrcp.pop %v2824
    %v2834 = vmul.f32 1.0, %v2833
    %v2835 = vrcp.pop %v2825
    %v2836 = vmul.f32 1.0, %v2835
    %v2837 = vrcp.pop %v2826
    %v2838 = vmul.f32 1.0, %v2837
    %v2839 = vrcp.pop %v2827
    %v2840 = vmul.f32 1.0, %v2839
    %v2841 = vrcp.pop %v2828
    %v2842 = vmul.f32 1.0, %v2841
    %v2843 = vrcp.pop %v2829
    %v2844 = vmul.f32 1.0, %v2843
    %v2845 = vrcp.pop %v2830
    %v2846 = vmul.f32 1.0, %v2845
    %v2847 = vtanh.pop %v2791
    %v2848 = vtanh.pop %v2792
    %v2849 = vtanh.pop %v2793
    %v2850 = vtanh.pop %v2794
    %v2851 = vtanh.pop %v2795
    %v2852 = vtanh.pop %v2796
    %v2853 = vtanh.pop %v2797
    %v2854 = vtanh.pop %v2798
    %v2855 = vld [vmem:[#allocation3] sm:$0xff]
    %v2857 = vrot.slane %v2855, 1
    %v2858 = vrot.slane %v2855, 2
    %v2859 = vrot.slane %v2855, 3
    %v2860 = vrot.slane %v2855, 4
    %v2861 = vrot.slane %v2855, 5
    %v2862 = vrot.slane %v2855, 6
    %v2863 = vrot.slane %v2855, 7
    %2864 = vrot.lane.b32.xlu0 %v2855, 32
    %v2865 = vpop.permute.xlu0 %2864
    %2866 = vrot.lane.b32.xlu0 %v2857, 32
    %v2867 = vpop.permute.xlu0 %2866
    %2868 = vrot.lane.b32.xlu0 %v2858, 32
    %v2869 = vpop.permute.xlu0 %2868
    %2870 = vrot.lane.b32.xlu0 %v2859, 32
    %v2871 = vpop.permute.xlu0 %2870
    %2872 = vrot.lane.b32.xlu0 %v2860, 32
    %v2873 = vpop.permute.xlu0 %2872
    %2874 = vrot.lane.b32.xlu0 %v2861, 32
    %v2875 = vpop.permute.xlu0 %2874
    %2876 = vrot.lane.b32.xlu0 %v2862, 32
    %v2877 = vpop.permute.xlu0 %2876
    %2878 = vrot.lane.b32.xlu0 %v2863, 32
    %v2879 = vpop.permute.xlu0 %2878
    %v2888 = vmul.f32 %v2832, %v2865
    %v2889 = vmul.f32 %v2834, %v2867
    %v2890 = vmul.f32 %v2836, %v2869
    %v2891 = vmul.f32 %v2838, %v2871
    %v2892 = vmul.f32 %v2840, %v2873
    %v2893 = vmul.f32 %v2842, %v2875
    %v2894 = vmul.f32 %v2844, %v2877
    %v2895 = vmul.f32 %v2846, %v2879
    %2904 = vrot.lane.b32.xlu0 %v2847, 64
    %v2905 = vpop.permute.xlu0 %2904
    %2906 = vrot.lane.b32.xlu0 %v2848, 64
    %v2907 = vpop.permute.xlu0 %2906
    %2908 = vrot.lane.b32.xlu0 %v2849, 64
    %v2909 = vpop.permute.xlu0 %2908
    %2910 = vrot.lane.b32.xlu0 %v2850, 64
    %v2911 = vpop.permute.xlu0 %2910
    %2912 = vrot.lane.b32.xlu0 %v2851, 64
    %v2913 = vpop.permute.xlu0 %2912
    %2914 = vrot.lane.b32.xlu0 %v2852, 64
    %v2915 = vpop.permute.xlu0 %2914
    %2916 = vrot.lane.b32.xlu0 %v2853, 64
    %v2917 = vpop.permute.xlu0 %2916
    %2918 = vrot.lane.b32.xlu0 %v2854, 64
    %v2919 = vpop.permute.xlu0 %2918
    %v2928 = vmul.f32 %v2832, %v2905
    %v2929 = vmul.f32 %v2834, %v2907
    %v2930 = vmul.f32 %v2836, %v2909
    %v2931 = vmul.f32 %v2838, %v2911
    %v2932 = vmul.f32 %v2840, %v2913
    %v2933 = vmul.f32 %v2842, %v2915
    %v2934 = vmul.f32 %v2844, %v2917
    %v2935 = vmul.f32 %v2846, %v2919
    %2944 = vrot.lane.b32.xlu0 %v2928, 32
    %v2945 = vpop.permute.xlu0 %2944
    %2946 = vrot.lane.b32.xlu0 %v2929, 32
    %v2947 = vpop.permute.xlu0 %2946
    %2948 = vrot.lane.b32.xlu0 %v2930, 32
    %v2949 = vpop.permute.xlu0 %2948
    %2950 = vrot.lane.b32.xlu0 %v2931, 32
    %v2951 = vpop.permute.xlu0 %2950
    %2952 = vrot.lane.b32.xlu0 %v2932, 32
    %v2953 = vpop.permute.xlu0 %2952
    %2954 = vrot.lane.b32.xlu0 %v2933, 32
    %v2955 = vpop.permute.xlu0 %2954
    %2956 = vrot.lane.b32.xlu0 %v2934, 32
    %v2957 = vpop.permute.xlu0 %2956
    %2958 = vrot.lane.b32.xlu0 %v2935, 32
    %v2959 = vpop.permute.xlu0 %2958
    %v2968 = vadd.f32 %v2888, %v2945
    %v2969 = vadd.f32 %v2889, %v2947
    %v2970 = vadd.f32 %v2890, %v2949
    %v2971 = vadd.f32 %v2891, %v2951
    %v2972 = vadd.f32 %v2892, %v2953
    %v2973 = vadd.f32 %v2893, %v2955
    %v2974 = vadd.f32 %v2894, %v2957
    %v2975 = vadd.f32 %v2895, %v2959
    %v2976 = vtanh.pop %v2968
    %v2977 = vtanh.pop %v2969
    %v2978 = vtanh.pop %v2970
    %v2979 = vtanh.pop %v2971
    %v2980 = vtanh.pop %v2972
    %v2981 = vtanh.pop %v2973
    %v2982 = vtanh.pop %v2974
    %v2983 = vtanh.pop %v2975
    %2992 = vrot.lane.b32.xlu0 %v2976, 64
    %v2993 = vpop.permute.xlu0 %2992
    %2994 = vrot.lane.b32.xlu0 %v2977, 64
    %v2995 = vpop.permute.xlu0 %2994
    %2996 = vrot.lane.b32.xlu0 %v2978, 64
    %v2997 = vpop.permute.xlu0 %2996
    %2998 = vrot.lane.b32.xlu0 %v2979, 64
    %v2999 = vpop.permute.xlu0 %2998
    %3000 = vrot.lane.b32.xlu0 %v2980, 64
    %v3001 = vpop.permute.xlu0 %3000
    %3002 = vrot.lane.b32.xlu0 %v2981, 64
    %v3003 = vpop.permute.xlu0 %3002
    %3004 = vrot.lane.b32.xlu0 %v2982, 64
    %v3005 = vpop.permute.xlu0 %3004
    %3006 = vrot.lane.b32.xlu0 %v2983, 64
    %v3007 = vpop.permute.xlu0 %3006
    %v3016 = vmul.f32 %v2832, %v2993
    %v3017 = vmul.f32 %v2834, %v2995
    %v3018 = vmul.f32 %v2836, %v2997
    %v3019 = vmul.f32 %v2838, %v2999
    %v3020 = vmul.f32 %v2840, %v3001
    %v3021 = vmul.f32 %v2842, %v3003
    %v3022 = vmul.f32 %v2844, %v3005
    %v3023 = vmul.f32 %v2846, %v3007
    %v3032 = vrot.slane %v2969, 7
    %v3033 = vsel %vm407, %v3032, %v2968
    %v3034 = vrot.slane %v2970, 6
    %v3035 = vsel %vm410, %v3034, %v3033
    %v3036 = vrot.slane %v2971, 5
    %v3037 = vsel %vm413, %v3036, %v3035
    %v3038 = vrot.slane %v2972, 4
    %v3039 = vsel %vm416, %v3038, %v3037
    %v3040 = vrot.slane %v2973, 3
    %v3041 = vsel %vm419, %v3040, %v3039
    %v3042 = vrot.slane %v2974, 2
    %v3043 = vsel %vm422, %v3042, %v3041
    %v3044 = vrot.slane %v2975, 1
    %v3045 = vsel %vm425, %v3044, %v3043
    %3046 = vrot.lane.b32.xlu0 %v3045, 96
    %v3047 = vpop.permute.xlu0 %3046
    %3049 = vst.msk [vmem:[#allocation3] sm:$0xff] %vm75, %v3047
    %v3058 = vrot.slane %v3017, 7
    %v3059 = vsel %vm407, %v3058, %v3016
    %v3060 = vrot.slane %v3018, 6
    %v3061 = vsel %vm410, %v3060, %v3059
    %v3062 = vrot.slane %v3019, 5
    %v3063 = vsel %vm413, %v3062, %v3061
    %v3064 = vrot.slane %v3020, 4
    %v3065 = vsel %vm416, %v3064, %v3063
    %v3066 = vrot.slane %v3021, 3
    %v3067 = vsel %vm419, %v3066, %v3065
    %v3068 = vrot.slane %v3022, 2
    %v3069 = vsel %vm422, %v3068, %v3067
    %v3070 = vrot.slane %v3023, 1
    %v3071 = vsel %vm425, %v3070, %v3069
    %3072 = vrot.lane.b32.xlu0 %v3071, 32
    %v3073 = vpop.permute.xlu0 %3072
    %3075 = vst.msk [vmem:[#allocation2] sm:$0xff] %vm75, %v3073
    %v3076 = vmul.f32 %v3016, %v466
    %v3077 = vmul.f32 %v3017, %v468
    %v3078 = vmul.f32 %v3018, %v470
    %v3079 = vmul.f32 %v3019, %v472
    %v3080 = vmul.f32 %v3020, %v474
    %v3081 = vmul.f32 %v3021, %v476
    %v3082 = vmul.f32 %v3022, %v478
    %v3083 = vmul.f32 %v3023, %v480
    %3092 = vrot.lane.b32.xlu0 %v3076, 32
    %v3093 = vpop.permute.xlu0 %3092
    %3094 = vrot.lane.b32.xlu0 %v3077, 32
    %v3095 = vpop.permute.xlu0 %3094
    %3096 = vrot.lane.b32.xlu0 %v3078, 32
    %v3097 = vpop.permute.xlu0 %3096
    %3098 = vrot.lane.b32.xlu0 %v3079, 32
    %v3099 = vpop.permute.xlu0 %3098
    %3100 = vrot.lane.b32.xlu0 %v3080, 32
    %v3101 = vpop.permute.xlu0 %3100
    %3102 = vrot.lane.b32.xlu0 %v3081, 32
    %v3103 = vpop.permute.xlu0 %3102
    %3104 = vrot.lane.b32.xlu0 %v3082, 32
    %v3105 = vpop.permute.xlu0 %3104
    %3106 = vrot.lane.b32.xlu0 %v3083, 32
    %v3107 = vpop.permute.xlu0 %3106
    %3116 = vst.msk [vmem:[#allocation10 + $0x6] sm:$0x1] %vm529, %v3093
    %3117 = vst.msk [vmem:[#allocation10 + $0xe] sm:$0x1] %vm529, %v3095
    %3118 = vst.msk [vmem:[#allocation10 + $0x16] sm:$0x1] %vm529, %v3097
    %3119 = vst.msk [vmem:[#allocation10 + $0x1e] sm:$0x1] %vm529, %v3099
    %3120 = vst.msk [vmem:[#allocation10 + $0x26] sm:$0x1] %vm529, %v3101
    %3121 = vst.msk [vmem:[#allocation10 + $0x2e] sm:$0x1] %vm529, %v3103
    %3122 = vst.msk [vmem:[#allocation10 + $0x36] sm:$0x1] %vm529, %v3105
    %3123 = vst.msk [vmem:[#allocation10 + $0x3e] sm:$0x1] %vm529, %v3107
    %v3124 = vld [vmem:[#allocation4 + $0x7] sm:$0x1]
    %v3125 = vld [vmem:[#allocation4 + $0xf] sm:$0x1]
    %v3126 = vld [vmem:[#allocation4 + $0x17] sm:$0x1]
    %v3127 = vld [vmem:[#allocation4 + $0x1f] sm:$0x1]
    %v3128 = vld [vmem:[#allocation4 + $0x27] sm:$0x1]
    %v3129 = vld [vmem:[#allocation4 + $0x2f] sm:$0x1]
    %v3130 = vld [vmem:[#allocation4 + $0x37] sm:$0x1]
    %v3131 = vld [vmem:[#allocation4 + $0x3f] sm:$0x1]
    %v3132 = vld [vmem:[#allocation2] sm:$0xff]
    %v3134 = vsel %vm75, %v3132, 0
    %3136 = vmatprep.subr.mxu0 0.0
    %3137 = vmatpush1.msra.mxu0 %v61
    %3138 = vmatprep.subr.mxu0 0.0
    %3139 = vmatpush1.msra.mxu0 %v62
    %3140 = vmatprep.subr.mxu0 0.0
    %3141 = vmatpush1.msra.mxu0 %v63
    %3142 = vmatprep.subr.mxu0 0.0
    %3143 = vmatpush1.msra.mxu0 %v64
    %3144 = vmatprep.subr.mxu0 0.0
    %3145 = vmatpush1.msra.mxu0 0.0
    %3146 = vmatprep.subr.mxu0 0.0
    %3147 = vmatpush1.msra.mxu0 0.0
    %3148 = vmatprep.subr.mxu0 0.0
    %3149 = vmatpush1.msra.mxu0 0.0
    %3150 = vmatprep.subr.mxu0 0.0
    %3151 = vmatpush1.msra.mxu0 0.0
    %3152 = vmatprep.subr.mxu0 0.0
    %3153 = vmatpush1.msra.mxu0 0.0
    %3154 = vmatprep.subr.mxu0 0.0
    %3155 = vmatpush1.msra.mxu0 0.0
    %3156 = vmatprep.subr.mxu0 0.0
    %3157 = vmatpush1.msra.mxu0 0.0
    %3158 = vmatprep.subr.mxu0 0.0
    %3159 = vmatpush1.msra.mxu0 0.0
    %3160 = vmatprep.subr.mxu0 0.0
    %3161 = vmatpush1.msra.mxu0 0.0
    %3162 = vmatprep.subr.mxu0 0.0
    %3163 = vmatpush1.msra.mxu0 0.0
    %3164 = vmatprep.subr.mxu0 0.0
    %3165 = vmatpush1.msra.mxu0 0.0
    %3166 = vmatprep.subr.mxu0 0.0
    %3167 = vmatpush1.msra.mxu0 0.0
    %3168 = vmatprep.subr.mxu0 0.0
    %3169 = vmatpush1.msra.mxu0 0.0
    %3170 = vmatprep.subr.mxu0 0.0
    %3171 = vmatpush1.msra.mxu0 0.0
    %3172 = vmatprep.subr.mxu0 0.0
    %3173 = vmatpush1.msra.mxu0 0.0
    %3174 = vmatprep.subr.mxu0 0.0
    %3175 = vmatpush1.msra.mxu0 0.0
    %3176 = vmatprep.subr.mxu0 0.0
    %3177 = vmatpush1.msra.mxu0 0.0
    %3178 = vmatprep.subr.mxu0 0.0
    %3179 = vmatpush1.msra.mxu0 0.0
    %3180 = vmatprep.subr.mxu0 0.0
    %3181 = vmatpush1.msra.mxu0 0.0
    %3182 = vmatprep.subr.mxu0 0.0
    %3183 = vmatpush1.msra.mxu0 0.0
    %3184 = vmatprep.subr.mxu0 0.0
    %3185 = vmatpush1.msra.mxu0 0.0
    %3186 = vmatprep.subr.mxu0 0.0
    %3187 = vmatpush1.msra.mxu0 0.0
    %3188 = vmatprep.subr.mxu0 0.0
    %3189 = vmatpush1.msra.mxu0 0.0
    %3190 = vmatprep.subr.mxu0 0.0
    %3191 = vmatpush1.msra.mxu0 0.0
    %3192 = vmatprep.subr.mxu0 0.0
    %3193 = vmatpush1.msra.mxu0 0.0
    %3194 = vmatprep.subr.mxu0 0.0
    %3195 = vmatpush1.msra.mxu0 0.0
    %3196 = vmatprep.subr.mxu0 0.0
    %3197 = vmatpush1.msra.mxu0 0.0
    %3198 = vmatprep.subr.mxu0 0.0
    %3199 = vmatpush1.msra.mxu0 0.0
    %3200 = vmatprep.mubr.f32.mxu0 0.0
    %3201 = vmatmul.mubr.f32.gmra.mrb[0].mxu0 %v3134
    %v3202 = vpop.f32.mrb[0].mxu0
    %v3203 = vadd.f32 0.0, %v3202
    %v3204 = vpop.f32.mrb[0].mxu0
    %3205 = vdwg.mxu0
    %v3207 = vrot.slane %v3203, 1
    %v3208 = vrot.slane %v3203, 2
    %v3209 = vrot.slane %v3203, 3
    %v3210 = vrot.slane %v3203, 4
    %v3211 = vrot.slane %v3203, 5
    %v3212 = vrot.slane %v3203, 6
    %v3213 = vrot.slane %v3203, 7
    %v3222 = vadd.f32 %v3124, %v3203
    %v3223 = vadd.f32 %v3125, %v3207
    %v3224 = vadd.f32 %v3126, %v3208
    %v3225 = vadd.f32 %v3127, %v3209
    %v3226 = vadd.f32 %v3128, %v3210
    %v3227 = vadd.f32 %v3129, %v3211
    %v3228 = vadd.f32 %v3130, %v3212
    %v3229 = vadd.f32 %v3131, %v3213
    %v3230 = vxor.u32 %v3222, 2147483648
    %v3231 = vxor.u32 %v3223, 2147483648
    %v3232 = vxor.u32 %v3224, 2147483648
    %v3233 = vxor.u32 %v3225, 2147483648
    %v3234 = vxor.u32 %v3226, 2147483648
    %v3235 = vxor.u32 %v3227, 2147483648
    %v3236 = vxor.u32 %v3228, 2147483648
    %v3237 = vxor.u32 %v3229, 2147483648
    %v3238 = vmul.f32 %v3230, 1.442695
    %v3239 = vpow.pop %v3238
    %v3240 = vmul.f32 %v3231, 1.442695
    %v3241 = vpow.pop %v3240
    %v3242 = vmul.f32 %v3232, 1.442695
    %v3243 = vpow.pop %v3242
    %v3244 = vmul.f32 %v3233, 1.442695
    %v3245 = vpow.pop %v3244
    %v3246 = vmul.f32 %v3234, 1.442695
    %v3247 = vpow.pop %v3246
    %v3248 = vmul.f32 %v3235, 1.442695
    %v3249 = vpow.pop %v3248
    %v3250 = vmul.f32 %v3236, 1.442695
    %v3251 = vpow.pop %v3250
    %v3252 = vmul.f32 %v3237, 1.442695
    %v3253 = vpow.pop %v3252
    %v3254 = vadd.f32 %v3239, 1.0
    %v3255 = vadd.f32 %v3241, 1.0
    %v3256 = vadd.f32 %v3243, 1.0
    %v3257 = vadd.f32 %v3245, 1.0
    %v3258 = vadd.f32 %v3247, 1.0
    %v3259 = vadd.f32 %v3249, 1.0
    %v3260 = vadd.f32 %v3251, 1.0
    %v3261 = vadd.f32 %v3253, 1.0
    %v3262 = vrcp.pop %v3254
    %v3263 = vmul.f32 1.0, %v3262
    %v3264 = vrcp.pop %v3255
    %v3265 = vmul.f32 1.0, %v3264
    %v3266 = vrcp.pop %v3256
    %v3267 = vmul.f32 1.0, %v3266
    %v3268 = vrcp.pop %v3257
    %v3269 = vmul.f32 1.0, %v3268
    %v3270 = vrcp.pop %v3258
    %v3271 = vmul.f32 1.0, %v3270
    %v3272 = vrcp.pop %v3259
    %v3273 = vmul.f32 1.0, %v3272
    %v3274 = vrcp.pop %v3260
    %v3275 = vmul.f32 1.0, %v3274
    %v3276 = vrcp.pop %v3261
    %v3277 = vmul.f32 1.0, %v3276
    %v3278 = vtanh.pop %v3222
    %v3279 = vtanh.pop %v3223
    %v3280 = vtanh.pop %v3224
    %v3281 = vtanh.pop %v3225
    %v3282 = vtanh.pop %v3226
    %v3283 = vtanh.pop %v3227
    %v3284 = vtanh.pop %v3228
    %v3285 = vtanh.pop %v3229
    %v3286 = vld [vmem:[#allocation3] sm:$0xff]
    %v3288 = vrot.slane %v3286, 1
    %v3289 = vrot.slane %v3286, 2
    %v3290 = vrot.slane %v3286, 3
    %v3291 = vrot.slane %v3286, 4
    %v3292 = vrot.slane %v3286, 5
    %v3293 = vrot.slane %v3286, 6
    %v3294 = vrot.slane %v3286, 7
    %3295 = vrot.lane.b32.xlu0 %v3286, 32
    %v3296 = vpop.permute.xlu0 %3295
    %3297 = vrot.lane.b32.xlu0 %v3288, 32
    %v3298 = vpop.permute.xlu0 %3297
    %3299 = vrot.lane.b32.xlu0 %v3289, 32
    %v3300 = vpop.permute.xlu0 %3299
    %3301 = vrot.lane.b32.xlu0 %v3290, 32
    %v3302 = vpop.permute.xlu0 %3301
    %3303 = vrot.lane.b32.xlu0 %v3291, 32
    %v3304 = vpop.permute.xlu0 %3303
    %3305 = vrot.lane.b32.xlu0 %v3292, 32
    %v3306 = vpop.permute.xlu0 %3305
    %3307 = vrot.lane.b32.xlu0 %v3293, 32
    %v3308 = vpop.permute.xlu0 %3307
    %3309 = vrot.lane.b32.xlu0 %v3294, 32
    %v3310 = vpop.permute.xlu0 %3309
    %v3319 = vmul.f32 %v3263, %v3296
    %v3320 = vmul.f32 %v3265, %v3298
    %v3321 = vmul.f32 %v3267, %v3300
    %v3322 = vmul.f32 %v3269, %v3302
    %v3323 = vmul.f32 %v3271, %v3304
    %v3324 = vmul.f32 %v3273, %v3306
    %v3325 = vmul.f32 %v3275, %v3308
    %v3326 = vmul.f32 %v3277, %v3310
    %3335 = vrot.lane.b32.xlu0 %v3278, 64
    %v3336 = vpop.permute.xlu0 %3335
    %3337 = vrot.lane.b32.xlu0 %v3279, 64
    %v3338 = vpop.permute.xlu0 %3337
    %3339 = vrot.lane.b32.xlu0 %v3280, 64
    %v3340 = vpop.permute.xlu0 %3339
    %3341 = vrot.lane.b32.xlu0 %v3281, 64
    %v3342 = vpop.permute.xlu0 %3341
    %3343 = vrot.lane.b32.xlu0 %v3282, 64
    %v3344 = vpop.permute.xlu0 %3343
    %3345 = vrot.lane.b32.xlu0 %v3283, 64
    %v3346 = vpop.permute.xlu0 %3345
    %3347 = vrot.lane.b32.xlu0 %v3284, 64
    %v3348 = vpop.permute.xlu0 %3347
    %3349 = vrot.lane.b32.xlu0 %v3285, 64
    %v3350 = vpop.permute.xlu0 %3349
    %v3359 = vmul.f32 %v3263, %v3336
    %v3360 = vmul.f32 %v3265, %v3338
    %v3361 = vmul.f32 %v3267, %v3340
    %v3362 = vmul.f32 %v3269, %v3342
    %v3363 = vmul.f32 %v3271, %v3344
    %v3364 = vmul.f32 %v3273, %v3346
    %v3365 = vmul.f32 %v3275, %v3348
    %v3366 = vmul.f32 %v3277, %v3350
    %3375 = vrot.lane.b32.xlu0 %v3359, 32
    %v3376 = vpop.permute.xlu0 %3375
    %3377 = vrot.lane.b32.xlu0 %v3360, 32
    %v3378 = vpop.permute.xlu0 %3377
    %3379 = vrot.lane.b32.xlu0 %v3361, 32
    %v3380 = vpop.permute.xlu0 %3379
    %3381 = vrot.lane.b32.xlu0 %v3362, 32
    %v3382 = vpop.permute.xlu0 %3381
    %3383 = vrot.lane.b32.xlu0 %v3363, 32
    %v3384 = vpop.permute.xlu0 %3383
    %3385 = vrot.lane.b32.xlu0 %v3364, 32
    %v3386 = vpop.permute.xlu0 %3385
    %3387 = vrot.lane.b32.xlu0 %v3365, 32
    %v3388 = vpop.permute.xlu0 %3387
    %3389 = vrot.lane.b32.xlu0 %v3366, 32
    %v3390 = vpop.permute.xlu0 %3389
    %v3399 = vadd.f32 %v3319, %v3376
    %v3400 = vadd.f32 %v3320, %v3378
    %v3401 = vadd.f32 %v3321, %v3380
    %v3402 = vadd.f32 %v3322, %v3382
    %v3403 = vadd.f32 %v3323, %v3384
    %v3404 = vadd.f32 %v3324, %v3386
    %v3405 = vadd.f32 %v3325, %v3388
    %v3406 = vadd.f32 %v3326, %v3390
    %v3407 = vtanh.pop %v3399
    %v3408 = vtanh.pop %v3400
    %v3409 = vtanh.pop %v3401
    %v3410 = vtanh.pop %v3402
    %v3411 = vtanh.pop %v3403
    %v3412 = vtanh.pop %v3404
    %v3413 = vtanh.pop %v3405
    %v3414 = vtanh.pop %v3406
    %3423 = vrot.lane.b32.xlu0 %v3407, 64
    %v3424 = vpop.permute.xlu0 %3423
    %3425 = vrot.lane.b32.xlu0 %v3408, 64
    %v3426 = vpop.permute.xlu0 %3425
    %3427 = vrot.lane.b32.xlu0 %v3409, 64
    %v3428 = vpop.permute.xlu0 %3427
    %3429 = vrot.lane.b32.xlu0 %v3410, 64
    %v3430 = vpop.permute.xlu0 %3429
    %3431 = vrot.lane.b32.xlu0 %v3411, 64
    %v3432 = vpop.permute.xlu0 %3431
    %3433 = vrot.lane.b32.xlu0 %v3412, 64
    %v3434 = vpop.permute.xlu0 %3433
    %3435 = vrot.lane.b32.xlu0 %v3413, 64
    %v3436 = vpop.permute.xlu0 %3435
    %3437 = vrot.lane.b32.xlu0 %v3414, 64
    %v3438 = vpop.permute.xlu0 %3437
    %v3447 = vmul.f32 %v3263, %v3424
    %v3448 = vmul.f32 %v3265, %v3426
    %v3449 = vmul.f32 %v3267, %v3428
    %v3450 = vmul.f32 %v3269, %v3430
    %v3451 = vmul.f32 %v3271, %v3432
    %v3452 = vmul.f32 %v3273, %v3434
    %v3453 = vmul.f32 %v3275, %v3436
    %v3454 = vmul.f32 %v3277, %v3438
    %v3463 = vrot.slane %v3400, 7
    %v3464 = vsel %vm407, %v3463, %v3399
    %v3465 = vrot.slane %v3401, 6
    %v3466 = vsel %vm410, %v3465, %v3464
    %v3467 = vrot.slane %v3402, 5
    %v3468 = vsel %vm413, %v3467, %v3466
    %v3469 = vrot.slane %v3403, 4
    %v3470 = vsel %vm416, %v3469, %v3468
    %v3471 = vrot.slane %v3404, 3
    %v3472 = vsel %vm419, %v3471, %v3470
    %v3473 = vrot.slane %v3405, 2
    %v3474 = vsel %vm422, %v3473, %v3472
    %v3475 = vrot.slane %v3406, 1
    %v3476 = vsel %vm425, %v3475, %v3474
    %3477 = vrot.lane.b32.xlu0 %v3476, 96
    %v3478 = vpop.permute.xlu0 %3477
    %3480 = vst.msk [vmem:[#allocation3] sm:$0xff] %vm75, %v3478
    %v3489 = vrot.slane %v3448, 7
    %v3490 = vsel %vm407, %v3489, %v3447
    %v3491 = vrot.slane %v3449, 6
    %v3492 = vsel %vm410, %v3491, %v3490
    %v3493 = vrot.slane %v3450, 5
    %v3494 = vsel %vm413, %v3493, %v3492
    %v3495 = vrot.slane %v3451, 4
    %v3496 = vsel %vm416, %v3495, %v3494
    %v3497 = vrot.slane %v3452, 3
    %v3498 = vsel %vm419, %v3497, %v3496
    %v3499 = vrot.slane %v3453, 2
    %v3500 = vsel %vm422, %v3499, %v3498
    %v3501 = vrot.slane %v3454, 1
    %v3502 = vsel %vm425, %v3501, %v3500
    %3503 = vrot.lane.b32.xlu0 %v3502, 32
    %v3504 = vpop.permute.xlu0 %3503
    %3506 = vst.msk [vmem:[#allocation2] sm:$0xff] %vm75, %v3504
    %v3507 = vmul.f32 %v3447, %v466
    %v3508 = vmul.f32 %v3448, %v468
    %v3509 = vmul.f32 %v3449, %v470
    %v3510 = vmul.f32 %v3450, %v472
    %v3511 = vmul.f32 %v3451, %v474
    %v3512 = vmul.f32 %v3452, %v476
    %v3513 = vmul.f32 %v3453, %v478
    %v3514 = vmul.f32 %v3454, %v480
    %3523 = vrot.lane.b32.xlu0 %v3507, 32
    %v3524 = vpop.permute.xlu0 %3523
    %3525 = vrot.lane.b32.xlu0 %v3508, 32
    %v3526 = vpop.permute.xlu0 %3525
    %3527 = vrot.lane.b32.xlu0 %v3509, 32
    %v3528 = vpop.permute.xlu0 %3527
    %3529 = vrot.lane.b32.xlu0 %v3510, 32
    %v3530 = vpop.permute.xlu0 %3529
    %3531 = vrot.lane.b32.xlu0 %v3511, 32
    %v3532 = vpop.permute.xlu0 %3531
    %3533 = vrot.lane.b32.xlu0 %v3512, 32
    %v3534 = vpop.permute.xlu0 %3533
    %3535 = vrot.lane.b32.xlu0 %v3513, 32
    %v3536 = vpop.permute.xlu0 %3535
    %3537 = vrot.lane.b32.xlu0 %v3514, 32
    %v3538 = vpop.permute.xlu0 %3537
    %3547 = vst.msk [vmem:[#allocation10 + $0x7] sm:$0x1] %vm529, %v3524
    %3548 = vst.msk [vmem:[#allocation10 + $0xf] sm:$0x1] %vm529, %v3526
    %3549 = vst.msk [vmem:[#allocation10 + $0x17] sm:$0x1] %vm529, %v3528
    %3550 = vst.msk [vmem:[#allocation10 + $0x1f] sm:$0x1] %vm529, %v3530
    %3551 = vst.msk [vmem:[#allocation10 + $0x27] sm:$0x1] %vm529, %v3532
    %3552 = vst.msk [vmem:[#allocation10 + $0x2f] sm:$0x1] %vm529, %v3534
    %3553 = vst.msk [vmem:[#allocation10 + $0x37] sm:$0x1] %vm529, %v3536
    %3554 = vst.msk [vmem:[#allocation10 + $0x3f] sm:$0x1] %vm529, %v3538
    // Predicated region
    $region30: #{tpu_custom_call.1} parent=1 // pred_check
      _
    $region31: #{tpu_custom_call.1} parent=1 // pred_check_branch
      %3556 = sbr.rel (0) target = $region33
    $region32: #{tpu_custom_call.1} parent=1 // pred_region
      %s3558 = ssub.s32 1024, 1024
      %3559 = vsyncadd [#allocation6], %s3558
      %s3560 = sshll.u32 [#allocation10], 4
      %s3561 = int_to_ptr.vmem [resolvable:$true] %s3560
      %3566 = dma.vmem_to_hbm [thread:$0]  %s3561, 1024, %s3, [#allocation6], 128, 128, 8
    $region33: #{tpu_custom_call.1} parent=1 // pred_fallthru
      _
    // Predicated region
    $region34: #{tpu_custom_call.1} parent=1 // pred_check
      _
    $region35: #{tpu_custom_call.1} parent=1 // pred_check_branch
      %3568 = sbr.rel (0) target = $region37
    $region36: #{tpu_custom_call.1} parent=1 // pred_region
      %3569 = dma.done [#allocation6], 1024
    $region37: #{tpu_custom_call.1} parent=1 // pred_fallthru
      _
    %3570 = vsyncpa [#allocation5], 1
    %3571 = vsyncpa [#allocation8], 1
    %3572 = vsyncpa [#allocation6], 1

</llo_original>
